<compile_context>
chip_gen: v7x
topology: tpu7x:2x2x1
jax: 0.10.0
libtpu: 0.0.40
codegen_flags: <defaults>
</compile_context>

<pallas_src>
import math
from functools import partial

import jax
import jax.numpy as jnp
from jax.experimental import pallas as pl
from jax.experimental.pallas import tpu as pltpu


# -----------------------------------------------------------------------------
# Kernel
# -----------------------------------------------------------------------------
def resnet_kernel(
    act_ref,    # (tile_b, 128) f32 : [x | t | cond | zero-pad] packed activations
    wsq_ref,    # (3 + 3*nblk, mlp, mlp) bf16 : [wc2, wr1, wr2, (w_res,w_l1,w_l2)*nblk]
    bias_ref,   # (6 + 3*nblk + 2, 2*mlp) f32 : [bt, bi, bc1, bc2, br1, br2,
                #                                (b_res,b_l1,b_l2)*nblk, bo, bf]
    win_ref,    # (128, 3*mlp) bf16 : fused [input_dense | context_l0(pad 16->mlp) | time_dense]
    wf_ref,     # (mlp, 2*mlp) bf16
    wo_ref,     # (2*mlp, mlp) bf16  (end_dim zero-padded to mlp -> lane-dense store)
    out_ref,    # (tile_b, mlp) f32  (sliced to end_dim outside)
    *, act_dtype,
):
    f32 = jnp.float32
    bf16 = jnp.bfloat16
    mlp = wsq_ref.shape[-1]
    nblk = (wsq_ref.shape[0] - 3) // 3

    # bias-slab row indices
    BT, BI, BC1, BC2, BR1, BR2 = 0, 1, 2, 3, 4, 5
    BBLK = 6
    BO = 6 + 3 * nblk
    BF = BO + 1
    # square-weight-slab indices
    WC2, WR1, WR2 = 0, 1, 2
    WBLK = 3

    def lrelu(v):                       # nn.LeakyReLU(0.01)
        return jnp.where(v > 0, v, 0.01 * v)

    def cast(v):                        # activation-carry dtype (bf16 on v6e/v7x)
        return v.astype(act_dtype)

    def dot(a, w):                      # bf16 x bf16 on the MXU, f32 accumulation
        return jnp.dot(a.astype(bf16), w, preferred_element_type=f32)

    def brow(i):                        # (1, mlp) bias row
        return bias_ref[i:i + 1, :mlp]

    act = act_ref[...]                  # (tb, 128) f32

    # --- fused first layer: [x | t | cond | 0] @ [wi | wc1_pad | wt] ---------
    # cols [0,mlp): input_dense pre-act; [mlp,2mlp): context layer-0 pre-act
    # (hidden 16 zero-padded); [2mlp,3mlp): time_dense pre-act (wt in the t row).
    fused = dot(act, win_ref[...])                                   # (tb, 3*mlp) f32
    inputs_dense = lrelu(fused[:, :mlp] + brow(BI))
    h = jnp.maximum(fused[:, mlp:2 * mlp] + brow(BC1), 0.0)          # ReLU
    time_embed = lrelu(fused[:, 2 * mlp:] + brow(BT))

    # --- context encoder layer 1 (hidden 16 zero-padded to mlp; exact) -------
    conds_embed = lrelu(dot(cast(h), wsq_ref[WC2]) + brow(BC2))
    embed = time_embed + conds_embed

    # --- initial residual denses ---------------------------------------------
    residual = lrelu(dot(cast(inputs_dense + embed), wsq_ref[WR1]) + brow(BR1))
    residual = cast(dot(cast(residual), wsq_ref[WR2]) + brow(BR2))

    # --- ResNetDenseBlocks (nlayers=1 each), statically unrolled --------------
    layer = residual
    for k in range(nblk):
        lb = cast(layer)
        res_b = dot(lb, wsq_ref[WBLK + 3 * k]) + brow(BBLK + 3 * k)
        mid = cast(lrelu(dot(lb, wsq_ref[WBLK + 3 * k + 1]) + brow(BBLK + 3 * k + 1)))
        outv = dot(mid, wsq_ref[WBLK + 3 * k + 2]) + brow(BBLK + 3 * k + 2)
        # TODO(synk): nn.Dropout(0.1) is identity at inference time; not applied.
        layer = cast(outv + res_b)

    # --- head (output columns beyond end_dim are zero-padded, sliced outside) --
    head = cast(lrelu(dot(cast(residual + layer), wf_ref[...]) + bias_ref[BF:BF + 1, :]))
    out_ref[...] = (dot(head, wo_ref[...]) + brow(BO)).astype(out_ref.dtype)


# -----------------------------------------------------------------------------
# Parameters (PyTorch-style init), bf16 matmul weights, f32 biases
# -----------------------------------------------------------------------------
def _linear_init(key, fan_in, fan_out, w_dtype=jnp.float32):
    kw, kb = jax.random.split(key)
    bound = 1.0 / math.sqrt(fan_in)
    w = jax.random.uniform(kw, (fan_in, fan_out), jnp.float32, -bound, bound)
    b = jax.random.uniform(kb, (1, fan_out), jnp.float32, -bound, bound)
    return w.astype(w_dtype), b


def make_params(key, input_dim, end_dim, cond_dim, mlp_dim, num_layer):
    bf16 = jnp.bfloat16
    nblk = num_layer - 1
    keys = iter(jax.random.split(key, 16 + 3 * nblk))
    p = {}
    p["wt"], p["bt"] = _linear_init(next(keys), 1, mlp_dim)              # stored f32
    p["wc1"], p["bc1"] = _linear_init(next(keys), cond_dim, 16, bf16)
    p["wc2"], p["bc2"] = _linear_init(next(keys), 16, mlp_dim, bf16)
    p["wi"], p["bi"] = _linear_init(next(keys), input_dim, mlp_dim, bf16)
    p["wr1"], p["br1"] = _linear_init(next(keys), mlp_dim, mlp_dim, bf16)
    p["wr2"], p["br2"] = _linear_init(next(keys), mlp_dim, mlp_dim, bf16)
    blocks = []
    for _ in range(nblk):
        w_res, b_res = _linear_init(next(keys), mlp_dim, mlp_dim, bf16)
        w_l1, b_l1 = _linear_init(next(keys), mlp_dim, mlp_dim, bf16)
        w_l2, b_l2 = _linear_init(next(keys), mlp_dim, mlp_dim, bf16)
        blocks.append(dict(w_res=w_res, b_res=b_res, w_l1=w_l1, b_l1=b_l1,
                           w_l2=w_l2, b_l2=b_l2))
    p["blocks"] = blocks
    p["wf"], p["bf"] = _linear_init(next(keys), mlp_dim, 2 * mlp_dim, bf16)
    p["wo"], p["bo"] = _linear_init(next(keys), 2 * mlp_dim, end_dim, bf16)
    return p


def pack_params(p, *, input_dim, cond_dim, mlp_dim, end_dim):
    """Pack logical params into a few stacked, lane-dense kernel operands."""
    f32, bf16 = jnp.float32, jnp.bfloat16
    nblk = len(p["blocks"])
    h16 = p["wc2"].shape[0]                  # context-encoder hidden width (16)
    in_w = 128                               # packed activation slab width
    assert mlp_dim % 128 == 0 and end_dim <= mlp_dim and h16 <= mlp_dim
    assert input_dim + 1 + cond_dim <= in_w

    # Fused first-layer weight for the packed [x | t | cond | 0] slab.
    #   cols [0, mlp)      : input_dense   (rows 0..input_dim)
    #   cols [mlp, 2mlp)   : context layer0, hidden 16 zero-padded (cond rows)
    #   cols [2mlp, 3mlp)  : time_dense    (the single t row holds wt)
    w_in = jnp.zeros((in_w, 3 * mlp_dim), f32)
    w_in = w_in.at[:input_dim, :mlp_dim].set(p["wi"].astype(f32))
    w_in = w_in.at[input_dim + 1:input_dim + 1 + cond_dim,
                   mlp_dim:mlp_dim + h16].set(p["wc1"].astype(f32))
    w_in = w_in.at[input_dim:input_dim + 1, 2 * mlp_dim:].set(p["wt"].astype(f32))

    # context-encoder layer 1: zero-pad hidden rows 16 -> mlp (exact)
    wc2p = jnp.zeros((mlp_dim, mlp_dim), f32).at[:h16, :].set(p["wc2"].astype(f32))
    # output head: zero-pad end_dim -> mlp for a lane-dense store
    wop = jnp.zeros((2 * mlp_dim, mlp_dim), f32).at[:, :end_dim].set(p["wo"].astype(f32))

    sq = [wc2p, p["wr1"].astype(f32), p["wr2"].astype(f32)]
    for blk in p["blocks"]:
        sq += [blk["w_res"].astype(f32), blk["w_l1"].astype(f32), blk["w_l2"].astype(f32)]

    # 2-D bias slab (rows, 2*mlp) f32: one clean DMA, unmasked row reads.
    def nrow(v, width):
        r = jnp.zeros((1, 2 * mlp_dim), f32)
        return r.at[:, :width].set(v.reshape(1, -1).astype(f32))

    rows = [nrow(p["bt"], mlp_dim), nrow(p["bi"], mlp_dim),
            nrow(p["bc1"], h16), nrow(p["bc2"], mlp_dim),
            nrow(p["br1"], mlp_dim), nrow(p["br2"], mlp_dim)]
    for blk in p["blocks"]:
        rows += [nrow(blk["b_res"], mlp_dim), nrow(blk["b_l1"], mlp_dim),
                 nrow(blk["b_l2"], mlp_dim)]
    rows += [nrow(p["bo"], end_dim), nrow(p["bf"], 2 * mlp_dim)]

    return dict(
        wsq=jnp.stack([w for w in sq]).astype(bf16),   # (3+3*nblk, mlp, mlp) bf16
        bias=jnp.concatenate(rows, axis=0),            # (8+3*nblk, 2*mlp)    f32
        w_in=w_in.astype(bf16),                        # (128, 3*mlp)         bf16
        wf=p["wf"].astype(bf16),                       # (mlp, 2*mlp)         bf16
        wo=wop.astype(bf16),                           # (2*mlp, mlp)         bf16
    )


# -----------------------------------------------------------------------------
# Wrapper
# -----------------------------------------------------------------------------
@partial(jax.jit, static_argnames=("end_dim", "input_dim", "cond_dim", "tile_b", "act_dtype"))
def resnet_forward(x, t, cond, kp, *, end_dim, input_dim, cond_dim,
                   tile_b=256, act_dtype="bfloat16"):
    B = x.shape[0]
    mlp = kp["wsq"].shape[-1]
    in_w = kp["w_in"].shape[0]
    assert B % tile_b == 0, (B, tile_b)

    # Pack [x | t | cond | zero-pad] into one lane-dense slab (layout plumbing only).
    xf = x.astype(jnp.float32)
    t2 = t.reshape(-1, 1).astype(jnp.float32)                    # t.view(-1, 1).float()
    cond2 = cond.reshape(cond.shape[0], -1).astype(jnp.float32)
    pad_w = in_w - (input_dim + 1 + cond2.shape[1])
    act_in = jnp.concatenate(
        [xf, t2, cond2, jnp.zeros((B, pad_w), jnp.float32)], axis=1)

    adt = jnp.bfloat16 if act_dtype == "bfloat16" else jnp.float32
    kern = partial(resnet_kernel, act_dtype=adt)

    def wspec(arr):
        nd = arr.ndim
        return pl.BlockSpec(arr.shape, lambda i, nd=nd: (0,) * nd)

    weights = (kp["wsq"], kp["bias"], kp["w_in"], kp["wf"], kp["wo"])
    in_specs = [pl.BlockSpec((tile_b, in_w), lambda i: (i, 0))] + [wspec(a) for a in weights]

    out_pad = pl.pallas_call(
        kern,
        out_shape=jax.ShapeDtypeStruct((B, mlp), jnp.float32),
        grid=(B // tile_b,),
        in_specs=in_specs,
        out_specs=pl.BlockSpec((tile_b, mlp), lambda i: (i, 0)),
        compiler_params=pltpu.CompilerParams(
            dimension_semantics=("parallel",),      # shards batch tiles across TCs on v7x
            vmem_limit_bytes=16 * 1024 * 1024,      # actual footprint ~1.5 MiB; headroom
        ),
    )(act_in, *weights)
    return out_pad[:, :end_dim]


# -----------------------------------------------------------------------------
# Pure-JAX reference of the PyTorch forward (f32 math, same bf16-stored weights)
# -----------------------------------------------------------------------------
def resnet_ref(x, t, cond, p):
    f32 = jnp.float32
    lrelu = lambda v: jnp.where(v > 0, v, 0.01 * v)
    W = lambda w: w.astype(f32)
    t2 = t.reshape(-1, 1).astype(f32)
    time_embed = lrelu(t2 * p["wt"] + p["bt"])
    c = cond.reshape(cond.shape[0], -1)
    h = jnp.maximum(c @ W(p["wc1"]) + p["bc1"], 0.0)
    conds_embed = lrelu(h @ W(p["wc2"]) + p["bc2"])
    embed = time_embed + conds_embed
    inputs_dense = lrelu(x @ W(p["wi"]) + p["bi"])
    residual = lrelu((inputs_dense + embed) @ W(p["wr1"]) + p["br1"])
    residual = residual @ W(p["wr2"]) + p["br2"]
    layer = residual
    for blk in p["blocks"]:
        rb = layer @ W(blk["w_res"]) + blk["b_res"]
        out = lrelu(layer @ W(blk["w_l1"]) + blk["b_l1"])
        out = out @ W(blk["w_l2"]) + blk["b_l2"]
        layer = out + rb
    layer = lrelu((residual + layer) @ W(p["wf"]) + p["bf"])
    return layer @ W(p["wo"]) + p["bo"]


if __name__ == "__main__":
    input_dim, end_dim, cond_dim, mlp_dim, num_layer = 8, 8, 4, 128, 3
    B = 512   # 2 tiles of 256: full 256-row MXU tiles (v6e/v7x) and work for both v7x TCs

    key = jax.random.PRNGKey(0)
    kparam, kx, kt, kc = jax.random.split(key, 4)
    params = make_params(kparam, input_dim, end_dim, cond_dim, mlp_dim, num_layer)
    packed = pack_params(params, input_dim=input_dim, cond_dim=cond_dim,
                         mlp_dim=mlp_dim, end_dim=end_dim)

    x = jax.random.normal(kx, (B, input_dim), jnp.float32)
    t = jax.random.uniform(kt, (B,), jnp.float32)
    cond = jax.random.normal(kc, (B, cond_dim), jnp.float32)

    # bf16 activation carry only on bf16-native VPUs (v6e/v7x); f32 elsewhere (v5e etc.)
    try:
        kind = jax.devices()[0].device_kind.lower()
    except Exception:
        kind = ""
    act_dtype = "bfloat16" if ("v6" in kind or "v7" in kind) else "float32"

    out = resnet_forward(x, t, cond, packed, end_dim=end_dim, input_dim=input_dim,
                         cond_dim=cond_dim, tile_b=256, act_dtype=act_dtype)
    jax.block_until_ready(out)

    ref = resnet_ref(x, t, cond, params)
    assert out.shape == (B, end_dim), out.shape
    max_err = float(jnp.abs(out - ref).max())
    # bf16 MXU inputs (+ optional bf16 activation carry) vs. f32 reference math.
    assert jnp.allclose(out, ref, atol=3e-2, rtol=3e-2), max_err
    print("KERNEL_OK")
</pallas_src>

<mosaic_0001>
module attributes {stable_mosaic.version = 11 : i64} {
  func.func @resnet_kernel(%arg0: i32, %arg1: memref<256x128xf32, #tpu.memory_space<vmem>>, %arg2: memref<9x128x128xbf16, #tpu.memory_space<vmem>>, %arg3: memref<14x256xf32, #tpu.memory_space<vmem>>, %arg4: memref<128x384xbf16, #tpu.memory_space<vmem>>, %arg5: memref<128x256xbf16, #tpu.memory_space<vmem>>, %arg6: memref<256x128xbf16, #tpu.memory_space<vmem>>, %arg7: memref<256x128xf32, #tpu.memory_space<vmem>>) attributes {dimension_semantics = [#tpu.dimension_semantics<parallel>], iteration_bounds = array<i64: 2>, scalar_prefetch = 0 : i64, scratch_operands = 0 : i64, tpu.core_type = #tpu.core_type<tc>, window_params = [{transform_indices = @transform_0, window_bounds = array<i64: 256, 128>}, {pipeline_mode = #tpu.pipeline_mode<synchronous>, transform_indices = @transform_1, window_bounds = array<i64: 9, 128, 128>}, {pipeline_mode = #tpu.pipeline_mode<synchronous>, transform_indices = @transform_2, window_bounds = array<i64: 14, 256>}, {pipeline_mode = #tpu.pipeline_mode<synchronous>, transform_indices = @transform_3, window_bounds = array<i64: 128, 384>}, {pipeline_mode = #tpu.pipeline_mode<synchronous>, transform_indices = @transform_4, window_bounds = array<i64: 128, 256>}, {pipeline_mode = #tpu.pipeline_mode<synchronous>, transform_indices = @transform_5, window_bounds = array<i64: 256, 128>}, {transform_indices = @transform_6, window_bounds = array<i64: 256, 128>}]} {
    %c0 = arith.constant 0 : index
    %c0_0 = arith.constant 0 : index
    %0 = vector.load %arg1[%c0, %c0_0] : memref<256x128xf32, #tpu.memory_space<vmem>>, vector<256x128xf32>
    %c0_1 = arith.constant 0 : index
    %c0_2 = arith.constant 0 : index
    %1 = vector.load %arg4[%c0_1, %c0_2] : memref<128x384xbf16, #tpu.memory_space<vmem>>, vector<128x384xbf16>
    %2 = arith.truncf %0 : vector<256x128xf32> to vector<256x128xbf16>
    %cst = arith.constant dense<0.000000e+00> : vector<256x384xf32>
    %3 = tpu.matmul %2, %1, %cst {dimension_numbers = #tpu.dot_dimension_numbers<[1], [0], [0], [1], [0, 0, 1, 1], [], []>} : vector<256x128xbf16>, vector<128x384xbf16>, vector<256x384xf32> -> vector<256x384xf32>
    %4 = vector.extract_strided_slice %3 {offsets = [0, 0], sizes = [256, 128], strides = [1, 1]} : vector<256x384xf32> to vector<256x128xf32>
    %c1 = arith.constant 1 : index
    %c0_3 = arith.constant 0 : index
    %5 = vector.load %arg3[%c1, %c0_3] : memref<14x256xf32, #tpu.memory_space<vmem>>, vector<1x128xf32>
    %6 = vector.broadcast %5 : vector<1x128xf32> to vector<256x128xf32>
    %7 = arith.addf %4, %6 : vector<256x128xf32>
    %cst_4 = arith.constant 0.000000e+00 : f32
    %8 = vector.broadcast %cst_4 : f32 to vector<256x128xf32>
    %9 = arith.cmpf ogt, %7, %8 : vector<256x128xf32>
    %cst_5 = arith.constant 0.00999999977 : f32
    %10 = vector.broadcast %cst_5 : f32 to vector<256x128xf32>
    %11 = arith.mulf %10, %7 : vector<256x128xf32>
    %12 = arith.select %9, %7, %11 : vector<256x128xi1>, vector<256x128xf32>
    %13 = vector.extract_strided_slice %3 {offsets = [0, 128], sizes = [256, 128], strides = [1, 1]} : vector<256x384xf32> to vector<256x128xf32>
    %c2 = arith.constant 2 : index
    %c0_6 = arith.constant 0 : index
    %14 = vector.load %arg3[%c2, %c0_6] : memref<14x256xf32, #tpu.memory_space<vmem>>, vector<1x128xf32>
    %15 = vector.broadcast %14 : vector<1x128xf32> to vector<256x128xf32>
    %16 = arith.addf %13, %15 : vector<256x128xf32>
    %cst_7 = arith.constant 0.000000e+00 : f32
    %17 = vector.broadcast %cst_7 : f32 to vector<256x128xf32>
    %18 = arith.maximumf %16, %17 : vector<256x128xf32>
    %19 = vector.extract_strided_slice %3 {offsets = [0, 256], sizes = [256, 128], strides = [1, 1]} : vector<256x384xf32> to vector<256x128xf32>
    %c0_8 = arith.constant 0 : index
    %c0_9 = arith.constant 0 : index
    %20 = vector.load %arg3[%c0_8, %c0_9] : memref<14x256xf32, #tpu.memory_space<vmem>>, vector<1x128xf32>
    %21 = vector.broadcast %20 : vector<1x128xf32> to vector<256x128xf32>
    %22 = arith.addf %19, %21 : vector<256x128xf32>
    %cst_10 = arith.constant 0.000000e+00 : f32
    %23 = vector.broadcast %cst_10 : f32 to vector<256x128xf32>
    %24 = arith.cmpf ogt, %22, %23 : vector<256x128xf32>
    %cst_11 = arith.constant 0.00999999977 : f32
    %25 = vector.broadcast %cst_11 : f32 to vector<256x128xf32>
    %26 = arith.mulf %25, %22 : vector<256x128xf32>
    %27 = arith.select %24, %22, %26 : vector<256x128xi1>, vector<256x128xf32>
    %c0_12 = arith.constant 0 : index
    %c0_13 = arith.constant 0 : index
    %c0_14 = arith.constant 0 : index
    %28 = vector.load %arg2[%c0_12, %c0_13, %c0_14] : memref<9x128x128xbf16, #tpu.memory_space<vmem>>, vector<1x128x128xbf16>
    %29 = vector.shape_cast %28 : vector<1x128x128xbf16> to vector<128x128xbf16>
    %30 = arith.truncf %18 : vector<256x128xf32> to vector<256x128xbf16>
    %cst_15 = arith.constant dense<0.000000e+00> : vector<256x128xf32>
    %31 = tpu.matmul %30, %29, %cst_15 {dimension_numbers = #tpu.dot_dimension_numbers<[1], [0], [0], [1], [0, 0, 1, 1], [], []>} : vector<256x128xbf16>, vector<128x128xbf16>, vector<256x128xf32> -> vector<256x128xf32>
    %c3 = arith.constant 3 : index
    %c0_16 = arith.constant 0 : index
    %32 = vector.load %arg3[%c3, %c0_16] : memref<14x256xf32, #tpu.memory_space<vmem>>, vector<1x128xf32>
    %33 = vector.broadcast %32 : vector<1x128xf32> to vector<256x128xf32>
    %34 = arith.addf %31, %33 : vector<256x128xf32>
    %cst_17 = arith.constant 0.000000e+00 : f32
    %35 = vector.broadcast %cst_17 : f32 to vector<256x128xf32>
    %36 = arith.cmpf ogt, %34, %35 : vector<256x128xf32>
    %cst_18 = arith.constant 0.00999999977 : f32
    %37 = vector.broadcast %cst_18 : f32 to vector<256x128xf32>
    %38 = arith.mulf %37, %34 : vector<256x128xf32>
    %39 = arith.select %36, %34, %38 : vector<256x128xi1>, vector<256x128xf32>
    %40 = arith.addf %27, %39 : vector<256x128xf32>
    %41 = arith.addf %12, %40 : vector<256x128xf32>
    %c1_19 = arith.constant 1 : index
    %c0_20 = arith.constant 0 : index
    %c0_21 = arith.constant 0 : index
    %42 = vector.load %arg2[%c1_19, %c0_20, %c0_21] : memref<9x128x128xbf16, #tpu.memory_space<vmem>>, vector<1x128x128xbf16>
    %43 = vector.shape_cast %42 : vector<1x128x128xbf16> to vector<128x128xbf16>
    %44 = arith.truncf %41 : vector<256x128xf32> to vector<256x128xbf16>
    %cst_22 = arith.constant dense<0.000000e+00> : vector<256x128xf32>
    %45 = tpu.matmul %44, %43, %cst_22 {dimension_numbers = #tpu.dot_dimension_numbers<[1], [0], [0], [1], [0, 0, 1, 1], [], []>} : vector<256x128xbf16>, vector<128x128xbf16>, vector<256x128xf32> -> vector<256x128xf32>
    %c4 = arith.constant 4 : index
    %c0_23 = arith.constant 0 : index
    %46 = vector.load %arg3[%c4, %c0_23] : memref<14x256xf32, #tpu.memory_space<vmem>>, vector<1x128xf32>
    %47 = vector.broadcast %46 : vector<1x128xf32> to vector<256x128xf32>
    %48 = arith.addf %45, %47 : vector<256x128xf32>
    %cst_24 = arith.constant 0.000000e+00 : f32
    %49 = vector.broadcast %cst_24 : f32 to vector<256x128xf32>
    %50 = arith.cmpf ogt, %48, %49 : vector<256x128xf32>
    %cst_25 = arith.constant 0.00999999977 : f32
    %51 = vector.broadcast %cst_25 : f32 to vector<256x128xf32>
    %52 = arith.mulf %51, %48 : vector<256x128xf32>
    %53 = arith.select %50, %48, %52 : vector<256x128xi1>, vector<256x128xf32>
    %c2_26 = arith.constant 2 : index
    %c0_27 = arith.constant 0 : index
    %c0_28 = arith.constant 0 : index
    %54 = vector.load %arg2[%c2_26, %c0_27, %c0_28] : memref<9x128x128xbf16, #tpu.memory_space<vmem>>, vector<1x128x128xbf16>
    %55 = vector.shape_cast %54 : vector<1x128x128xbf16> to vector<128x128xbf16>
    %56 = arith.truncf %53 : vector<256x128xf32> to vector<256x128xbf16>
    %cst_29 = arith.constant dense<0.000000e+00> : vector<256x128xf32>
    %57 = tpu.matmul %56, %55, %cst_29 {dimension_numbers = #tpu.dot_dimension_numbers<[1], [0], [0], [1], [0, 0, 1, 1], [], []>} : vector<256x128xbf16>, vector<128x128xbf16>, vector<256x128xf32> -> vector<256x128xf32>
    %c5 = arith.constant 5 : index
    %c0_30 = arith.constant 0 : index
    %58 = vector.load %arg3[%c5, %c0_30] : memref<14x256xf32, #tpu.memory_space<vmem>>, vector<1x128xf32>
    %59 = vector.broadcast %58 : vector<1x128xf32> to vector<256x128xf32>
    %60 = arith.addf %57, %59 : vector<256x128xf32>
    %c3_31 = arith.constant 3 : index
    %c0_32 = arith.constant 0 : index
    %c0_33 = arith.constant 0 : index
    %61 = vector.load %arg2[%c3_31, %c0_32, %c0_33] : memref<9x128x128xbf16, #tpu.memory_space<vmem>>, vector<1x128x128xbf16>
    %62 = vector.shape_cast %61 : vector<1x128x128xbf16> to vector<128x128xbf16>
    %63 = arith.truncf %60 : vector<256x128xf32> to vector<256x128xbf16>
    %cst_34 = arith.constant dense<0.000000e+00> : vector<256x128xf32>
    %64 = tpu.matmul %63, %62, %cst_34 {dimension_numbers = #tpu.dot_dimension_numbers<[1], [0], [0], [1], [0, 0, 1, 1], [], []>} : vector<256x128xbf16>, vector<128x128xbf16>, vector<256x128xf32> -> vector<256x128xf32>
    %c6 = arith.constant 6 : index
    %c0_35 = arith.constant 0 : index
    %65 = vector.load %arg3[%c6, %c0_35] : memref<14x256xf32, #tpu.memory_space<vmem>>, vector<1x128xf32>
    %66 = vector.broadcast %65 : vector<1x128xf32> to vector<256x128xf32>
    %67 = arith.addf %64, %66 : vector<256x128xf32>
    %c4_36 = arith.constant 4 : index
    %c0_37 = arith.constant 0 : index
    %c0_38 = arith.constant 0 : index
    %68 = vector.load %arg2[%c4_36, %c0_37, %c0_38] : memref<9x128x128xbf16, #tpu.memory_space<vmem>>, vector<1x128x128xbf16>
    %69 = vector.shape_cast %68 : vector<1x128x128xbf16> to vector<128x128xbf16>
    %70 = arith.truncf %60 : vector<256x128xf32> to vector<256x128xbf16>
    %cst_39 = arith.constant dense<0.000000e+00> : vector<256x128xf32>
    %71 = tpu.matmul %70, %69, %cst_39 {dimension_numbers = #tpu.dot_dimension_numbers<[1], [0], [0], [1], [0, 0, 1, 1], [], []>} : vector<256x128xbf16>, vector<128x128xbf16>, vector<256x128xf32> -> vector<256x128xf32>
    %c7 = arith.constant 7 : index
    %c0_40 = arith.constant 0 : index
    %72 = vector.load %arg3[%c7, %c0_40] : memref<14x256xf32, #tpu.memory_space<vmem>>, vector<1x128xf32>
    %73 = vector.broadcast %72 : vector<1x128xf32> to vector<256x128xf32>
    %74 = arith.addf %71, %73 : vector<256x128xf32>
    %cst_41 = arith.constant 0.000000e+00 : f32
    %75 = vector.broadcast %cst_41 : f32 to vector<256x128xf32>
    %76 = arith.cmpf ogt, %74, %75 : vector<256x128xf32>
    %cst_42 = arith.constant 0.00999999977 : f32
    %77 = vector.broadcast %cst_42 : f32 to vector<256x128xf32>
    %78 = arith.mulf %77, %74 : vector<256x128xf32>
    %79 = arith.select %76, %74, %78 : vector<256x128xi1>, vector<256x128xf32>
    %c5_43 = arith.constant 5 : index
    %c0_44 = arith.constant 0 : index
    %c0_45 = arith.constant 0 : index
    %80 = vector.load %arg2[%c5_43, %c0_44, %c0_45] : memref<9x128x128xbf16, #tpu.memory_space<vmem>>, vector<1x128x128xbf16>
    %81 = vector.shape_cast %80 : vector<1x128x128xbf16> to vector<128x128xbf16>
    %82 = arith.truncf %79 : vector<256x128xf32> to vector<256x128xbf16>
    %cst_46 = arith.constant dense<0.000000e+00> : vector<256x128xf32>
    %83 = tpu.matmul %82, %81, %cst_46 {dimension_numbers = #tpu.dot_dimension_numbers<[1], [0], [0], [1], [0, 0, 1, 1], [], []>} : vector<256x128xbf16>, vector<128x128xbf16>, vector<256x128xf32> -> vector<256x128xf32>
    %c8 = arith.constant 8 : index
    %c0_47 = arith.constant 0 : index
    %84 = vector.load %arg3[%c8, %c0_47] : memref<14x256xf32, #tpu.memory_space<vmem>>, vector<1x128xf32>
    %85 = vector.broadcast %84 : vector<1x128xf32> to vector<256x128xf32>
    %86 = arith.addf %83, %85 : vector<256x128xf32>
    %87 = arith.addf %86, %67 : vector<256x128xf32>
    %c6_48 = arith.constant 6 : index
    %c0_49 = arith.constant 0 : index
    %c0_50 = arith.constant 0 : index
    %88 = vector.load %arg2[%c6_48, %c0_49, %c0_50] : memref<9x128x128xbf16, #tpu.memory_space<vmem>>, vector<1x128x128xbf16>
    %89 = vector.shape_cast %88 : vector<1x128x128xbf16> to vector<128x128xbf16>
    %90 = arith.truncf %87 : vector<256x128xf32> to vector<256x128xbf16>
    %cst_51 = arith.constant dense<0.000000e+00> : vector<256x128xf32>
    %91 = tpu.matmul %90, %89, %cst_51 {dimension_numbers = #tpu.dot_dimension_numbers<[1], [0], [0], [1], [0, 0, 1, 1], [], []>} : vector<256x128xbf16>, vector<128x128xbf16>, vector<256x128xf32> -> vector<256x128xf32>
    %c9 = arith.constant 9 : index
    %c0_52 = arith.constant 0 : index
    %92 = vector.load %arg3[%c9, %c0_52] : memref<14x256xf32, #tpu.memory_space<vmem>>, vector<1x128xf32>
    %93 = vector.broadcast %92 : vector<1x128xf32> to vector<256x128xf32>
    %94 = arith.addf %91, %93 : vector<256x128xf32>
    %c7_53 = arith.constant 7 : index
    %c0_54 = arith.constant 0 : index
    %c0_55 = arith.constant 0 : index
    %95 = vector.load %arg2[%c7_53, %c0_54, %c0_55] : memref<9x128x128xbf16, #tpu.memory_space<vmem>>, vector<1x128x128xbf16>
    %96 = vector.shape_cast %95 : vector<1x128x128xbf16> to vector<128x128xbf16>
    %97 = arith.truncf %87 : vector<256x128xf32> to vector<256x128xbf16>
    %cst_56 = arith.constant dense<0.000000e+00> : vector<256x128xf32>
    %98 = tpu.matmul %97, %96, %cst_56 {dimension_numbers = #tpu.dot_dimension_numbers<[1], [0], [0], [1], [0, 0, 1, 1], [], []>} : vector<256x128xbf16>, vector<128x128xbf16>, vector<256x128xf32> -> vector<256x128xf32>
    %c10 = arith.constant 10 : index
    %c0_57 = arith.constant 0 : index
    %99 = vector.load %arg3[%c10, %c0_57] : memref<14x256xf32, #tpu.memory_space<vmem>>, vector<1x128xf32>
    %100 = vector.broadcast %99 : vector<1x128xf32> to vector<256x128xf32>
    %101 = arith.addf %98, %100 : vector<256x128xf32>
    %cst_58 = arith.constant 0.000000e+00 : f32
    %102 = vector.broadcast %cst_58 : f32 to vector<256x128xf32>
    %103 = arith.cmpf ogt, %101, %102 : vector<256x128xf32>
    %cst_59 = arith.constant 0.00999999977 : f32
    %104 = vector.broadcast %cst_59 : f32 to vector<256x128xf32>
    %105 = arith.mulf %104, %101 : vector<256x128xf32>
    %106 = arith.select %103, %101, %105 : vector<256x128xi1>, vector<256x128xf32>
    %c8_60 = arith.constant 8 : index
    %c0_61 = arith.constant 0 : index
    %c0_62 = arith.constant 0 : index
    %107 = vector.load %arg2[%c8_60, %c0_61, %c0_62] : memref<9x128x128xbf16, #tpu.memory_space<vmem>>, vector<1x128x128xbf16>
    %108 = vector.shape_cast %107 : vector<1x128x128xbf16> to vector<128x128xbf16>
    %109 = arith.truncf %106 : vector<256x128xf32> to vector<256x128xbf16>
    %cst_63 = arith.constant dense<0.000000e+00> : vector<256x128xf32>
    %110 = tpu.matmul %109, %108, %cst_63 {dimension_numbers = #tpu.dot_dimension_numbers<[1], [0], [0], [1], [0, 0, 1, 1], [], []>} : vector<256x128xbf16>, vector<128x128xbf16>, vector<256x128xf32> -> vector<256x128xf32>
    %c11 = arith.constant 11 : index
    %c0_64 = arith.constant 0 : index
    %111 = vector.load %arg3[%c11, %c0_64] : memref<14x256xf32, #tpu.memory_space<vmem>>, vector<1x128xf32>
    %112 = vector.broadcast %111 : vector<1x128xf32> to vector<256x128xf32>
    %113 = arith.addf %110, %112 : vector<256x128xf32>
    %114 = arith.addf %113, %94 : vector<256x128xf32>
    %115 = arith.addf %60, %114 : vector<256x128xf32>
    %c0_65 = arith.constant 0 : index
    %c0_66 = arith.constant 0 : index
    %116 = vector.load %arg5[%c0_65, %c0_66] : memref<128x256xbf16, #tpu.memory_space<vmem>>, vector<128x256xbf16>
    %117 = arith.truncf %115 : vector<256x128xf32> to vector<256x128xbf16>
    %cst_67 = arith.constant dense<0.000000e+00> : vector<256x256xf32>
    %118 = tpu.matmul %117, %116, %cst_67 {dimension_numbers = #tpu.dot_dimension_numbers<[1], [0], [0], [1], [0, 0, 1, 1], [], []>} : vector<256x128xbf16>, vector<128x256xbf16>, vector<256x256xf32> -> vector<256x256xf32>
    %c13 = arith.constant 13 : index
    %c0_68 = arith.constant 0 : index
    %119 = vector.load %arg3[%c13, %c0_68] : memref<14x256xf32, #tpu.memory_space<vmem>>, vector<1x256xf32>
    %120 = vector.broadcast %119 : vector<1x256xf32> to vector<256x256xf32>
    %121 = arith.addf %118, %120 : vector<256x256xf32>
    %cst_69 = arith.constant 0.000000e+00 : f32
    %122 = vector.broadcast %cst_69 : f32 to vector<256x256xf32>
    %123 = arith.cmpf ogt, %121, %122 : vector<256x256xf32>
    %cst_70 = arith.constant 0.00999999977 : f32
    %124 = vector.broadcast %cst_70 : f32 to vector<256x256xf32>
    %125 = arith.mulf %124, %121 : vector<256x256xf32>
    %126 = arith.select %123, %121, %125 : vector<256x256xi1>, vector<256x256xf32>
    %c0_71 = arith.constant 0 : index
    %c0_72 = arith.constant 0 : index
    %127 = vector.load %arg6[%c0_71, %c0_72] : memref<256x128xbf16, #tpu.memory_space<vmem>>, vector<256x128xbf16>
    %128 = arith.truncf %126 : vector<256x256xf32> to vector<256x256xbf16>
    %cst_73 = arith.constant dense<0.000000e+00> : vector<256x128xf32>
    %129 = tpu.matmul %128, %127, %cst_73 {dimension_numbers = #tpu.dot_dimension_numbers<[1], [0], [0], [1], [0, 0, 1, 1], [], []>} : vector<256x256xbf16>, vector<256x128xbf16>, vector<256x128xf32> -> vector<256x128xf32>
    %c12 = arith.constant 12 : index
    %c0_74 = arith.constant 0 : index
    %130 = vector.load %arg3[%c12, %c0_74] : memref<14x256xf32, #tpu.memory_space<vmem>>, vector<1x128xf32>
    %131 = vector.broadcast %130 : vector<1x128xf32> to vector<256x128xf32>
    %132 = arith.addf %129, %131 : vector<256x128xf32>
    %c0_75 = arith.constant 0 : index
    %c0_76 = arith.constant 0 : index
    %133 = vector.load %arg7[%c0_75, %c0_76] : memref<256x128xf32, #tpu.memory_space<vmem>>, vector<256x128xf32>
    tpu.vector_store %arg7[%c0_75, %c0_76], %132 {strides = array<i32>} : memref<256x128xf32, #tpu.memory_space<vmem>>, vector<256x128xf32>,
    return
  }
  func.func @transform_0(%arg0: i32) -> (i32, i32) {
    %c0_i32 = arith.constant 0 : i32
    %c0_i32_0 = arith.constant 0 : i32
    return %arg0, %c0_i32 : i32, i32
  }
  func.func @transform_1(%arg0: i32) -> (i32, i32, i32) {
    %c0_i32 = arith.constant 0 : i32
    %c0_i32_0 = arith.constant 0 : i32
    %c0_i32_1 = arith.constant 0 : i32
    %c0_i32_2 = arith.constant 0 : i32
    return %c0_i32, %c0_i32_0, %c0_i32_1 : i32, i32, i32
  }
  func.func @transform_2(%arg0: i32) -> (i32, i32) {
    %c0_i32 = arith.constant 0 : i32
    %c0_i32_0 = arith.constant 0 : i32
    %c0_i32_1 = arith.constant 0 : i32
    return %c0_i32, %c0_i32_0 : i32, i32
  }
  func.func @transform_3(%arg0: i32) -> (i32, i32) {
    %c0_i32 = arith.constant 0 : i32
    %c0_i32_0 = arith.constant 0 : i32
    %c0_i32_1 = arith.constant 0 : i32
    return %c0_i32, %c0_i32_0 : i32, i32
  }
  func.func @transform_4(%arg0: i32) -> (i32, i32) {
    %c0_i32 = arith.constant 0 : i32
    %c0_i32_0 = arith.constant 0 : i32
    %c0_i32_1 = arith.constant 0 : i32
    return %c0_i32, %c0_i32_0 : i32, i32
  }
  func.func @transform_5(%arg0: i32) -> (i32, i32) {
    %c0_i32 = arith.constant 0 : i32
    %c0_i32_0 = arith.constant 0 : i32
    %c0_i32_1 = arith.constant 0 : i32
    return %c0_i32, %c0_i32_0 : i32, i32
  }
  func.func @transform_6(%arg0: i32) -> (i32, i32) {
    %c0_i32 = arith.constant 0 : i32
    %c0_i32_0 = arith.constant 0 : i32
    return %arg0, %c0_i32 : i32, i32
  }
}

</mosaic_0001>

<llo_original>
// kernel: resnet_forward.1
$region0: #{resnet_forward.1}
  #allocation0 [shape = 'u32[]', space=smem, size = 0x4, offset = 0x4, fixed_abs, tag = 'smem constant byte address 0x4 - core index']
  #allocation1 [shape = 'u32[144,128]{1,0:T(1,128)}', space=vmem, size = 0x12000, scoped, tag = 'internal scratch']
  %s0 = inlined_call_operand.vmem [shape: f32[512,128], index: 0, kind: input, shape index: {}]
  %s1 = inlined_call_operand.vmem [shape: bf16[9,128,128], index: 1, kind: input, shape index: {}]
  %s2 = inlined_call_operand.vmem [shape: f32[14,256], index: 2, kind: input, shape index: {}]
  %s3 = inlined_call_operand.vmem [shape: bf16[128,384], index: 3, kind: input, shape index: {}]
  %s4 = inlined_call_operand.vmem [shape: bf16[128,256], index: 4, kind: input, shape index: {}]
  %s5 = inlined_call_operand.vmem [shape: bf16[256,128], index: 5, kind: input, shape index: {}]
  %s6 = inlined_call_operand.vmem [shape: f32[512,128], index: 6, kind: output, shape index: {}]
  %s7 = sld [smem:[#allocation0]]
  $region57: #{resnet_forward.1} parent=0
    _
  %s9 = ssub.s32 1, %s7
  %s10 = scalar_select 0, %s9, %s7
  loop: start=0, step=1, limit=4
  $region2: #{resnet_forward.1} parent=0 // loop_pre_header
    _
  $region3: #{resnet_forward.1} parent=0 // loop_header
    %s12 = sphi 0, %s16
    %p13 = scmp.ge.s32.totalorder %s12, 4
    %s22 = sphi 0, %s24
    %s25 = sphi 0, %s22
    %s26 = sphi 0, %s25
    %s42 = sphi 0, %s26
    %s46 = sphi 0, %s46
    %s48 = sphi 0, %s46
    %s49 = sphi 0, %s48
    %s63 = sphi 0, %s49
    %s67 = sphi 0, %s67
    %s69 = sphi 0, %s67
    %s70 = sphi 0, %s69
    %s84 = sphi 0, %s70
    %s88 = sphi 0, %s88
    %s90 = sphi 0, %s88
    %s91 = sphi 0, %s90
    %s105 = sphi 0, %s91
    %s109 = sphi 0, %s109
    %s111 = sphi 0, %s109
    %s112 = sphi 0, %s111
    %s126 = sphi 0, %s112
    %s130 = sphi 0, %s130
    %s132 = sphi 0, %s130
    %s133 = sphi 0, %s132
    %s147 = sphi 0, %s133
    %s153 = sphi 0, %s155
    %s156 = sphi 0, %s153
    %s157 = sphi 0, %s156
    %s173 = sphi 0, %s157
  $region4: #{resnet_forward.1} parent=0 // loop_header_branch
    %15 = sbr.rel (%p13) target = $region8
  $region5: #{resnet_forward.1} parent=0 // loop_body
    %s17 = ssub.s32 %s12, 1
    %s18 = ssub.s32 %s12, 2
    %s19 = sadd.s32 %s12, 1
    %s20 = ssub.s32 %s12, %s19
    %p21 = scmp.eq.s32.totalorder %s20, 0
    %s23 = sadd.s32 %s22, 1
    %s24 = scalar_select %p21, %s22, %s23
    %p27 = pneg %p21
    %p28 = scmp.eq.s32.totalorder %s12, 1
    %p29 = por %p27, %p28
    %p30 = scmp.ne.s32.totalorder %s22, %s25
    %p31 = scmp.eq.s32.totalorder %s12, 0
    %p32 = por %p30, %p31
    %p33 = scmp.ne.s32.totalorder %s22, %s25
    %p34 = scmp.eq.s32.totalorder %s17, 1
    %p35 = por %p33, %p34
    %p36 = scmp.ne.s32.totalorder %s25, %s26
    %p37 = scmp.eq.s32.totalorder %s17, 0
    %p38 = por %p36, %p37
    %p39 = scmp.ne.s32.totalorder %s25, %s26
    %p40 = scmp.eq.s32.totalorder %s18, 1
    %p41 = por %p39, %p40
    %p43 = scmp.ne.s32.totalorder %s26, %s42
    %p44 = scmp.eq.s32.totalorder %s18, 0
    %p45 = por %p43, %p44
    %s47 = sadd.s32 %s46, 1
    %p50 = scmp.eq.s32.totalorder %s12, 1
    %p51 = scmp.ne.s32.totalorder %s46, %s48
    %p52 = scmp.eq.s32.totalorder %s12, 0
    %p53 = por %p51, %p52
    %p54 = scmp.ne.s32.totalorder %s46, %s48
    %p55 = scmp.eq.s32.totalorder %s17, 1
    %p56 = por %p54, %p55
    %p57 = scmp.ne.s32.totalorder %s48, %s49
    %p58 = scmp.eq.s32.totalorder %s17, 0
    %p59 = por %p57, %p58
    %p60 = scmp.ne.s32.totalorder %s48, %s49
    %p61 = scmp.eq.s32.totalorder %s18, 1
    %p62 = por %p60, %p61
    %p64 = scmp.ne.s32.totalorder %s49, %s63
    %p65 = scmp.eq.s32.totalorder %s18, 0
    %p66 = por %p64, %p65
    %s68 = sadd.s32 %s67, 1
    %p71 = scmp.eq.s32.totalorder %s12, 1
    %p72 = scmp.ne.s32.totalorder %s67, %s69
    %p73 = scmp.eq.s32.totalorder %s12, 0
    %p74 = por %p72, %p73
    %p75 = scmp.ne.s32.totalorder %s67, %s69
    %p76 = scmp.eq.s32.totalorder %s17, 1
    %p77 = por %p75, %p76
    %p78 = scmp.ne.s32.totalorder %s69, %s70
    %p79 = scmp.eq.s32.totalorder %s17, 0
    %p80 = por %p78, %p79
    %p81 = scmp.ne.s32.totalorder %s69, %s70
    %p82 = scmp.eq.s32.totalorder %s18, 1
    %p83 = por %p81, %p82
    %p85 = scmp.ne.s32.totalorder %s70, %s84
    %p86 = scmp.eq.s32.totalorder %s18, 0
    %p87 = por %p85, %p86
    %s89 = sadd.s32 %s88, 1
    %p92 = scmp.eq.s32.totalorder %s12, 1
    %p93 = scmp.ne.s32.totalorder %s88, %s90
    %p94 = scmp.eq.s32.totalorder %s12, 0
    %p95 = por %p93, %p94
    %p96 = scmp.ne.s32.totalorder %s88, %s90
    %p97 = scmp.eq.s32.totalorder %s17, 1
    %p98 = por %p96, %p97
    %p99 = scmp.ne.s32.totalorder %s90, %s91
    %p100 = scmp.eq.s32.totalorder %s17, 0
    %p101 = por %p99, %p100
    %p102 = scmp.ne.s32.totalorder %s90, %s91
    %p103 = scmp.eq.s32.totalorder %s18, 1
    %p104 = por %p102, %p103
    %p106 = scmp.ne.s32.totalorder %s91, %s105
    %p107 = scmp.eq.s32.totalorder %s18, 0
    %p108 = por %p106, %p107
    %s110 = sadd.s32 %s109, 1
    %p113 = scmp.eq.s32.totalorder %s12, 1
    %p114 = scmp.ne.s32.totalorder %s109, %s111
    %p115 = scmp.eq.s32.totalorder %s12, 0
    %p116 = por %p114, %p115
    %p117 = scmp.ne.s32.totalorder %s109, %s111
    %p118 = scmp.eq.s32.totalorder %s17, 1
    %p119 = por %p117, %p118
    %p120 = scmp.ne.s32.totalorder %s111, %s112
    %p121 = scmp.eq.s32.totalorder %s17, 0
    %p122 = por %p120, %p121
    %p123 = scmp.ne.s32.totalorder %s111, %s112
    %p124 = scmp.eq.s32.totalorder %s18, 1
    %p125 = por %p123, %p124
    %p127 = scmp.ne.s32.totalorder %s112, %s126
    %p128 = scmp.eq.s32.totalorder %s18, 0
    %p129 = por %p127, %p128
    %s131 = sadd.s32 %s130, 1
    %p134 = scmp.eq.s32.totalorder %s12, 1
    %p135 = scmp.ne.s32.totalorder %s130, %s132
    %p136 = scmp.eq.s32.totalorder %s12, 0
    %p137 = por %p135, %p136
    %p138 = scmp.ne.s32.totalorder %s130, %s132
    %p139 = scmp.eq.s32.totalorder %s17, 1
    %p140 = por %p138, %p139
    %p141 = scmp.ne.s32.totalorder %s132, %s133
    %p142 = scmp.eq.s32.totalorder %s17, 0
    %p143 = por %p141, %p142
    %p144 = scmp.ne.s32.totalorder %s132, %s133
    %p145 = scmp.eq.s32.totalorder %s18, 1
    %p146 = por %p144, %p145
    %p148 = scmp.ne.s32.totalorder %s133, %s147
    %p149 = scmp.eq.s32.totalorder %s18, 0
    %p150 = por %p148, %p149
    %s151 = ssub.s32 %s12, %s19
    %p152 = scmp.eq.s32.totalorder %s151, 0
    %s154 = sadd.s32 %s153, 1
    %s155 = scalar_select %p152, %s153, %s154
    %p158 = pneg %p152
    %p159 = scmp.eq.s32.totalorder %s12, 1
    %p160 = por %p158, %p159
    %p161 = scmp.ne.s32.totalorder %s153, %s156
    %p162 = scmp.eq.s32.totalorder %s12, 0
    %p163 = por %p161, %p162
    %p164 = scmp.ne.s32.totalorder %s153, %s156
    %p165 = scmp.eq.s32.totalorder %s17, 1
    %p166 = por %p164, %p165
    %p167 = scmp.ne.s32.totalorder %s156, %s157
    %p168 = scmp.eq.s32.totalorder %s17, 0
    %p169 = por %p167, %p168
    %p170 = scmp.ne.s32.totalorder %s156, %s157
    %p171 = scmp.eq.s32.totalorder %s18, 1
    %p172 = por %p170, %p171
    %p174 = scmp.ne.s32.totalorder %s157, %s173
    %p175 = scmp.eq.s32.totalorder %s18, 0
    %p176 = por %p174, %p175
    %p177 = scmp.le.s32.totalorder 1, %s12
    %p178 = scmp.lt.s32.totalorder %s12, 3
    %p179 = pnand %p177, %p178
    %p180 = pneg %p179
    // Predicated region
    $region9: #{resnet_forward.1} parent=5 // pred_check
      _
    $region10: #{resnet_forward.1} parent=5 // pred_check_branch
      %182 = sbr.rel (%p179) target = $region12
    $region11: #{resnet_forward.1} parent=5 // pred_region
      %s183 = ssub.s32 %s12, 1
      // Predicated region
      $region13: #{resnet_forward.1} parent=11 // pred_check
        %p184 = pneg %p59
      $region14: #{resnet_forward.1} parent=11 // pred_check_branch
        %186 = sbr.rel (%p184) target = $region16
      $region15: #{resnet_forward.1} parent=11 // pred_region
        _
      $region16: #{resnet_forward.1} parent=11 // pred_fallthru
        _
      // Predicated region
      $region17: #{resnet_forward.1} parent=11 // pred_check
        %p187 = pneg %p80
      $region18: #{resnet_forward.1} parent=11 // pred_check_branch
        %189 = sbr.rel (%p187) target = $region20
      $region19: #{resnet_forward.1} parent=11 // pred_region
        _
      $region20: #{resnet_forward.1} parent=11 // pred_fallthru
        _
      // Predicated region
      $region21: #{resnet_forward.1} parent=11 // pred_check
        %p190 = pneg %p101
      $region22: #{resnet_forward.1} parent=11 // pred_check_branch
        %192 = sbr.rel (%p190) target = $region24
      $region23: #{resnet_forward.1} parent=11 // pred_region
        _
      $region24: #{resnet_forward.1} parent=11 // pred_fallthru
        _
      // Predicated region
      $region25: #{resnet_forward.1} parent=11 // pred_check
        %p193 = pneg %p122
      $region26: #{resnet_forward.1} parent=11 // pred_check_branch
        %195 = sbr.rel (%p193) target = $region28
      $region27: #{resnet_forward.1} parent=11 // pred_region
        _
      $region28: #{resnet_forward.1} parent=11 // pred_fallthru
        _
      // Predicated region
      $region29: #{resnet_forward.1} parent=11 // pred_check
        %p196 = pneg %p143
      $region30: #{resnet_forward.1} parent=11 // pred_check_branch
        %198 = sbr.rel (%p196) target = $region32
      $region31: #{resnet_forward.1} parent=11 // pred_region
        _
      $region32: #{resnet_forward.1} parent=11 // pred_fallthru
        _
    $region12: #{resnet_forward.1} parent=5 // pred_fallthru
      _
    %p199 = scmp.lt.s32.totalorder %s12, 2
    // Predicated region
    $region33: #{resnet_forward.1} parent=5 // pred_check
      %p200 = pneg %p199
    $region34: #{resnet_forward.1} parent=5 // pred_check_branch
      %202 = sbr.rel (%p200) target = $region36
    $region35: #{resnet_forward.1} parent=5 // pred_region
      // Predicated region
      $region37: #{resnet_forward.1} parent=35 // pred_check
        %p203 = pneg %p32
      $region38: #{resnet_forward.1} parent=35 // pred_check_branch
        %205 = sbr.rel (%p203) target = $region40
      $region39: #{resnet_forward.1} parent=35 // pred_region
        %s206 = smul.u32 32, %s12
        %p207 = scmp.lt.s32.totalorder %s206, 63
        %s208 = scalar_select %p207, %s206, 63
        %s209 = smul.addr %s208, 8
        %s210 = scalar_lea.vmem %s0, %s209
        %s211 = smul.u32 32, %s12
      $region40: #{resnet_forward.1} parent=35 // pred_fallthru
        _
    $region36: #{resnet_forward.1} parent=5 // pred_fallthru
      _
    %p212 = scmp.le.s32.totalorder 1, %s12
    %p213 = scmp.lt.s32.totalorder %s12, 3
    %p214 = pnand %p212, %p213
    %p215 = pneg %p214
    // Predicated region
    $region41: #{resnet_forward.1} parent=5 // pred_check
      _
    $region42: #{resnet_forward.1} parent=5 // pred_check_branch
      %217 = sbr.rel (%p214) target = $region44
    $region43: #{resnet_forward.1} parent=5 // pred_region
      %s218 = ssub.s32 %s12, 1
      %s219 = smul.u32 32, %s17
      %p220 = scmp.lt.s32.totalorder %s219, 63
      %s221 = scalar_select %p220, %s219, 63
      %s222 = smul.addr %s221, 8
      %s223 = scalar_lea.vmem %s0, %s222
      %p224 = pneg %p38
      %p225 = pneg %p35
      %p226 = pneg %p59
      %p227 = pneg %p56
      %p228 = pneg %p80
      %p229 = pneg %p77
      %p230 = pneg %p101
      %p231 = pneg %p98
      %p232 = pneg %p122
      %p233 = pneg %p119
      %p234 = pneg %p143
      %p235 = pneg %p140
      %p236 = pneg %p169
      %p237 = pneg %p166
      %s238 = smul.u32 32, %s17
      %p239 = scmp.lt.s32.totalorder %s238, 63
      %s240 = scalar_select %p239, %s238, 63
      %s241 = smul.addr %s240, 8
      %s242 = scalar_lea.vmem %s6, %s241
      %s243 = smul.u32 32, %s17
      %p244 = scmp.lt.s32.totalorder %s243, 63
      %s245 = scalar_select %p244, %s243, 63
      %s246 = smul.addr %s245, 8
      %s247 = scalar_lea.vmem %s0, %s246
      %s248 = smul.u32 32, %s17
      %s249 = smul.u32 32, %s17
      %p250 = scmp.lt.s32.totalorder %s249, 63
      %s251 = scalar_select %p250, %s249, 63
      %s252 = smul.addr %s251, 8
      %s253 = scalar_lea.vmem %s6, %s252
      %s254 = smul.u32 32, %s17
      %v256 = vld [vmem:[%s247] sm:$0xff]
      %v257 = vld [vmem:[%s247 + $0x8] sm:$0xff]
      %v258 = vld [vmem:[%s247 + $0x10] sm:$0xff]
      %v259 = vld [vmem:[%s247 + $0x18] sm:$0xff]
      %v260 = vld [vmem:[%s247 + $0x20] sm:$0xff]
      %v261 = vld [vmem:[%s247 + $0x28] sm:$0xff]
      %v262 = vld [vmem:[%s247 + $0x30] sm:$0xff]
      %v263 = vld [vmem:[%s247 + $0x38] sm:$0xff]
      %v264 = vld [vmem:[%s247 + $0x40] sm:$0xff]
      %v265 = vld [vmem:[%s247 + $0x48] sm:$0xff]
      %v266 = vld [vmem:[%s247 + $0x50] sm:$0xff]
      %v267 = vld [vmem:[%s247 + $0x58] sm:$0xff]
      %v268 = vld [vmem:[%s247 + $0x60] sm:$0xff]
      %v269 = vld [vmem:[%s247 + $0x68] sm:$0xff]
      %v270 = vld [vmem:[%s247 + $0x70] sm:$0xff]
      %v271 = vld [vmem:[%s247 + $0x78] sm:$0xff]
      %v272 = vld [vmem:[%s247 + $0x80] sm:$0xff]
      %v273 = vld [vmem:[%s247 + $0x88] sm:$0xff]
      %v274 = vld [vmem:[%s247 + $0x90] sm:$0xff]
      %v275 = vld [vmem:[%s247 + $0x98] sm:$0xff]
      %v276 = vld [vmem:[%s247 + $0xa0] sm:$0xff]
      %v277 = vld [vmem:[%s247 + $0xa8] sm:$0xff]
      %v278 = vld [vmem:[%s247 + $0xb0] sm:$0xff]
      %v279 = vld [vmem:[%s247 + $0xb8] sm:$0xff]
      %v280 = vld [vmem:[%s247 + $0xc0] sm:$0xff]
      %v281 = vld [vmem:[%s247 + $0xc8] sm:$0xff]
      %v282 = vld [vmem:[%s247 + $0xd0] sm:$0xff]
      %v283 = vld [vmem:[%s247 + $0xd8] sm:$0xff]
      %v284 = vld [vmem:[%s247 + $0xe0] sm:$0xff]
      %v285 = vld [vmem:[%s247 + $0xe8] sm:$0xff]
      %v286 = vld [vmem:[%s247 + $0xf0] sm:$0xff]
      %v287 = vld [vmem:[%s247 + $0xf8] sm:$0xff]
      %v288 = vld [vmem:[%s3] sm:$0xff]
      %v289 = vld [vmem:[%s3 + $0x8] sm:$0xf]
      %v290 = vld [vmem:[%s3 + $0xc] sm:$0xff]
      %v291 = vld [vmem:[%s3 + $0x14] sm:$0xf]
      %v292 = vld [vmem:[%s3 + $0x18] sm:$0xff]
      %v293 = vld [vmem:[%s3 + $0x20] sm:$0xf]
      %v294 = vld [vmem:[%s3 + $0x24] sm:$0xff]
      %v295 = vld [vmem:[%s3 + $0x2c] sm:$0xf]
      %v296 = vld [vmem:[%s3 + $0x30] sm:$0xff]
      %v297 = vld [vmem:[%s3 + $0x38] sm:$0xf]
      %v298 = vld [vmem:[%s3 + $0x3c] sm:$0xff]
      %v299 = vld [vmem:[%s3 + $0x44] sm:$0xf]
      %v300 = vld [vmem:[%s3 + $0x48] sm:$0xff]
      %v301 = vld [vmem:[%s3 + $0x50] sm:$0xf]
      %v302 = vld [vmem:[%s3 + $0x54] sm:$0xff]
      %v303 = vld [vmem:[%s3 + $0x5c] sm:$0xf]
      %v304 = vld [vmem:[%s3 + $0x60] sm:$0xff]
      %v305 = vld [vmem:[%s3 + $0x68] sm:$0xf]
      %v306 = vld [vmem:[%s3 + $0x6c] sm:$0xff]
      %v307 = vld [vmem:[%s3 + $0x74] sm:$0xf]
      %v308 = vld [vmem:[%s3 + $0x78] sm:$0xff]
      %v309 = vld [vmem:[%s3 + $0x80] sm:$0xf]
      %v310 = vld [vmem:[%s3 + $0x84] sm:$0xff]
      %v311 = vld [vmem:[%s3 + $0x8c] sm:$0xf]
      %v312 = vld [vmem:[%s3 + $0x90] sm:$0xff]
      %v313 = vld [vmem:[%s3 + $0x98] sm:$0xf]
      %v314 = vld [vmem:[%s3 + $0x9c] sm:$0xff]
      %v315 = vld [vmem:[%s3 + $0xa4] sm:$0xf]
      %v316 = vld [vmem:[%s3 + $0xa8] sm:$0xff]
      %v317 = vld [vmem:[%s3 + $0xb0] sm:$0xf]
      %v318 = vld [vmem:[%s3 + $0xb4] sm:$0xff]
      %v319 = vld [vmem:[%s3 + $0xbc] sm:$0xf]
      %v320 = vpack.c.bf16 %v257, %v256
      %v321 = vpack.c.bf16 %v259, %v258
      %v322 = vpack.c.bf16 %v261, %v260
      %v323 = vpack.c.bf16 %v263, %v262
      %v324 = vpack.c.bf16 %v265, %v264
      %v325 = vpack.c.bf16 %v267, %v266
      %v326 = vpack.c.bf16 %v269, %v268
      %v327 = vpack.c.bf16 %v271, %v270
      %v328 = vpack.c.bf16 %v273, %v272
      %v329 = vpack.c.bf16 %v275, %v274
      %v330 = vpack.c.bf16 %v277, %v276
      %v331 = vpack.c.bf16 %v279, %v278
      %v332 = vpack.c.bf16 %v281, %v280
      %v333 = vpack.c.bf16 %v283, %v282
      %v334 = vpack.c.bf16 %v285, %v284
      %v335 = vpack.c.bf16 %v287, %v286
      %v368 = vunpack.c.l.b16 %v288
      %v369 = vunpack.c.h.b16 %v288
      %v370 = vunpack.c.l.b16 %v289
      %v371 = vunpack.c.l.b16 %v290
      %v372 = vunpack.c.h.b16 %v290
      %v373 = vunpack.c.l.b16 %v291
      %v374 = vunpack.c.l.b16 %v292
      %v375 = vunpack.c.h.b16 %v292
      %v376 = vunpack.c.l.b16 %v293
      %v377 = vunpack.c.l.b16 %v294
      %v378 = vunpack.c.h.b16 %v294
      %v379 = vunpack.c.l.b16 %v295
      %v380 = vunpack.c.l.b16 %v296
      %v381 = vunpack.c.h.b16 %v296
      %v382 = vunpack.c.l.b16 %v297
      %v383 = vunpack.c.l.b16 %v298
      %v384 = vunpack.c.h.b16 %v298
      %v385 = vunpack.c.l.b16 %v299
      %v386 = vunpack.c.l.b16 %v300
      %v387 = vunpack.c.h.b16 %v300
      %v388 = vunpack.c.l.b16 %v301
      %v389 = vunpack.c.l.b16 %v302
      %v390 = vunpack.c.h.b16 %v302
      %v391 = vunpack.c.l.b16 %v303
      %v392 = vunpack.c.l.b16 %v304
      %v393 = vunpack.c.h.b16 %v304
      %v394 = vunpack.c.l.b16 %v305
      %v395 = vunpack.c.l.b16 %v306
      %v396 = vunpack.c.h.b16 %v306
      %v397 = vunpack.c.l.b16 %v307
      %v398 = vunpack.c.l.b16 %v308
      %v399 = vunpack.c.h.b16 %v308
      %v400 = vunpack.c.l.b16 %v309
      %v401 = vunpack.c.l.b16 %v310
      %v402 = vunpack.c.h.b16 %v310
      %v403 = vunpack.c.l.b16 %v311
      %v404 = vunpack.c.l.b16 %v312
      %v405 = vunpack.c.h.b16 %v312
      %v406 = vunpack.c.l.b16 %v313
      %v407 = vunpack.c.l.b16 %v314
      %v408 = vunpack.c.h.b16 %v314
      %v409 = vunpack.c.l.b16 %v315
      %v410 = vunpack.c.l.b16 %v316
      %v411 = vunpack.c.h.b16 %v316
      %v412 = vunpack.c.l.b16 %v317
      %v413 = vunpack.c.l.b16 %v318
      %v414 = vunpack.c.h.b16 %v318
      %v415 = vunpack.c.l.b16 %v319
      %v416 = vpack.c.b16 %v371, %v368
      %v417 = vpack.c.b16 %v372, %v369
      %v418 = vpack.c.b16 %v373, %v370
      %v419 = vpack.c.b16 %v377, %v374
      %v420 = vpack.c.b16 %v378, %v375
      %v421 = vpack.c.b16 %v379, %v376
      %v422 = vpack.c.b16 %v383, %v380
      %v423 = vpack.c.b16 %v384, %v381
      %v424 = vpack.c.b16 %v385, %v382
      %v425 = vpack.c.b16 %v389, %v386
      %v426 = vpack.c.b16 %v390, %v387
      %v427 = vpack.c.b16 %v391, %v388
      %v428 = vpack.c.b16 %v395, %v392
      %v429 = vpack.c.b16 %v396, %v393
      %v430 = vpack.c.b16 %v397, %v394
      %v431 = vpack.c.b16 %v401, %v398
      %v432 = vpack.c.b16 %v402, %v399
      %v433 = vpack.c.b16 %v403, %v400
      %v434 = vpack.c.b16 %v407, %v404
      %v435 = vpack.c.b16 %v408, %v405
      %v436 = vpack.c.b16 %v409, %v406
      %v437 = vpack.c.b16 %v413, %v410
      %v438 = vpack.c.b16 %v414, %v411
      %v439 = vpack.c.b16 %v415, %v412
      %464 = vmatprep.subr.bf16.mxu0 %v417
      %465 = vmatpush1.bf16.msra.mxu0 %v416
      %466 = vmatprep.subr.bf16.mxu0 %v420
      %467 = vmatpush1.bf16.msra.mxu0 %v419
      %468 = vmatprep.subr.bf16.mxu0 %v423
      %469 = vmatpush1.bf16.msra.mxu0 %v422
      %470 = vmatprep.subr.bf16.mxu0 %v426
      %471 = vmatpush1.bf16.msra.mxu0 %v425
      %472 = vmatprep.subr.bf16.mxu0 %v429
      %473 = vmatpush1.bf16.msra.mxu0 %v428
      %474 = vmatprep.subr.bf16.mxu0 %v432
      %475 = vmatpush1.bf16.msra.mxu0 %v431
      %476 = vmatprep.subr.bf16.mxu0 %v435
      %477 = vmatpush1.bf16.msra.mxu0 %v434
      %478 = vmatprep.subr.bf16.mxu0 %v438
      %479 = vmatpush1.bf16.msra.mxu0 %v437
      %480 = vmatprep.subr.bf16.mxu0 0
      %481 = vmatpush1.bf16.msra.mxu0 0
      %482 = vmatprep.subr.bf16.mxu0 0
      %483 = vmatpush1.bf16.msra.mxu0 0
      %484 = vmatprep.subr.bf16.mxu0 0
      %485 = vmatpush1.bf16.msra.mxu0 0
      %486 = vmatprep.subr.bf16.mxu0 0
      %487 = vmatpush1.bf16.msra.mxu0 0
      %488 = vmatprep.subr.bf16.mxu0 0
      %489 = vmatpush1.bf16.msra.mxu0 0
      %490 = vmatprep.subr.bf16.mxu0 0
      %491 = vmatpush1.bf16.msra.mxu0 0
      %492 = vmatprep.subr.bf16.mxu0 0
      %493 = vmatpush1.bf16.msra.mxu0 0
      %494 = vmatprep.subr.bf16.mxu0 0
      %495 = vmatpush1.bf16.msra.mxu0 0
      %496 = vmatprep.mubr.bf16.mxu0 0
      %497 = vmatmul.mubr.bf16.gmra.mrb[0].mxu0 %v320
      %v498 = vpop.f32.mrb[0].mxu0
      %v499 = vadd.f32 0.0, %v498
      %v500 = vpop.f32.mrb[0].mxu0
      %v501 = vadd.f32 0.0, %v500
      %v502 = vpop.f32.mrb[0].mxu0
      %v503 = vadd.f32 0.0, %v502
      %v504 = vpop.f32.mrb[0].mxu0
      %v505 = vadd.f32 0.0, %v504
      %506 = vmatprep.mubr.bf16.mxu0 0
      %507 = vmatmul.mubr.bf16.gmra.mrb[0].mxu0 %v321
      %v508 = vpop.f32.mrb[0].mxu0
      %v509 = vadd.f32 0.0, %v508
      %v510 = vpop.f32.mrb[0].mxu0
      %v511 = vadd.f32 0.0, %v510
      %v512 = vpop.f32.mrb[0].mxu0
      %v513 = vadd.f32 0.0, %v512
      %v514 = vpop.f32.mrb[0].mxu0
      %v515 = vadd.f32 0.0, %v514
      %516 = vmatprep.mubr.bf16.mxu0 0
      %517 = vmatmul.mubr.bf16.gmra.mrb[0].mxu0 %v322
      %v518 = vpop.f32.mrb[0].mxu0
      %v519 = vadd.f32 0.0, %v518
      %v520 = vpop.f32.mrb[0].mxu0
      %v521 = vadd.f32 0.0, %v520
      %v522 = vpop.f32.mrb[0].mxu0
      %v523 = vadd.f32 0.0, %v522
      %v524 = vpop.f32.mrb[0].mxu0
      %v525 = vadd.f32 0.0, %v524
      %526 = vmatprep.mubr.bf16.mxu0 0
      %527 = vmatmul.mubr.bf16.gmra.mrb[0].mxu0 %v323
      %v528 = vpop.f32.mrb[0].mxu0
      %v529 = vadd.f32 0.0, %v528
      %v530 = vpop.f32.mrb[0].mxu0
      %v531 = vadd.f32 0.0, %v530
      %v532 = vpop.f32.mrb[0].mxu0
      %v533 = vadd.f32 0.0, %v532
      %v534 = vpop.f32.mrb[0].mxu0
      %v535 = vadd.f32 0.0, %v534
      %536 = vmatprep.mubr.bf16.mxu0 0
      %537 = vmatmul.mubr.bf16.gmra.mrb[0].mxu0 %v324
      %v538 = vpop.f32.mrb[0].mxu0
      %v539 = vadd.f32 0.0, %v538
      %v540 = vpop.f32.mrb[0].mxu0
      %v541 = vadd.f32 0.0, %v540
      %v542 = vpop.f32.mrb[0].mxu0
      %v543 = vadd.f32 0.0, %v542
      %v544 = vpop.f32.mrb[0].mxu0
      %v545 = vadd.f32 0.0, %v544
      %546 = vmatprep.mubr.bf16.mxu0 0
      %547 = vmatmul.mubr.bf16.gmra.mrb[0].mxu0 %v325
      %v548 = vpop.f32.mrb[0].mxu0
      %v549 = vadd.f32 0.0, %v548
      %v550 = vpop.f32.mrb[0].mxu0
      %v551 = vadd.f32 0.0, %v550
      %v552 = vpop.f32.mrb[0].mxu0
      %v553 = vadd.f32 0.0, %v552
      %v554 = vpop.f32.mrb[0].mxu0
      %v555 = vadd.f32 0.0, %v554
      %556 = vmatprep.mubr.bf16.mxu0 0
      %557 = vmatmul.mubr.bf16.gmra.mrb[0].mxu0 %v326
      %v558 = vpop.f32.mrb[0].mxu0
      %v559 = vadd.f32 0.0, %v558
      %v560 = vpop.f32.mrb[0].mxu0
      %v561 = vadd.f32 0.0, %v560
      %v562 = vpop.f32.mrb[0].mxu0
      %v563 = vadd.f32 0.0, %v562
      %v564 = vpop.f32.mrb[0].mxu0
      %v565 = vadd.f32 0.0, %v564
      %566 = vmatprep.mubr.bf16.mxu0 0
      %567 = vmatmul.mubr.bf16.gmra.mrb[0].mxu0 %v327
      %v568 = vpop.f32.mrb[0].mxu0
      %v569 = vadd.f32 0.0, %v568
      %v570 = vpop.f32.mrb[0].mxu0
      %v571 = vadd.f32 0.0, %v570
      %v572 = vpop.f32.mrb[0].mxu0
      %v573 = vadd.f32 0.0, %v572
      %v574 = vpop.f32.mrb[0].mxu0
      %v575 = vadd.f32 0.0, %v574
      %576 = vmatprep.mubr.bf16.mxu0 0
      %577 = vmatmul.mubr.bf16.gmra.mrb[0].mxu0 %v328
      %v578 = vpop.f32.mrb[0].mxu0
      %v579 = vadd.f32 0.0, %v578
      %v580 = vpop.f32.mrb[0].mxu0
      %v581 = vadd.f32 0.0, %v580
      %v582 = vpop.f32.mrb[0].mxu0
      %v583 = vadd.f32 0.0, %v582
      %v584 = vpop.f32.mrb[0].mxu0
      %v585 = vadd.f32 0.0, %v584
      %586 = vmatprep.mubr.bf16.mxu0 0
      %587 = vmatmul.mubr.bf16.gmra.mrb[0].mxu0 %v329
      %v588 = vpop.f32.mrb[0].mxu0
      %v589 = vadd.f32 0.0, %v588
      %v590 = vpop.f32.mrb[0].mxu0
      %v591 = vadd.f32 0.0, %v590
      %v592 = vpop.f32.mrb[0].mxu0
      %v593 = vadd.f32 0.0, %v592
      %v594 = vpop.f32.mrb[0].mxu0
      %v595 = vadd.f32 0.0, %v594
      %596 = vmatprep.mubr.bf16.mxu0 0
      %597 = vmatmul.mubr.bf16.gmra.mrb[0].mxu0 %v330
      %v598 = vpop.f32.mrb[0].mxu0
      %v599 = vadd.f32 0.0, %v598
      %v600 = vpop.f32.mrb[0].mxu0
      %v601 = vadd.f32 0.0, %v600
      %v602 = vpop.f32.mrb[0].mxu0
      %v603 = vadd.f32 0.0, %v602
      %v604 = vpop.f32.mrb[0].mxu0
      %v605 = vadd.f32 0.0, %v604
      %606 = vmatprep.mubr.bf16.mxu0 0
      %607 = vmatmul.mubr.bf16.gmra.mrb[0].mxu0 %v331
      %v608 = vpop.f32.mrb[0].mxu0
      %v609 = vadd.f32 0.0, %v608
      %v610 = vpop.f32.mrb[0].mxu0
      %v611 = vadd.f32 0.0, %v610
      %v612 = vpop.f32.mrb[0].mxu0
      %v613 = vadd.f32 0.0, %v612
      %v614 = vpop.f32.mrb[0].mxu0
      %v615 = vadd.f32 0.0, %v614
      %616 = vmatprep.mubr.bf16.mxu0 0
      %617 = vmatmul.mubr.bf16.gmra.mrb[0].mxu0 %v332
      %v618 = vpop.f32.mrb[0].mxu0
      %v619 = vadd.f32 0.0, %v618
      %v620 = vpop.f32.mrb[0].mxu0
      %v621 = vadd.f32 0.0, %v620
      %v622 = vpop.f32.mrb[0].mxu0
      %v623 = vadd.f32 0.0, %v622
      %v624 = vpop.f32.mrb[0].mxu0
      %v625 = vadd.f32 0.0, %v624
      %626 = vmatprep.mubr.bf16.mxu0 0
      %627 = vmatmul.mubr.bf16.gmra.mrb[0].mxu0 %v333
      %v628 = vpop.f32.mrb[0].mxu0
      %v629 = vadd.f32 0.0, %v628
      %v630 = vpop.f32.mrb[0].mxu0
      %v631 = vadd.f32 0.0, %v630
      %v632 = vpop.f32.mrb[0].mxu0
      %v633 = vadd.f32 0.0, %v632
      %v634 = vpop.f32.mrb[0].mxu0
      %v635 = vadd.f32 0.0, %v634
      %636 = vmatprep.mubr.bf16.mxu0 0
      %637 = vmatmul.mubr.bf16.gmra.mrb[0].mxu0 %v334
      %v638 = vpop.f32.mrb[0].mxu0
      %v639 = vadd.f32 0.0, %v638
      %v640 = vpop.f32.mrb[0].mxu0
      %v641 = vadd.f32 0.0, %v640
      %v642 = vpop.f32.mrb[0].mxu0
      %v643 = vadd.f32 0.0, %v642
      %v644 = vpop.f32.mrb[0].mxu0
      %v645 = vadd.f32 0.0, %v644
      %646 = vmatprep.mubr.bf16.mxu0 0
      %647 = vmatmul.mubr.bf16.gmra.mrb[0].mxu0 %v335
      %v648 = vpop.f32.mrb[0].mxu0
      %v649 = vadd.f32 0.0, %v648
      %v650 = vpop.f32.mrb[0].mxu0
      %v651 = vadd.f32 0.0, %v650
      %v652 = vpop.f32.mrb[0].mxu0
      %v653 = vadd.f32 0.0, %v652
      %v654 = vpop.f32.mrb[0].mxu0
      %v655 = vadd.f32 0.0, %v654
      %656 = vdwg.mxu0
      %657 = vmatprep.subr.bf16.mxu0 0
      %658 = vmatpush1.bf16.msra.mxu0 %v418
      %659 = vmatprep.subr.bf16.mxu0 0
      %660 = vmatpush1.bf16.msra.mxu0 %v421
      %661 = vmatprep.subr.bf16.mxu0 0
      %662 = vmatpush1.bf16.msra.mxu0 %v424
      %663 = vmatprep.subr.bf16.mxu0 0
      %664 = vmatpush1.bf16.msra.mxu0 %v427
      %665 = vmatprep.subr.bf16.mxu0 0
      %666 = vmatpush1.bf16.msra.mxu0 %v430
      %667 = vmatprep.subr.bf16.mxu0 0
      %668 = vmatpush1.bf16.msra.mxu0 %v433
      %669 = vmatprep.subr.bf16.mxu0 0
      %670 = vmatpush1.bf16.msra.mxu0 %v436
      %671 = vmatprep.subr.bf16.mxu0 0
      %672 = vmatpush1.bf16.msra.mxu0 %v439
      %673 = vmatprep.subr.bf16.mxu0 0
      %674 = vmatpush1.bf16.msra.mxu0 0
      %675 = vmatprep.subr.bf16.mxu0 0
      %676 = vmatpush1.bf16.msra.mxu0 0
      %677 = vmatprep.subr.bf16.mxu0 0
      %678 = vmatpush1.bf16.msra.mxu0 0
      %679 = vmatprep.subr.bf16.mxu0 0
      %680 = vmatpush1.bf16.msra.mxu0 0
      %681 = vmatprep.subr.bf16.mxu0 0
      %682 = vmatpush1.bf16.msra.mxu0 0
      %683 = vmatprep.subr.bf16.mxu0 0
      %684 = vmatpush1.bf16.msra.mxu0 0
      %685 = vmatprep.subr.bf16.mxu0 0
      %686 = vmatpush1.bf16.msra.mxu0 0
      %687 = vmatprep.subr.bf16.mxu0 0
      %688 = vmatpush1.bf16.msra.mxu0 0
      %689 = vmatprep.mubr.bf16.mxu0 0
      %690 = vmatmul.mubr.bf16.gmra.mrb[0].mxu0 %v320
      %v691 = vpop.f32.mrb[0].mxu0
      %v692 = vadd.f32 0.0, %v691
      %v693 = vpop.f32.mrb[0].mxu0
      %v694 = vpop.f32.mrb[0].mxu0
      %v695 = vadd.f32 0.0, %v694
      %v696 = vpop.f32.mrb[0].mxu0
      %697 = vmatprep.mubr.bf16.mxu0 0
      %698 = vmatmul.mubr.bf16.gmra.mrb[0].mxu0 %v321
      %v699 = vpop.f32.mrb[0].mxu0
      %v700 = vadd.f32 0.0, %v699
      %v701 = vpop.f32.mrb[0].mxu0
      %v702 = vpop.f32.mrb[0].mxu0
      %v703 = vadd.f32 0.0, %v702
      %v704 = vpop.f32.mrb[0].mxu0
      %705 = vmatprep.mubr.bf16.mxu0 0
      %706 = vmatmul.mubr.bf16.gmra.mrb[0].mxu0 %v322
      %v707 = vpop.f32.mrb[0].mxu0
      %v708 = vadd.f32 0.0, %v707
      %v709 = vpop.f32.mrb[0].mxu0
      %v710 = vpop.f32.mrb[0].mxu0
      %v711 = vadd.f32 0.0, %v710
      %v712 = vpop.f32.mrb[0].mxu0
      %713 = vmatprep.mubr.bf16.mxu0 0
      %714 = vmatmul.mubr.bf16.gmra.mrb[0].mxu0 %v323
      %v715 = vpop.f32.mrb[0].mxu0
      %v716 = vadd.f32 0.0, %v715
      %v717 = vpop.f32.mrb[0].mxu0
      %v718 = vpop.f32.mrb[0].mxu0
      %v719 = vadd.f32 0.0, %v718
      %v720 = vpop.f32.mrb[0].mxu0
      %721 = vmatprep.mubr.bf16.mxu0 0
      %722 = vmatmul.mubr.bf16.gmra.mrb[0].mxu0 %v324
      %v723 = vpop.f32.mrb[0].mxu0
      %v724 = vadd.f32 0.0, %v723
      %v725 = vpop.f32.mrb[0].mxu0
      %v726 = vpop.f32.mrb[0].mxu0
      %v727 = vadd.f32 0.0, %v726
      %v728 = vpop.f32.mrb[0].mxu0
      %729 = vmatprep.mubr.bf16.mxu0 0
      %730 = vmatmul.mubr.bf16.gmra.mrb[0].mxu0 %v325
      %v731 = vpop.f32.mrb[0].mxu0
      %v732 = vadd.f32 0.0, %v731
      %v733 = vpop.f32.mrb[0].mxu0
      %v734 = vpop.f32.mrb[0].mxu0
      %v735 = vadd.f32 0.0, %v734
      %v736 = vpop.f32.mrb[0].mxu0
      %737 = vmatprep.mubr.bf16.mxu0 0
      %738 = vmatmul.mubr.bf16.gmra.mrb[0].mxu0 %v326
      %v739 = vpop.f32.mrb[0].mxu0
      %v740 = vadd.f32 0.0, %v739
      %v741 = vpop.f32.mrb[0].mxu0
      %v742 = vpop.f32.mrb[0].mxu0
      %v743 = vadd.f32 0.0, %v742
      %v744 = vpop.f32.mrb[0].mxu0
      %745 = vmatprep.mubr.bf16.mxu0 0
      %746 = vmatmul.mubr.bf16.gmra.mrb[0].mxu0 %v327
      %v747 = vpop.f32.mrb[0].mxu0
      %v748 = vadd.f32 0.0, %v747
      %v749 = vpop.f32.mrb[0].mxu0
      %v750 = vpop.f32.mrb[0].mxu0
      %v751 = vadd.f32 0.0, %v750
      %v752 = vpop.f32.mrb[0].mxu0
      %753 = vmatprep.mubr.bf16.mxu0 0
      %754 = vmatmul.mubr.bf16.gmra.mrb[0].mxu0 %v328
      %v755 = vpop.f32.mrb[0].mxu0
      %v756 = vadd.f32 0.0, %v755
      %v757 = vpop.f32.mrb[0].mxu0
      %v758 = vpop.f32.mrb[0].mxu0
      %v759 = vadd.f32 0.0, %v758
      %v760 = vpop.f32.mrb[0].mxu0
      %761 = vmatprep.mubr.bf16.mxu0 0
      %762 = vmatmul.mubr.bf16.gmra.mrb[0].mxu0 %v329
      %v763 = vpop.f32.mrb[0].mxu0
      %v764 = vadd.f32 0.0, %v763
      %v765 = vpop.f32.mrb[0].mxu0
      %v766 = vpop.f32.mrb[0].mxu0
      %v767 = vadd.f32 0.0, %v766
      %v768 = vpop.f32.mrb[0].mxu0
      %769 = vmatprep.mubr.bf16.mxu0 0
      %770 = vmatmul.mubr.bf16.gmra.mrb[0].mxu0 %v330
      %v771 = vpop.f32.mrb[0].mxu0
      %v772 = vadd.f32 0.0, %v771
      %v773 = vpop.f32.mrb[0].mxu0
      %v774 = vpop.f32.mrb[0].mxu0
      %v775 = vadd.f32 0.0, %v774
      %v776 = vpop.f32.mrb[0].mxu0
      %777 = vmatprep.mubr.bf16.mxu0 0
      %778 = vmatmul.mubr.bf16.gmra.mrb[0].mxu0 %v331
      %v779 = vpop.f32.mrb[0].mxu0
      %v780 = vadd.f32 0.0, %v779
      %v781 = vpop.f32.mrb[0].mxu0
      %v782 = vpop.f32.mrb[0].mxu0
      %v783 = vadd.f32 0.0, %v782
      %v784 = vpop.f32.mrb[0].mxu0
      %785 = vmatprep.mubr.bf16.mxu0 0
      %786 = vmatmul.mubr.bf16.gmra.mrb[0].mxu0 %v332
      %v787 = vpop.f32.mrb[0].mxu0
      %v788 = vadd.f32 0.0, %v787
      %v789 = vpop.f32.mrb[0].mxu0
      %v790 = vpop.f32.mrb[0].mxu0
      %v791 = vadd.f32 0.0, %v790
      %v792 = vpop.f32.mrb[0].mxu0
      %793 = vmatprep.mubr.bf16.mxu0 0
      %794 = vmatmul.mubr.bf16.gmra.mrb[0].mxu0 %v333
      %v795 = vpop.f32.mrb[0].mxu0
      %v796 = vadd.f32 0.0, %v795
      %v797 = vpop.f32.mrb[0].mxu0
      %v798 = vpop.f32.mrb[0].mxu0
      %v799 = vadd.f32 0.0, %v798
      %v800 = vpop.f32.mrb[0].mxu0
      %801 = vmatprep.mubr.bf16.mxu0 0
      %802 = vmatmul.mubr.bf16.gmra.mrb[0].mxu0 %v334
      %v803 = vpop.f32.mrb[0].mxu0
      %v804 = vadd.f32 0.0, %v803
      %v805 = vpop.f32.mrb[0].mxu0
      %v806 = vpop.f32.mrb[0].mxu0
      %v807 = vadd.f32 0.0, %v806
      %v808 = vpop.f32.mrb[0].mxu0
      %809 = vmatprep.mubr.bf16.mxu0 0
      %810 = vmatmul.mubr.bf16.gmra.mrb[0].mxu0 %v335
      %v811 = vpop.f32.mrb[0].mxu0
      %v812 = vadd.f32 0.0, %v811
      %v813 = vpop.f32.mrb[0].mxu0
      %v814 = vpop.f32.mrb[0].mxu0
      %v815 = vadd.f32 0.0, %v814
      %v816 = vpop.f32.mrb[0].mxu0
      %817 = vdwg.mxu0
      %v818 = vld [vmem:[%s2 + $0x1] ss:$0 sm:$0xff]
      %v819 = vadd.f32 %v499, %v818
      %v820 = vadd.f32 %v503, %v818
      %v821 = vadd.f32 %v509, %v818
      %v822 = vadd.f32 %v513, %v818
      %v823 = vadd.f32 %v519, %v818
      %v824 = vadd.f32 %v523, %v818
      %v825 = vadd.f32 %v529, %v818
      %v826 = vadd.f32 %v533, %v818
      %v827 = vadd.f32 %v539, %v818
      %v828 = vadd.f32 %v543, %v818
      %v829 = vadd.f32 %v549, %v818
      %v830 = vadd.f32 %v553, %v818
      %v831 = vadd.f32 %v559, %v818
      %v832 = vadd.f32 %v563, %v818
      %v833 = vadd.f32 %v569, %v818
      %v834 = vadd.f32 %v573, %v818
      %v835 = vadd.f32 %v579, %v818
      %v836 = vadd.f32 %v583, %v818
      %v837 = vadd.f32 %v589, %v818
      %v838 = vadd.f32 %v593, %v818
      %v839 = vadd.f32 %v599, %v818
      %v840 = vadd.f32 %v603, %v818
      %v841 = vadd.f32 %v609, %v818
      %v842 = vadd.f32 %v613, %v818
      %v843 = vadd.f32 %v619, %v818
      %v844 = vadd.f32 %v623, %v818
      %v845 = vadd.f32 %v629, %v818
      %v846 = vadd.f32 %v633, %v818
      %v847 = vadd.f32 %v639, %v818
      %v848 = vadd.f32 %v643, %v818
      %v849 = vadd.f32 %v649, %v818
      %v850 = vadd.f32 %v653, %v818
      %vm851 = vcmp.gt.f32.partialorder %v819, 0.0
      %vm852 = vcmp.gt.f32.partialorder %v820, 0.0
      %vm853 = vcmp.gt.f32.partialorder %v821, 0.0
      %vm854 = vcmp.gt.f32.partialorder %v822, 0.0
      %vm855 = vcmp.gt.f32.partialorder %v823, 0.0
      %vm856 = vcmp.gt.f32.partialorder %v824, 0.0
      %vm857 = vcmp.gt.f32.partialorder %v825, 0.0
      %vm858 = vcmp.gt.f32.partialorder %v826, 0.0
      %vm859 = vcmp.gt.f32.partialorder %v827, 0.0
      %vm860 = vcmp.gt.f32.partialorder %v828, 0.0
      %vm861 = vcmp.gt.f32.partialorder %v829, 0.0
      %vm862 = vcmp.gt.f32.partialorder %v830, 0.0
      %vm863 = vcmp.gt.f32.partialorder %v831, 0.0
      %vm864 = vcmp.gt.f32.partialorder %v832, 0.0
      %vm865 = vcmp.gt.f32.partialorder %v833, 0.0
      %vm866 = vcmp.gt.f32.partialorder %v834, 0.0
      %vm867 = vcmp.gt.f32.partialorder %v835, 0.0
      %vm868 = vcmp.gt.f32.partialorder %v836, 0.0
      %vm869 = vcmp.gt.f32.partialorder %v837, 0.0
      %vm870 = vcmp.gt.f32.partialorder %v838, 0.0
      %vm871 = vcmp.gt.f32.partialorder %v839, 0.0
      %vm872 = vcmp.gt.f32.partialorder %v840, 0.0
      %vm873 = vcmp.gt.f32.partialorder %v841, 0.0
      %vm874 = vcmp.gt.f32.partialorder %v842, 0.0
      %vm875 = vcmp.gt.f32.partialorder %v843, 0.0
      %vm876 = vcmp.gt.f32.partialorder %v844, 0.0
      %vm877 = vcmp.gt.f32.partialorder %v845, 0.0
      %vm878 = vcmp.gt.f32.partialorder %v846, 0.0
      %vm879 = vcmp.gt.f32.partialorder %v847, 0.0
      %vm880 = vcmp.gt.f32.partialorder %v848, 0.0
      %vm881 = vcmp.gt.f32.partialorder %v849, 0.0
      %vm882 = vcmp.gt.f32.partialorder %v850, 0.0
      %v883 = vmul.f32 %v819, 0.01
      %v884 = vmul.f32 %v820, 0.01
      %v885 = vmul.f32 %v821, 0.01
      %v886 = vmul.f32 %v822, 0.01
      %v887 = vmul.f32 %v823, 0.01
      %v888 = vmul.f32 %v824, 0.01
      %v889 = vmul.f32 %v825, 0.01
      %v890 = vmul.f32 %v826, 0.01
      %v891 = vmul.f32 %v827, 0.01
      %v892 = vmul.f32 %v828, 0.01
      %v893 = vmul.f32 %v829, 0.01
      %v894 = vmul.f32 %v830, 0.01
      %v895 = vmul.f32 %v831, 0.01
      %v896 = vmul.f32 %v832, 0.01
      %v897 = vmul.f32 %v833, 0.01
      %v898 = vmul.f32 %v834, 0.01
      %v899 = vmul.f32 %v835, 0.01
      %v900 = vmul.f32 %v836, 0.01
      %v901 = vmul.f32 %v837, 0.01
      %v902 = vmul.f32 %v838, 0.01
      %v903 = vmul.f32 %v839, 0.01
      %v904 = vmul.f32 %v840, 0.01
      %v905 = vmul.f32 %v841, 0.01
      %v906 = vmul.f32 %v842, 0.01
      %v907 = vmul.f32 %v843, 0.01
      %v908 = vmul.f32 %v844, 0.01
      %v909 = vmul.f32 %v845, 0.01
      %v910 = vmul.f32 %v846, 0.01
      %v911 = vmul.f32 %v847, 0.01
      %v912 = vmul.f32 %v848, 0.01
      %v913 = vmul.f32 %v849, 0.01
      %v914 = vmul.f32 %v850, 0.01
      %v915 = vsel %vm851, %v819, %v883
      %v916 = vsel %vm852, %v820, %v884
      %v917 = vsel %vm853, %v821, %v885
      %v918 = vsel %vm854, %v822, %v886
      %v919 = vsel %vm855, %v823, %v887
      %v920 = vsel %vm856, %v824, %v888
      %v921 = vsel %vm857, %v825, %v889
      %v922 = vsel %vm858, %v826, %v890
      %v923 = vsel %vm859, %v827, %v891
      %v924 = vsel %vm860, %v828, %v892
      %v925 = vsel %vm861, %v829, %v893
      %v926 = vsel %vm862, %v830, %v894
      %v927 = vsel %vm863, %v831, %v895
      %v928 = vsel %vm864, %v832, %v896
      %v929 = vsel %vm865, %v833, %v897
      %v930 = vsel %vm866, %v834, %v898
      %v931 = vsel %vm867, %v835, %v899
      %v932 = vsel %vm868, %v836, %v900
      %v933 = vsel %vm869, %v837, %v901
      %v934 = vsel %vm870, %v838, %v902
      %v935 = vsel %vm871, %v839, %v903
      %v936 = vsel %vm872, %v840, %v904
      %v937 = vsel %vm873, %v841, %v905
      %v938 = vsel %vm874, %v842, %v906
      %v939 = vsel %vm875, %v843, %v907
      %v940 = vsel %vm876, %v844, %v908
      %v941 = vsel %vm877, %v845, %v909
      %v942 = vsel %vm878, %v846, %v910
      %v943 = vsel %vm879, %v847, %v911
      %v944 = vsel %vm880, %v848, %v912
      %v945 = vsel %vm881, %v849, %v913
      %v946 = vsel %vm882, %v850, %v914
      %v947 = vld [vmem:[%s2 + $0x2] ss:$0 sm:$0xff]
      %v948 = vadd.f32 %v501, %v947
      %v949 = vadd.f32 %v505, %v947
      %v950 = vadd.f32 %v511, %v947
      %v951 = vadd.f32 %v515, %v947
      %v952 = vadd.f32 %v521, %v947
      %v953 = vadd.f32 %v525, %v947
      %v954 = vadd.f32 %v531, %v947
      %v955 = vadd.f32 %v535, %v947
      %v956 = vadd.f32 %v541, %v947
      %v957 = vadd.f32 %v545, %v947
      %v958 = vadd.f32 %v551, %v947
      %v959 = vadd.f32 %v555, %v947
      %v960 = vadd.f32 %v561, %v947
      %v961 = vadd.f32 %v565, %v947
      %v962 = vadd.f32 %v571, %v947
      %v963 = vadd.f32 %v575, %v947
      %v964 = vadd.f32 %v581, %v947
      %v965 = vadd.f32 %v585, %v947
      %v966 = vadd.f32 %v591, %v947
      %v967 = vadd.f32 %v595, %v947
      %v968 = vadd.f32 %v601, %v947
      %v969 = vadd.f32 %v605, %v947
      %v970 = vadd.f32 %v611, %v947
      %v971 = vadd.f32 %v615, %v947
      %v972 = vadd.f32 %v621, %v947
      %v973 = vadd.f32 %v625, %v947
      %v974 = vadd.f32 %v631, %v947
      %v975 = vadd.f32 %v635, %v947
      %v976 = vadd.f32 %v641, %v947
      %v977 = vadd.f32 %v645, %v947
      %v978 = vadd.f32 %v651, %v947
      %v979 = vadd.f32 %v655, %v947
      %v980 = vmax.f32 %v948, 0.0
      %v981 = vmax.f32 %v949, 0.0
      %v982 = vmax.f32 %v950, 0.0
      %v983 = vmax.f32 %v951, 0.0
      %v984 = vmax.f32 %v952, 0.0
      %v985 = vmax.f32 %v953, 0.0
      %v986 = vmax.f32 %v954, 0.0
      %v987 = vmax.f32 %v955, 0.0
      %v988 = vmax.f32 %v956, 0.0
      %v989 = vmax.f32 %v957, 0.0
      %v990 = vmax.f32 %v958, 0.0
      %v991 = vmax.f32 %v959, 0.0
      %v992 = vmax.f32 %v960, 0.0
      %v993 = vmax.f32 %v961, 0.0
      %v994 = vmax.f32 %v962, 0.0
      %v995 = vmax.f32 %v963, 0.0
      %v996 = vmax.f32 %v964, 0.0
      %v997 = vmax.f32 %v965, 0.0
      %v998 = vmax.f32 %v966, 0.0
      %v999 = vmax.f32 %v967, 0.0
      %v1000 = vmax.f32 %v968, 0.0
      %v1001 = vmax.f32 %v969, 0.0
      %v1002 = vmax.f32 %v970, 0.0
      %v1003 = vmax.f32 %v971, 0.0
      %v1004 = vmax.f32 %v972, 0.0
      %v1005 = vmax.f32 %v973, 0.0
      %v1006 = vmax.f32 %v974, 0.0
      %v1007 = vmax.f32 %v975, 0.0
      %v1008 = vmax.f32 %v976, 0.0
      %v1009 = vmax.f32 %v977, 0.0
      %v1010 = vmax.f32 %v978, 0.0
      %v1011 = vmax.f32 %v979, 0.0
      %v1012 = vld [vmem:[%s2] ss:$0 sm:$0xff]
      %v1013 = vadd.f32 %v692, %v1012
      %v1014 = vadd.f32 %v695, %v1012
      %v1015 = vadd.f32 %v700, %v1012
      %v1016 = vadd.f32 %v703, %v1012
      %v1017 = vadd.f32 %v708, %v1012
      %v1018 = vadd.f32 %v711, %v1012
      %v1019 = vadd.f32 %v716, %v1012
      %v1020 = vadd.f32 %v719, %v1012
      %v1021 = vadd.f32 %v724, %v1012
      %v1022 = vadd.f32 %v727, %v1012
      %v1023 = vadd.f32 %v732, %v1012
      %v1024 = vadd.f32 %v735, %v1012
      %v1025 = vadd.f32 %v740, %v1012
      %v1026 = vadd.f32 %v743, %v1012
      %v1027 = vadd.f32 %v748, %v1012
      %v1028 = vadd.f32 %v751, %v1012
      %v1029 = vadd.f32 %v756, %v1012
      %v1030 = vadd.f32 %v759, %v1012
      %v1031 = vadd.f32 %v764, %v1012
      %v1032 = vadd.f32 %v767, %v1012
      %v1033 = vadd.f32 %v772, %v1012
      %v1034 = vadd.f32 %v775, %v1012
      %v1035 = vadd.f32 %v780, %v1012
      %v1036 = vadd.f32 %v783, %v1012
      %v1037 = vadd.f32 %v788, %v1012
      %v1038 = vadd.f32 %v791, %v1012
      %v1039 = vadd.f32 %v796, %v1012
      %v1040 = vadd.f32 %v799, %v1012
      %v1041 = vadd.f32 %v804, %v1012
      %v1042 = vadd.f32 %v807, %v1012
      %v1043 = vadd.f32 %v812, %v1012
      %v1044 = vadd.f32 %v815, %v1012
      %vm1045 = vcmp.gt.f32.partialorder %v1013, 0.0
      %vm1046 = vcmp.gt.f32.partialorder %v1014, 0.0
      %vm1047 = vcmp.gt.f32.partialorder %v1015, 0.0
      %vm1048 = vcmp.gt.f32.partialorder %v1016, 0.0
      %vm1049 = vcmp.gt.f32.partialorder %v1017, 0.0
      %vm1050 = vcmp.gt.f32.partialorder %v1018, 0.0
      %vm1051 = vcmp.gt.f32.partialorder %v1019, 0.0
      %vm1052 = vcmp.gt.f32.partialorder %v1020, 0.0
      %vm1053 = vcmp.gt.f32.partialorder %v1021, 0.0
      %vm1054 = vcmp.gt.f32.partialorder %v1022, 0.0
      %vm1055 = vcmp.gt.f32.partialorder %v1023, 0.0
      %vm1056 = vcmp.gt.f32.partialorder %v1024, 0.0
      %vm1057 = vcmp.gt.f32.partialorder %v1025, 0.0
      %vm1058 = vcmp.gt.f32.partialorder %v1026, 0.0
      %vm1059 = vcmp.gt.f32.partialorder %v1027, 0.0
      %vm1060 = vcmp.gt.f32.partialorder %v1028, 0.0
      %vm1061 = vcmp.gt.f32.partialorder %v1029, 0.0
      %vm1062 = vcmp.gt.f32.partialorder %v1030, 0.0
      %vm1063 = vcmp.gt.f32.partialorder %v1031, 0.0
      %vm1064 = vcmp.gt.f32.partialorder %v1032, 0.0
      %vm1065 = vcmp.gt.f32.partialorder %v1033, 0.0
      %vm1066 = vcmp.gt.f32.partialorder %v1034, 0.0
      %vm1067 = vcmp.gt.f32.partialorder %v1035, 0.0
      %vm1068 = vcmp.gt.f32.partialorder %v1036, 0.0
      %vm1069 = vcmp.gt.f32.partialorder %v1037, 0.0
      %vm1070 = vcmp.gt.f32.partialorder %v1038, 0.0
      %vm1071 = vcmp.gt.f32.partialorder %v1039, 0.0
      %vm1072 = vcmp.gt.f32.partialorder %v1040, 0.0
      %vm1073 = vcmp.gt.f32.partialorder %v1041, 0.0
      %vm1074 = vcmp.gt.f32.partialorder %v1042, 0.0
      %vm1075 = vcmp.gt.f32.partialorder %v1043, 0.0
      %vm1076 = vcmp.gt.f32.partialorder %v1044, 0.0
      %v1077 = vmul.f32 %v1013, 0.01
      %v1078 = vmul.f32 %v1014, 0.01
      %v1079 = vmul.f32 %v1015, 0.01
      %v1080 = vmul.f32 %v1016, 0.01
      %v1081 = vmul.f32 %v1017, 0.01
      %v1082 = vmul.f32 %v1018, 0.01
      %v1083 = vmul.f32 %v1019, 0.01
      %v1084 = vmul.f32 %v1020, 0.01
      %v1085 = vmul.f32 %v1021, 0.01
      %v1086 = vmul.f32 %v1022, 0.01
      %v1087 = vmul.f32 %v1023, 0.01
      %v1088 = vmul.f32 %v1024, 0.01
      %v1089 = vmul.f32 %v1025, 0.01
      %v1090 = vmul.f32 %v1026, 0.01
      %v1091 = vmul.f32 %v1027, 0.01
      %v1092 = vmul.f32 %v1028, 0.01
      %v1093 = vmul.f32 %v1029, 0.01
      %v1094 = vmul.f32 %v1030, 0.01
      %v1095 = vmul.f32 %v1031, 0.01
      %v1096 = vmul.f32 %v1032, 0.01
      %v1097 = vmul.f32 %v1033, 0.01
      %v1098 = vmul.f32 %v1034, 0.01
      %v1099 = vmul.f32 %v1035, 0.01
      %v1100 = vmul.f32 %v1036, 0.01
      %v1101 = vmul.f32 %v1037, 0.01
      %v1102 = vmul.f32 %v1038, 0.01
      %v1103 = vmul.f32 %v1039, 0.01
      %v1104 = vmul.f32 %v1040, 0.01
      %v1105 = vmul.f32 %v1041, 0.01
      %v1106 = vmul.f32 %v1042, 0.01
      %v1107 = vmul.f32 %v1043, 0.01
      %v1108 = vmul.f32 %v1044, 0.01
      %v1109 = vsel %vm1045, %v1013, %v1077
      %v1110 = vsel %vm1046, %v1014, %v1078
      %v1111 = vsel %vm1047, %v1015, %v1079
      %v1112 = vsel %vm1048, %v1016, %v1080
      %v1113 = vsel %vm1049, %v1017, %v1081
      %v1114 = vsel %vm1050, %v1018, %v1082
      %v1115 = vsel %vm1051, %v1019, %v1083
      %v1116 = vsel %vm1052, %v1020, %v1084
      %v1117 = vsel %vm1053, %v1021, %v1085
      %v1118 = vsel %vm1054, %v1022, %v1086
      %v1119 = vsel %vm1055, %v1023, %v1087
      %v1120 = vsel %vm1056, %v1024, %v1088
      %v1121 = vsel %vm1057, %v1025, %v1089
      %v1122 = vsel %vm1058, %v1026, %v1090
      %v1123 = vsel %vm1059, %v1027, %v1091
      %v1124 = vsel %vm1060, %v1028, %v1092
      %v1125 = vsel %vm1061, %v1029, %v1093
      %v1126 = vsel %vm1062, %v1030, %v1094
      %v1127 = vsel %vm1063, %v1031, %v1095
      %v1128 = vsel %vm1064, %v1032, %v1096
      %v1129 = vsel %vm1065, %v1033, %v1097
      %v1130 = vsel %vm1066, %v1034, %v1098
      %v1131 = vsel %vm1067, %v1035, %v1099
      %v1132 = vsel %vm1068, %v1036, %v1100
      %v1133 = vsel %vm1069, %v1037, %v1101
      %v1134 = vsel %vm1070, %v1038, %v1102
      %v1135 = vsel %vm1071, %v1039, %v1103
      %v1136 = vsel %vm1072, %v1040, %v1104
      %v1137 = vsel %vm1073, %v1041, %v1105
      %v1138 = vsel %vm1074, %v1042, %v1106
      %v1139 = vsel %vm1075, %v1043, %v1107
      %v1140 = vsel %vm1076, %v1044, %v1108
      %v1141 = vld [vmem:[%s1] sm:$0xf]
      %v1142 = vld [vmem:[%s1 + $0x4] sm:$0xf]
      %v1143 = vld [vmem:[%s1 + $0x8] sm:$0xf]
      %v1144 = vld [vmem:[%s1 + $0xc] sm:$0xf]
      %v1145 = vld [vmem:[%s1 + $0x10] sm:$0xf]
      %v1146 = vld [vmem:[%s1 + $0x14] sm:$0xf]
      %v1147 = vld [vmem:[%s1 + $0x18] sm:$0xf]
      %v1148 = vld [vmem:[%s1 + $0x1c] sm:$0xf]
      %v1149 = vld [vmem:[%s1 + $0x20] sm:$0xf]
      %v1150 = vld [vmem:[%s1 + $0x24] sm:$0xf]
      %v1151 = vld [vmem:[%s1 + $0x28] sm:$0xf]
      %v1152 = vld [vmem:[%s1 + $0x2c] sm:$0xf]
      %v1153 = vld [vmem:[%s1 + $0x30] sm:$0xf]
      %v1154 = vld [vmem:[%s1 + $0x34] sm:$0xf]
      %v1155 = vld [vmem:[%s1 + $0x38] sm:$0xf]
      %v1156 = vld [vmem:[%s1 + $0x3c] sm:$0xf]
      %v1157 = vpack.c.bf16 %v981, %v980
      %v1158 = vpack.c.bf16 %v983, %v982
      %v1159 = vpack.c.bf16 %v985, %v984
      %v1160 = vpack.c.bf16 %v987, %v986
      %v1161 = vpack.c.bf16 %v989, %v988
      %v1162 = vpack.c.bf16 %v991, %v990
      %v1163 = vpack.c.bf16 %v993, %v992
      %v1164 = vpack.c.bf16 %v995, %v994
      %v1165 = vpack.c.bf16 %v997, %v996
      %v1166 = vpack.c.bf16 %v999, %v998
      %v1167 = vpack.c.bf16 %v1001, %v1000
      %v1168 = vpack.c.bf16 %v1003, %v1002
      %v1169 = vpack.c.bf16 %v1005, %v1004
      %v1170 = vpack.c.bf16 %v1007, %v1006
      %v1171 = vpack.c.bf16 %v1009, %v1008
      %v1172 = vpack.c.bf16 %v1011, %v1010
      %v1173 = vld [vmem:[%s2 + $0x3] ss:$0 sm:$0xff]
      %v1190 = vunpack.c.l.b16 %v1141
      %v1191 = vunpack.c.l.b16 %v1142
      %v1192 = vunpack.c.l.b16 %v1143
      %v1193 = vunpack.c.l.b16 %v1144
      %v1194 = vunpack.c.l.b16 %v1145
      %v1195 = vunpack.c.l.b16 %v1146
      %v1196 = vunpack.c.l.b16 %v1147
      %v1197 = vunpack.c.l.b16 %v1148
      %v1198 = vunpack.c.l.b16 %v1149
      %v1199 = vunpack.c.l.b16 %v1150
      %v1200 = vunpack.c.l.b16 %v1151
      %v1201 = vunpack.c.l.b16 %v1152
      %v1202 = vunpack.c.l.b16 %v1153
      %v1203 = vunpack.c.l.b16 %v1154
      %v1204 = vunpack.c.l.b16 %v1155
      %v1205 = vunpack.c.l.b16 %v1156
      %v1206 = vpack.c.b16 %v1191, %v1190
      %v1207 = vpack.c.b16 %v1193, %v1192
      %v1208 = vpack.c.b16 %v1195, %v1194
      %v1209 = vpack.c.b16 %v1197, %v1196
      %v1210 = vpack.c.b16 %v1199, %v1198
      %v1211 = vpack.c.b16 %v1201, %v1200
      %v1212 = vpack.c.b16 %v1203, %v1202
      %v1213 = vpack.c.b16 %v1205, %v1204
      %1222 = vmatprep.subr.bf16.mxu0 0
      %1223 = vmatpush1.bf16.msra.mxu0 %v1206
      %1224 = vmatprep.subr.bf16.mxu0 0
      %1225 = vmatpush1.bf16.msra.mxu0 %v1207
      %1226 = vmatprep.subr.bf16.mxu0 0
      %1227 = vmatpush1.bf16.msra.mxu0 %v1208
      %1228 = vmatprep.subr.bf16.mxu0 0
      %1229 = vmatpush1.bf16.msra.mxu0 %v1209
      %1230 = vmatprep.subr.bf16.mxu0 0
      %1231 = vmatpush1.bf16.msra.mxu0 %v1210
      %1232 = vmatprep.subr.bf16.mxu0 0
      %1233 = vmatpush1.bf16.msra.mxu0 %v1211
      %1234 = vmatprep.subr.bf16.mxu0 0
      %1235 = vmatpush1.bf16.msra.mxu0 %v1212
      %1236 = vmatprep.subr.bf16.mxu0 0
      %1237 = vmatpush1.bf16.msra.mxu0 %v1213
      %1238 = vmatprep.subr.bf16.mxu0 0
      %1239 = vmatpush1.bf16.msra.mxu0 0
      %1240 = vmatprep.subr.bf16.mxu0 0
      %1241 = vmatpush1.bf16.msra.mxu0 0
      %1242 = vmatprep.subr.bf16.mxu0 0
      %1243 = vmatpush1.bf16.msra.mxu0 0
      %1244 = vmatprep.subr.bf16.mxu0 0
      %1245 = vmatpush1.bf16.msra.mxu0 0
      %1246 = vmatprep.subr.bf16.mxu0 0
      %1247 = vmatpush1.bf16.msra.mxu0 0
      %1248 = vmatprep.subr.bf16.mxu0 0
      %1249 = vmatpush1.bf16.msra.mxu0 0
      %1250 = vmatprep.subr.bf16.mxu0 0
      %1251 = vmatpush1.bf16.msra.mxu0 0
      %1252 = vmatprep.subr.bf16.mxu0 0
      %1253 = vmatpush1.bf16.msra.mxu0 0
      %1254 = vmatprep.mubr.bf16.mxu0 0
      %1255 = vmatmul.mubr.bf16.gmra.mrb[0].mxu0 %v1157
      %v1256 = vpop.f32.mrb[0].mxu0
      %v1257 = vadd.f32 %v1173, %v1256
      %v1258 = vpop.f32.mrb[0].mxu0
      %v1259 = vpop.f32.mrb[0].mxu0
      %v1260 = vadd.f32 %v1173, %v1259
      %v1261 = vpop.f32.mrb[0].mxu0
      %1262 = vmatprep.mubr.bf16.mxu0 0
      %1263 = vmatmul.mubr.bf16.gmra.mrb[0].mxu0 %v1158
      %v1264 = vpop.f32.mrb[0].mxu0
      %v1265 = vadd.f32 %v1173, %v1264
      %v1266 = vpop.f32.mrb[0].mxu0
      %v1267 = vpop.f32.mrb[0].mxu0
      %v1268 = vadd.f32 %v1173, %v1267
      %v1269 = vpop.f32.mrb[0].mxu0
      %1270 = vmatprep.mubr.bf16.mxu0 0
      %1271 = vmatmul.mubr.bf16.gmra.mrb[0].mxu0 %v1159
      %v1272 = vpop.f32.mrb[0].mxu0
      %v1273 = vadd.f32 %v1173, %v1272
      %v1274 = vpop.f32.mrb[0].mxu0
      %v1275 = vpop.f32.mrb[0].mxu0
      %v1276 = vadd.f32 %v1173, %v1275
      %v1277 = vpop.f32.mrb[0].mxu0
      %1278 = vmatprep.mubr.bf16.mxu0 0
      %1279 = vmatmul.mubr.bf16.gmra.mrb[0].mxu0 %v1160
      %v1280 = vpop.f32.mrb[0].mxu0
      %v1281 = vadd.f32 %v1173, %v1280
      %v1282 = vpop.f32.mrb[0].mxu0
      %v1283 = vpop.f32.mrb[0].mxu0
      %v1284 = vadd.f32 %v1173, %v1283
      %v1285 = vpop.f32.mrb[0].mxu0
      %1286 = vmatprep.mubr.bf16.mxu0 0
      %1287 = vmatmul.mubr.bf16.gmra.mrb[0].mxu0 %v1161
      %v1288 = vpop.f32.mrb[0].mxu0
      %v1289 = vadd.f32 %v1173, %v1288
      %v1290 = vpop.f32.mrb[0].mxu0
      %v1291 = vpop.f32.mrb[0].mxu0
      %v1292 = vadd.f32 %v1173, %v1291
      %v1293 = vpop.f32.mrb[0].mxu0
      %1294 = vmatprep.mubr.bf16.mxu0 0
      %1295 = vmatmul.mubr.bf16.gmra.mrb[0].mxu0 %v1162
      %v1296 = vpop.f32.mrb[0].mxu0
      %v1297 = vadd.f32 %v1173, %v1296
      %v1298 = vpop.f32.mrb[0].mxu0
      %v1299 = vpop.f32.mrb[0].mxu0
      %v1300 = vadd.f32 %v1173, %v1299
      %v1301 = vpop.f32.mrb[0].mxu0
      %1302 = vmatprep.mubr.bf16.mxu0 0
      %1303 = vmatmul.mubr.bf16.gmra.mrb[0].mxu0 %v1163
      %v1304 = vpop.f32.mrb[0].mxu0
      %v1305 = vadd.f32 %v1173, %v1304
      %v1306 = vpop.f32.mrb[0].mxu0
      %v1307 = vpop.f32.mrb[0].mxu0
      %v1308 = vadd.f32 %v1173, %v1307
      %v1309 = vpop.f32.mrb[0].mxu0
      %1310 = vmatprep.mubr.bf16.mxu0 0
      %1311 = vmatmul.mubr.bf16.gmra.mrb[0].mxu0 %v1164
      %v1312 = vpop.f32.mrb[0].mxu0
      %v1313 = vadd.f32 %v1173, %v1312
      %v1314 = vpop.f32.mrb[0].mxu0
      %v1315 = vpop.f32.mrb[0].mxu0
      %v1316 = vadd.f32 %v1173, %v1315
      %v1317 = vpop.f32.mrb[0].mxu0
      %1318 = vmatprep.mubr.bf16.mxu0 0
      %1319 = vmatmul.mubr.bf16.gmra.mrb[0].mxu0 %v1165
      %v1320 = vpop.f32.mrb[0].mxu0
      %v1321 = vadd.f32 %v1173, %v1320
      %v1322 = vpop.f32.mrb[0].mxu0
      %v1323 = vpop.f32.mrb[0].mxu0
      %v1324 = vadd.f32 %v1173, %v1323
      %v1325 = vpop.f32.mrb[0].mxu0
      %1326 = vmatprep.mubr.bf16.mxu0 0
      %1327 = vmatmul.mubr.bf16.gmra.mrb[0].mxu0 %v1166
      %v1328 = vpop.f32.mrb[0].mxu0
      %v1329 = vadd.f32 %v1173, %v1328
      %v1330 = vpop.f32.mrb[0].mxu0
      %v1331 = vpop.f32.mrb[0].mxu0
      %v1332 = vadd.f32 %v1173, %v1331
      %v1333 = vpop.f32.mrb[0].mxu0
      %1334 = vmatprep.mubr.bf16.mxu0 0
      %1335 = vmatmul.mubr.bf16.gmra.mrb[0].mxu0 %v1167
      %v1336 = vpop.f32.mrb[0].mxu0
      %v1337 = vadd.f32 %v1173, %v1336
      %v1338 = vpop.f32.mrb[0].mxu0
      %v1339 = vpop.f32.mrb[0].mxu0
      %v1340 = vadd.f32 %v1173, %v1339
      %v1341 = vpop.f32.mrb[0].mxu0
      %1342 = vmatprep.mubr.bf16.mxu0 0
      %1343 = vmatmul.mubr.bf16.gmra.mrb[0].mxu0 %v1168
      %v1344 = vpop.f32.mrb[0].mxu0
      %v1345 = vadd.f32 %v1173, %v1344
      %v1346 = vpop.f32.mrb[0].mxu0
      %v1347 = vpop.f32.mrb[0].mxu0
      %v1348 = vadd.f32 %v1173, %v1347
      %v1349 = vpop.f32.mrb[0].mxu0
      %1350 = vmatprep.mubr.bf16.mxu0 0
      %1351 = vmatmul.mubr.bf16.gmra.mrb[0].mxu0 %v1169
      %v1352 = vpop.f32.mrb[0].mxu0
      %v1353 = vadd.f32 %v1173, %v1352
      %v1354 = vpop.f32.mrb[0].mxu0
      %v1355 = vpop.f32.mrb[0].mxu0
      %v1356 = vadd.f32 %v1173, %v1355
      %v1357 = vpop.f32.mrb[0].mxu0
      %1358 = vmatprep.mubr.bf16.mxu0 0
      %1359 = vmatmul.mubr.bf16.gmra.mrb[0].mxu0 %v1170
      %v1360 = vpop.f32.mrb[0].mxu0
      %v1361 = vadd.f32 %v1173, %v1360
      %v1362 = vpop.f32.mrb[0].mxu0
      %v1363 = vpop.f32.mrb[0].mxu0
      %v1364 = vadd.f32 %v1173, %v1363
      %v1365 = vpop.f32.mrb[0].mxu0
      %1366 = vmatprep.mubr.bf16.mxu0 0
      %1367 = vmatmul.mubr.bf16.gmra.mrb[0].mxu0 %v1171
      %v1368 = vpop.f32.mrb[0].mxu0
      %v1369 = vadd.f32 %v1173, %v1368
      %v1370 = vpop.f32.mrb[0].mxu0
      %v1371 = vpop.f32.mrb[0].mxu0
      %v1372 = vadd.f32 %v1173, %v1371
      %v1373 = vpop.f32.mrb[0].mxu0
      %1374 = vmatprep.mubr.bf16.mxu0 0
      %1375 = vmatmul.mubr.bf16.gmra.mrb[0].mxu0 %v1172
      %v1376 = vpop.f32.mrb[0].mxu0
      %v1377 = vadd.f32 %v1173, %v1376
      %v1378 = vpop.f32.mrb[0].mxu0
      %v1379 = vpop.f32.mrb[0].mxu0
      %v1380 = vadd.f32 %v1173, %v1379
      %v1381 = vpop.f32.mrb[0].mxu0
      %1382 = vdwg.mxu0
      %vm1383 = vcmp.gt.f32.partialorder %v1257, 0.0
      %vm1384 = vcmp.gt.f32.partialorder %v1260, 0.0
      %vm1385 = vcmp.gt.f32.partialorder %v1265, 0.0
      %vm1386 = vcmp.gt.f32.partialorder %v1268, 0.0
      %vm1387 = vcmp.gt.f32.partialorder %v1273, 0.0
      %vm1388 = vcmp.gt.f32.partialorder %v1276, 0.0
      %vm1389 = vcmp.gt.f32.partialorder %v1281, 0.0
      %vm1390 = vcmp.gt.f32.partialorder %v1284, 0.0
      %vm1391 = vcmp.gt.f32.partialorder %v1289, 0.0
      %vm1392 = vcmp.gt.f32.partialorder %v1292, 0.0
      %vm1393 = vcmp.gt.f32.partialorder %v1297, 0.0
      %vm1394 = vcmp.gt.f32.partialorder %v1300, 0.0
      %vm1395 = vcmp.gt.f32.partialorder %v1305, 0.0
      %vm1396 = vcmp.gt.f32.partialorder %v1308, 0.0
      %vm1397 = vcmp.gt.f32.partialorder %v1313, 0.0
      %vm1398 = vcmp.gt.f32.partialorder %v1316, 0.0
      %vm1399 = vcmp.gt.f32.partialorder %v1321, 0.0
      %vm1400 = vcmp.gt.f32.partialorder %v1324, 0.0
      %vm1401 = vcmp.gt.f32.partialorder %v1329, 0.0
      %vm1402 = vcmp.gt.f32.partialorder %v1332, 0.0
      %vm1403 = vcmp.gt.f32.partialorder %v1337, 0.0
      %vm1404 = vcmp.gt.f32.partialorder %v1340, 0.0
      %vm1405 = vcmp.gt.f32.partialorder %v1345, 0.0
      %vm1406 = vcmp.gt.f32.partialorder %v1348, 0.0
      %vm1407 = vcmp.gt.f32.partialorder %v1353, 0.0
      %vm1408 = vcmp.gt.f32.partialorder %v1356, 0.0
      %vm1409 = vcmp.gt.f32.partialorder %v1361, 0.0
      %vm1410 = vcmp.gt.f32.partialorder %v1364, 0.0
      %vm1411 = vcmp.gt.f32.partialorder %v1369, 0.0
      %vm1412 = vcmp.gt.f32.partialorder %v1372, 0.0
      %vm1413 = vcmp.gt.f32.partialorder %v1377, 0.0
      %vm1414 = vcmp.gt.f32.partialorder %v1380, 0.0
      %v1415 = vmul.f32 %v1257, 0.01
      %v1416 = vmul.f32 %v1260, 0.01
      %v1417 = vmul.f32 %v1265, 0.01
      %v1418 = vmul.f32 %v1268, 0.01
      %v1419 = vmul.f32 %v1273, 0.01
      %v1420 = vmul.f32 %v1276, 0.01
      %v1421 = vmul.f32 %v1281, 0.01
      %v1422 = vmul.f32 %v1284, 0.01
      %v1423 = vmul.f32 %v1289, 0.01
      %v1424 = vmul.f32 %v1292, 0.01
      %v1425 = vmul.f32 %v1297, 0.01
      %v1426 = vmul.f32 %v1300, 0.01
      %v1427 = vmul.f32 %v1305, 0.01
      %v1428 = vmul.f32 %v1308, 0.01
      %v1429 = vmul.f32 %v1313, 0.01
      %v1430 = vmul.f32 %v1316, 0.01
      %v1431 = vmul.f32 %v1321, 0.01
      %v1432 = vmul.f32 %v1324, 0.01
      %v1433 = vmul.f32 %v1329, 0.01
      %v1434 = vmul.f32 %v1332, 0.01
      %v1435 = vmul.f32 %v1337, 0.01
      %v1436 = vmul.f32 %v1340, 0.01
      %v1437 = vmul.f32 %v1345, 0.01
      %v1438 = vmul.f32 %v1348, 0.01
      %v1439 = vmul.f32 %v1353, 0.01
      %v1440 = vmul.f32 %v1356, 0.01
      %v1441 = vmul.f32 %v1361, 0.01
      %v1442 = vmul.f32 %v1364, 0.01
      %v1443 = vmul.f32 %v1369, 0.01
      %v1444 = vmul.f32 %v1372, 0.01
      %v1445 = vmul.f32 %v1377, 0.01
      %v1446 = vmul.f32 %v1380, 0.01
      %v1447 = vsel %vm1383, %v1257, %v1415
      %v1448 = vsel %vm1384, %v1260, %v1416
      %v1449 = vsel %vm1385, %v1265, %v1417
      %v1450 = vsel %vm1386, %v1268, %v1418
      %v1451 = vsel %vm1387, %v1273, %v1419
      %v1452 = vsel %vm1388, %v1276, %v1420
      %v1453 = vsel %vm1389, %v1281, %v1421
      %v1454 = vsel %vm1390, %v1284, %v1422
      %v1455 = vsel %vm1391, %v1289, %v1423
      %v1456 = vsel %vm1392, %v1292, %v1424
      %v1457 = vsel %vm1393, %v1297, %v1425
      %v1458 = vsel %vm1394, %v1300, %v1426
      %v1459 = vsel %vm1395, %v1305, %v1427
      %v1460 = vsel %vm1396, %v1308, %v1428
      %v1461 = vsel %vm1397, %v1313, %v1429
      %v1462 = vsel %vm1398, %v1316, %v1430
      %v1463 = vsel %vm1399, %v1321, %v1431
      %v1464 = vsel %vm1400, %v1324, %v1432
      %v1465 = vsel %vm1401, %v1329, %v1433
      %v1466 = vsel %vm1402, %v1332, %v1434
      %v1467 = vsel %vm1403, %v1337, %v1435
      %v1468 = vsel %vm1404, %v1340, %v1436
      %v1469 = vsel %vm1405, %v1345, %v1437
      %v1470 = vsel %vm1406, %v1348, %v1438
      %v1471 = vsel %vm1407, %v1353, %v1439
      %v1472 = vsel %vm1408, %v1356, %v1440
      %v1473 = vsel %vm1409, %v1361, %v1441
      %v1474 = vsel %vm1410, %v1364, %v1442
      %v1475 = vsel %vm1411, %v1369, %v1443
      %v1476 = vsel %vm1412, %v1372, %v1444
      %v1477 = vsel %vm1413, %v1377, %v1445
      %v1478 = vsel %vm1414, %v1380, %v1446
      %v1479 = vadd.f32 %v1109, %v1447
      %v1480 = vadd.f32 %v1110, %v1448
      %v1481 = vadd.f32 %v1111, %v1449
      %v1482 = vadd.f32 %v1112, %v1450
      %v1483 = vadd.f32 %v1113, %v1451
      %v1484 = vadd.f32 %v1114, %v1452
      %v1485 = vadd.f32 %v1115, %v1453
      %v1486 = vadd.f32 %v1116, %v1454
      %v1487 = vadd.f32 %v1117, %v1455
      %v1488 = vadd.f32 %v1118, %v1456
      %v1489 = vadd.f32 %v1119, %v1457
      %v1490 = vadd.f32 %v1120, %v1458
      %v1491 = vadd.f32 %v1121, %v1459
      %v1492 = vadd.f32 %v1122, %v1460
      %v1493 = vadd.f32 %v1123, %v1461
      %v1494 = vadd.f32 %v1124, %v1462
      %v1495 = vadd.f32 %v1125, %v1463
      %v1496 = vadd.f32 %v1126, %v1464
      %v1497 = vadd.f32 %v1127, %v1465
      %v1498 = vadd.f32 %v1128, %v1466
      %v1499 = vadd.f32 %v1129, %v1467
      %v1500 = vadd.f32 %v1130, %v1468
      %v1501 = vadd.f32 %v1131, %v1469
      %v1502 = vadd.f32 %v1132, %v1470
      %v1503 = vadd.f32 %v1133, %v1471
      %v1504 = vadd.f32 %v1134, %v1472
      %v1505 = vadd.f32 %v1135, %v1473
      %v1506 = vadd.f32 %v1136, %v1474
      %v1507 = vadd.f32 %v1137, %v1475
      %v1508 = vadd.f32 %v1138, %v1476
      %v1509 = vadd.f32 %v1139, %v1477
      %v1510 = vadd.f32 %v1140, %v1478
      %v1511 = vadd.f32 %v915, %v1479
      %v1512 = vadd.f32 %v916, %v1480
      %v1513 = vadd.f32 %v917, %v1481
      %v1514 = vadd.f32 %v918, %v1482
      %v1515 = vadd.f32 %v919, %v1483
      %v1516 = vadd.f32 %v920, %v1484
      %v1517 = vadd.f32 %v921, %v1485
      %v1518 = vadd.f32 %v922, %v1486
      %v1519 = vadd.f32 %v923, %v1487
      %v1520 = vadd.f32 %v924, %v1488
      %v1521 = vadd.f32 %v925, %v1489
      %v1522 = vadd.f32 %v926, %v1490
      %v1523 = vadd.f32 %v927, %v1491
      %v1524 = vadd.f32 %v928, %v1492
      %v1525 = vadd.f32 %v929, %v1493
      %v1526 = vadd.f32 %v930, %v1494
      %v1527 = vadd.f32 %v931, %v1495
      %v1528 = vadd.f32 %v932, %v1496
      %v1529 = vadd.f32 %v933, %v1497
      %v1530 = vadd.f32 %v934, %v1498
      %v1531 = vadd.f32 %v935, %v1499
      %v1532 = vadd.f32 %v936, %v1500
      %v1533 = vadd.f32 %v937, %v1501
      %v1534 = vadd.f32 %v938, %v1502
      %v1535 = vadd.f32 %v939, %v1503
      %v1536 = vadd.f32 %v940, %v1504
      %v1537 = vadd.f32 %v941, %v1505
      %v1538 = vadd.f32 %v942, %v1506
      %v1539 = vadd.f32 %v943, %v1507
      %v1540 = vadd.f32 %v944, %v1508
      %v1541 = vadd.f32 %v945, %v1509
      %v1542 = vadd.f32 %v946, %v1510
      %s1543 = scalar_lea.vmem %s1, 64
      %v1544 = vld [vmem:[%s1543] sm:$0xf]
      %v1545 = vld [vmem:[%s1543 + $0x4] sm:$0xf]
      %v1546 = vld [vmem:[%s1543 + $0x8] sm:$0xf]
      %v1547 = vld [vmem:[%s1543 + $0xc] sm:$0xf]
      %v1548 = vld [vmem:[%s1543 + $0x10] sm:$0xf]
      %v1549 = vld [vmem:[%s1543 + $0x14] sm:$0xf]
      %v1550 = vld [vmem:[%s1543 + $0x18] sm:$0xf]
      %v1551 = vld [vmem:[%s1543 + $0x1c] sm:$0xf]
      %v1552 = vld [vmem:[%s1543 + $0x20] sm:$0xf]
      %v1553 = vld [vmem:[%s1543 + $0x24] sm:$0xf]
      %v1554 = vld [vmem:[%s1543 + $0x28] sm:$0xf]
      %v1555 = vld [vmem:[%s1543 + $0x2c] sm:$0xf]
      %v1556 = vld [vmem:[%s1543 + $0x30] sm:$0xf]
      %v1557 = vld [vmem:[%s1543 + $0x34] sm:$0xf]
      %v1558 = vld [vmem:[%s1543 + $0x38] sm:$0xf]
      %v1559 = vld [vmem:[%s1543 + $0x3c] sm:$0xf]
      %v1560 = vpack.c.bf16 %v1512, %v1511
      %v1561 = vpack.c.bf16 %v1514, %v1513
      %v1562 = vpack.c.bf16 %v1516, %v1515
      %v1563 = vpack.c.bf16 %v1518, %v1517
      %v1564 = vpack.c.bf16 %v1520, %v1519
      %v1565 = vpack.c.bf16 %v1522, %v1521
      %v1566 = vpack.c.bf16 %v1524, %v1523
      %v1567 = vpack.c.bf16 %v1526, %v1525
      %v1568 = vpack.c.bf16 %v1528, %v1527
      %v1569 = vpack.c.bf16 %v1530, %v1529
      %v1570 = vpack.c.bf16 %v1532, %v1531
      %v1571 = vpack.c.bf16 %v1534, %v1533
      %v1572 = vpack.c.bf16 %v1536, %v1535
      %v1573 = vpack.c.bf16 %v1538, %v1537
      %v1574 = vpack.c.bf16 %v1540, %v1539
      %v1575 = vpack.c.bf16 %v1542, %v1541
      %v1576 = vld [vmem:[%s2 + $0x4] ss:$0 sm:$0xff]
      %v1593 = vunpack.c.l.b16 %v1544
      %v1594 = vunpack.c.l.b16 %v1545
      %v1595 = vunpack.c.l.b16 %v1546
      %v1596 = vunpack.c.l.b16 %v1547
      %v1597 = vunpack.c.l.b16 %v1548
      %v1598 = vunpack.c.l.b16 %v1549
      %v1599 = vunpack.c.l.b16 %v1550
      %v1600 = vunpack.c.l.b16 %v1551
      %v1601 = vunpack.c.l.b16 %v1552
      %v1602 = vunpack.c.l.b16 %v1553
      %v1603 = vunpack.c.l.b16 %v1554
      %v1604 = vunpack.c.l.b16 %v1555
      %v1605 = vunpack.c.l.b16 %v1556
      %v1606 = vunpack.c.l.b16 %v1557
      %v1607 = vunpack.c.l.b16 %v1558
      %v1608 = vunpack.c.l.b16 %v1559
      %v1609 = vpack.c.b16 %v1594, %v1593
      %v1610 = vpack.c.b16 %v1596, %v1595
      %v1611 = vpack.c.b16 %v1598, %v1597
      %v1612 = vpack.c.b16 %v1600, %v1599
      %v1613 = vpack.c.b16 %v1602, %v1601
      %v1614 = vpack.c.b16 %v1604, %v1603
      %v1615 = vpack.c.b16 %v1606, %v1605
      %v1616 = vpack.c.b16 %v1608, %v1607
      %1625 = vmatprep.subr.bf16.mxu0 0
      %1626 = vmatpush1.bf16.msra.mxu0 %v1609
      %1627 = vmatprep.subr.bf16.mxu0 0
      %1628 = vmatpush1.bf16.msra.mxu0 %v1610
      %1629 = vmatprep.subr.bf16.mxu0 0
      %1630 = vmatpush1.bf16.msra.mxu0 %v1611
      %1631 = vmatprep.subr.bf16.mxu0 0
      %1632 = vmatpush1.bf16.msra.mxu0 %v1612
      %1633 = vmatprep.subr.bf16.mxu0 0
      %1634 = vmatpush1.bf16.msra.mxu0 %v1613
      %1635 = vmatprep.subr.bf16.mxu0 0
      %1636 = vmatpush1.bf16.msra.mxu0 %v1614
      %1637 = vmatprep.subr.bf16.mxu0 0
      %1638 = vmatpush1.bf16.msra.mxu0 %v1615
      %1639 = vmatprep.subr.bf16.mxu0 0
      %1640 = vmatpush1.bf16.msra.mxu0 %v1616
      %1641 = vmatprep.subr.bf16.mxu0 0
      %1642 = vmatpush1.bf16.msra.mxu0 0
      %1643 = vmatprep.subr.bf16.mxu0 0
      %1644 = vmatpush1.bf16.msra.mxu0 0
      %1645 = vmatprep.subr.bf16.mxu0 0
      %1646 = vmatpush1.bf16.msra.mxu0 0
      %1647 = vmatprep.subr.bf16.mxu0 0
      %1648 = vmatpush1.bf16.msra.mxu0 0
      %1649 = vmatprep.subr.bf16.mxu0 0
      %1650 = vmatpush1.bf16.msra.mxu0 0
      %1651 = vmatprep.subr.bf16.mxu0 0
      %1652 = vmatpush1.bf16.msra.mxu0 0
      %1653 = vmatprep.subr.bf16.mxu0 0
      %1654 = vmatpush1.bf16.msra.mxu0 0
      %1655 = vmatprep.subr.bf16.mxu0 0
      %1656 = vmatpush1.bf16.msra.mxu0 0
      %1657 = vmatprep.mubr.bf16.mxu0 0
      %1658 = vmatmul.mubr.bf16.gmra.mrb[0].mxu0 %v1560
      %v1659 = vpop.f32.mrb[0].mxu0
      %v1660 = vadd.f32 %v1576, %v1659
      %v1661 = vpop.f32.mrb[0].mxu0
      %v1662 = vpop.f32.mrb[0].mxu0
      %v1663 = vadd.f32 %v1576, %v1662
      %v1664 = vpop.f32.mrb[0].mxu0
      %1665 = vmatprep.mubr.bf16.mxu0 0
      %1666 = vmatmul.mubr.bf16.gmra.mrb[0].mxu0 %v1561
      %v1667 = vpop.f32.mrb[0].mxu0
      %v1668 = vadd.f32 %v1576, %v1667
      %v1669 = vpop.f32.mrb[0].mxu0
      %v1670 = vpop.f32.mrb[0].mxu0
      %v1671 = vadd.f32 %v1576, %v1670
      %v1672 = vpop.f32.mrb[0].mxu0
      %1673 = vmatprep.mubr.bf16.mxu0 0
      %1674 = vmatmul.mubr.bf16.gmra.mrb[0].mxu0 %v1562
      %v1675 = vpop.f32.mrb[0].mxu0
      %v1676 = vadd.f32 %v1576, %v1675
      %v1677 = vpop.f32.mrb[0].mxu0
      %v1678 = vpop.f32.mrb[0].mxu0
      %v1679 = vadd.f32 %v1576, %v1678
      %v1680 = vpop.f32.mrb[0].mxu0
      %1681 = vmatprep.mubr.bf16.mxu0 0
      %1682 = vmatmul.mubr.bf16.gmra.mrb[0].mxu0 %v1563
      %v1683 = vpop.f32.mrb[0].mxu0
      %v1684 = vadd.f32 %v1576, %v1683
      %v1685 = vpop.f32.mrb[0].mxu0
      %v1686 = vpop.f32.mrb[0].mxu0
      %v1687 = vadd.f32 %v1576, %v1686
      %v1688 = vpop.f32.mrb[0].mxu0
      %1689 = vmatprep.mubr.bf16.mxu0 0
      %1690 = vmatmul.mubr.bf16.gmra.mrb[0].mxu0 %v1564
      %v1691 = vpop.f32.mrb[0].mxu0
      %v1692 = vadd.f32 %v1576, %v1691
      %v1693 = vpop.f32.mrb[0].mxu0
      %v1694 = vpop.f32.mrb[0].mxu0
      %v1695 = vadd.f32 %v1576, %v1694
      %v1696 = vpop.f32.mrb[0].mxu0
      %1697 = vmatprep.mubr.bf16.mxu0 0
      %1698 = vmatmul.mubr.bf16.gmra.mrb[0].mxu0 %v1565
      %v1699 = vpop.f32.mrb[0].mxu0
      %v1700 = vadd.f32 %v1576, %v1699
      %v1701 = vpop.f32.mrb[0].mxu0
      %v1702 = vpop.f32.mrb[0].mxu0
      %v1703 = vadd.f32 %v1576, %v1702
      %v1704 = vpop.f32.mrb[0].mxu0
      %1705 = vmatprep.mubr.bf16.mxu0 0
      %1706 = vmatmul.mubr.bf16.gmra.mrb[0].mxu0 %v1566
      %v1707 = vpop.f32.mrb[0].mxu0
      %v1708 = vadd.f32 %v1576, %v1707
      %v1709 = vpop.f32.mrb[0].mxu0
      %v1710 = vpop.f32.mrb[0].mxu0
      %v1711 = vadd.f32 %v1576, %v1710
      %v1712 = vpop.f32.mrb[0].mxu0
      %1713 = vmatprep.mubr.bf16.mxu0 0
      %1714 = vmatmul.mubr.bf16.gmra.mrb[0].mxu0 %v1567
      %v1715 = vpop.f32.mrb[0].mxu0
      %v1716 = vadd.f32 %v1576, %v1715
      %v1717 = vpop.f32.mrb[0].mxu0
      %v1718 = vpop.f32.mrb[0].mxu0
      %v1719 = vadd.f32 %v1576, %v1718
      %v1720 = vpop.f32.mrb[0].mxu0
      %1721 = vmatprep.mubr.bf16.mxu0 0
      %1722 = vmatmul.mubr.bf16.gmra.mrb[0].mxu0 %v1568
      %v1723 = vpop.f32.mrb[0].mxu0
      %v1724 = vadd.f32 %v1576, %v1723
      %v1725 = vpop.f32.mrb[0].mxu0
      %v1726 = vpop.f32.mrb[0].mxu0
      %v1727 = vadd.f32 %v1576, %v1726
      %v1728 = vpop.f32.mrb[0].mxu0
      %1729 = vmatprep.mubr.bf16.mxu0 0
      %1730 = vmatmul.mubr.bf16.gmra.mrb[0].mxu0 %v1569
      %v1731 = vpop.f32.mrb[0].mxu0
      %v1732 = vadd.f32 %v1576, %v1731
      %v1733 = vpop.f32.mrb[0].mxu0
      %v1734 = vpop.f32.mrb[0].mxu0
      %v1735 = vadd.f32 %v1576, %v1734
      %v1736 = vpop.f32.mrb[0].mxu0
      %1737 = vmatprep.mubr.bf16.mxu0 0
      %1738 = vmatmul.mubr.bf16.gmra.mrb[0].mxu0 %v1570
      %v1739 = vpop.f32.mrb[0].mxu0
      %v1740 = vadd.f32 %v1576, %v1739
      %v1741 = vpop.f32.mrb[0].mxu0
      %v1742 = vpop.f32.mrb[0].mxu0
      %v1743 = vadd.f32 %v1576, %v1742
      %v1744 = vpop.f32.mrb[0].mxu0
      %1745 = vmatprep.mubr.bf16.mxu0 0
      %1746 = vmatmul.mubr.bf16.gmra.mrb[0].mxu0 %v1571
      %v1747 = vpop.f32.mrb[0].mxu0
      %v1748 = vadd.f32 %v1576, %v1747
      %v1749 = vpop.f32.mrb[0].mxu0
      %v1750 = vpop.f32.mrb[0].mxu0
      %v1751 = vadd.f32 %v1576, %v1750
      %v1752 = vpop.f32.mrb[0].mxu0
      %1753 = vmatprep.mubr.bf16.mxu0 0
      %1754 = vmatmul.mubr.bf16.gmra.mrb[0].mxu0 %v1572
      %v1755 = vpop.f32.mrb[0].mxu0
      %v1756 = vadd.f32 %v1576, %v1755
      %v1757 = vpop.f32.mrb[0].mxu0
      %v1758 = vpop.f32.mrb[0].mxu0
      %v1759 = vadd.f32 %v1576, %v1758
      %v1760 = vpop.f32.mrb[0].mxu0
      %1761 = vmatprep.mubr.bf16.mxu0 0
      %1762 = vmatmul.mubr.bf16.gmra.mrb[0].mxu0 %v1573
      %v1763 = vpop.f32.mrb[0].mxu0
      %v1764 = vadd.f32 %v1576, %v1763
      %v1765 = vpop.f32.mrb[0].mxu0
      %v1766 = vpop.f32.mrb[0].mxu0
      %v1767 = vadd.f32 %v1576, %v1766
      %v1768 = vpop.f32.mrb[0].mxu0
      %1769 = vmatprep.mubr.bf16.mxu0 0
      %1770 = vmatmul.mubr.bf16.gmra.mrb[0].mxu0 %v1574
      %v1771 = vpop.f32.mrb[0].mxu0
      %v1772 = vadd.f32 %v1576, %v1771
      %v1773 = vpop.f32.mrb[0].mxu0
      %v1774 = vpop.f32.mrb[0].mxu0
      %v1775 = vadd.f32 %v1576, %v1774
      %v1776 = vpop.f32.mrb[0].mxu0
      %1777 = vmatprep.mubr.bf16.mxu0 0
      %1778 = vmatmul.mubr.bf16.gmra.mrb[0].mxu0 %v1575
      %v1779 = vpop.f32.mrb[0].mxu0
      %v1780 = vadd.f32 %v1576, %v1779
      %v1781 = vpop.f32.mrb[0].mxu0
      %v1782 = vpop.f32.mrb[0].mxu0
      %v1783 = vadd.f32 %v1576, %v1782
      %v1784 = vpop.f32.mrb[0].mxu0
      %1785 = vdwg.mxu0
      %vm1786 = vcmp.gt.f32.partialorder %v1660, 0.0
      %vm1787 = vcmp.gt.f32.partialorder %v1663, 0.0
      %vm1788 = vcmp.gt.f32.partialorder %v1668, 0.0
      %vm1789 = vcmp.gt.f32.partialorder %v1671, 0.0
      %vm1790 = vcmp.gt.f32.partialorder %v1676, 0.0
      %vm1791 = vcmp.gt.f32.partialorder %v1679, 0.0
      %vm1792 = vcmp.gt.f32.partialorder %v1684, 0.0
      %vm1793 = vcmp.gt.f32.partialorder %v1687, 0.0
      %vm1794 = vcmp.gt.f32.partialorder %v1692, 0.0
      %vm1795 = vcmp.gt.f32.partialorder %v1695, 0.0
      %vm1796 = vcmp.gt.f32.partialorder %v1700, 0.0
      %vm1797 = vcmp.gt.f32.partialorder %v1703, 0.0
      %vm1798 = vcmp.gt.f32.partialorder %v1708, 0.0
      %vm1799 = vcmp.gt.f32.partialorder %v1711, 0.0
      %vm1800 = vcmp.gt.f32.partialorder %v1716, 0.0
      %vm1801 = vcmp.gt.f32.partialorder %v1719, 0.0
      %vm1802 = vcmp.gt.f32.partialorder %v1724, 0.0
      %vm1803 = vcmp.gt.f32.partialorder %v1727, 0.0
      %vm1804 = vcmp.gt.f32.partialorder %v1732, 0.0
      %vm1805 = vcmp.gt.f32.partialorder %v1735, 0.0
      %vm1806 = vcmp.gt.f32.partialorder %v1740, 0.0
      %vm1807 = vcmp.gt.f32.partialorder %v1743, 0.0
      %vm1808 = vcmp.gt.f32.partialorder %v1748, 0.0
      %vm1809 = vcmp.gt.f32.partialorder %v1751, 0.0
      %vm1810 = vcmp.gt.f32.partialorder %v1756, 0.0
      %vm1811 = vcmp.gt.f32.partialorder %v1759, 0.0
      %vm1812 = vcmp.gt.f32.partialorder %v1764, 0.0
      %vm1813 = vcmp.gt.f32.partialorder %v1767, 0.0
      %vm1814 = vcmp.gt.f32.partialorder %v1772, 0.0
      %vm1815 = vcmp.gt.f32.partialorder %v1775, 0.0
      %vm1816 = vcmp.gt.f32.partialorder %v1780, 0.0
      %vm1817 = vcmp.gt.f32.partialorder %v1783, 0.0
      %v1818 = vmul.f32 %v1660, 0.01
      %v1819 = vmul.f32 %v1663, 0.01
      %v1820 = vmul.f32 %v1668, 0.01
      %v1821 = vmul.f32 %v1671, 0.01
      %v1822 = vmul.f32 %v1676, 0.01
      %v1823 = vmul.f32 %v1679, 0.01
      %v1824 = vmul.f32 %v1684, 0.01
      %v1825 = vmul.f32 %v1687, 0.01
      %v1826 = vmul.f32 %v1692, 0.01
      %v1827 = vmul.f32 %v1695, 0.01
      %v1828 = vmul.f32 %v1700, 0.01
      %v1829 = vmul.f32 %v1703, 0.01
      %v1830 = vmul.f32 %v1708, 0.01
      %v1831 = vmul.f32 %v1711, 0.01
      %v1832 = vmul.f32 %v1716, 0.01
      %v1833 = vmul.f32 %v1719, 0.01
      %v1834 = vmul.f32 %v1724, 0.01
      %v1835 = vmul.f32 %v1727, 0.01
      %v1836 = vmul.f32 %v1732, 0.01
      %v1837 = vmul.f32 %v1735, 0.01
      %v1838 = vmul.f32 %v1740, 0.01
      %v1839 = vmul.f32 %v1743, 0.01
      %v1840 = vmul.f32 %v1748, 0.01
      %v1841 = vmul.f32 %v1751, 0.01
      %v1842 = vmul.f32 %v1756, 0.01
      %v1843 = vmul.f32 %v1759, 0.01
      %v1844 = vmul.f32 %v1764, 0.01
      %v1845 = vmul.f32 %v1767, 0.01
      %v1846 = vmul.f32 %v1772, 0.01
      %v1847 = vmul.f32 %v1775, 0.01
      %v1848 = vmul.f32 %v1780, 0.01
      %v1849 = vmul.f32 %v1783, 0.01
      %v1850 = vsel %vm1786, %v1660, %v1818
      %v1851 = vsel %vm1787, %v1663, %v1819
      %v1852 = vsel %vm1788, %v1668, %v1820
      %v1853 = vsel %vm1789, %v1671, %v1821
      %v1854 = vsel %vm1790, %v1676, %v1822
      %v1855 = vsel %vm1791, %v1679, %v1823
      %v1856 = vsel %vm1792, %v1684, %v1824
      %v1857 = vsel %vm1793, %v1687, %v1825
      %v1858 = vsel %vm1794, %v1692, %v1826
      %v1859 = vsel %vm1795, %v1695, %v1827
      %v1860 = vsel %vm1796, %v1700, %v1828
      %v1861 = vsel %vm1797, %v1703, %v1829
      %v1862 = vsel %vm1798, %v1708, %v1830
      %v1863 = vsel %vm1799, %v1711, %v1831
      %v1864 = vsel %vm1800, %v1716, %v1832
      %v1865 = vsel %vm1801, %v1719, %v1833
      %v1866 = vsel %vm1802, %v1724, %v1834
      %v1867 = vsel %vm1803, %v1727, %v1835
      %v1868 = vsel %vm1804, %v1732, %v1836
      %v1869 = vsel %vm1805, %v1735, %v1837
      %v1870 = vsel %vm1806, %v1740, %v1838
      %v1871 = vsel %vm1807, %v1743, %v1839
      %v1872 = vsel %vm1808, %v1748, %v1840
      %v1873 = vsel %vm1809, %v1751, %v1841
      %v1874 = vsel %vm1810, %v1756, %v1842
      %v1875 = vsel %vm1811, %v1759, %v1843
      %v1876 = vsel %vm1812, %v1764, %v1844
      %v1877 = vsel %vm1813, %v1767, %v1845
      %v1878 = vsel %vm1814, %v1772, %v1846
      %v1879 = vsel %vm1815, %v1775, %v1847
      %v1880 = vsel %vm1816, %v1780, %v1848
      %v1881 = vsel %vm1817, %v1783, %v1849
      %s1882 = scalar_lea.vmem %s1, 128
      %v1883 = vld [vmem:[%s1882] sm:$0xf]
      %v1884 = vld [vmem:[%s1882 + $0x4] sm:$0xf]
      %v1885 = vld [vmem:[%s1882 + $0x8] sm:$0xf]
      %v1886 = vld [vmem:[%s1882 + $0xc] sm:$0xf]
      %v1887 = vld [vmem:[%s1882 + $0x10] sm:$0xf]
      %v1888 = vld [vmem:[%s1882 + $0x14] sm:$0xf]
      %v1889 = vld [vmem:[%s1882 + $0x18] sm:$0xf]
      %v1890 = vld [vmem:[%s1882 + $0x1c] sm:$0xf]
      %v1891 = vld [vmem:[%s1882 + $0x20] sm:$0xf]
      %v1892 = vld [vmem:[%s1882 + $0x24] sm:$0xf]
      %v1893 = vld [vmem:[%s1882 + $0x28] sm:$0xf]
      %v1894 = vld [vmem:[%s1882 + $0x2c] sm:$0xf]
      %v1895 = vld [vmem:[%s1882 + $0x30] sm:$0xf]
      %v1896 = vld [vmem:[%s1882 + $0x34] sm:$0xf]
      %v1897 = vld [vmem:[%s1882 + $0x38] sm:$0xf]
      %v1898 = vld [vmem:[%s1882 + $0x3c] sm:$0xf]
      %v1899 = vpack.c.bf16 %v1851, %v1850
      %v1900 = vpack.c.bf16 %v1853, %v1852
      %v1901 = vpack.c.bf16 %v1855, %v1854
      %v1902 = vpack.c.bf16 %v1857, %v1856
      %v1903 = vpack.c.bf16 %v1859, %v1858
      %v1904 = vpack.c.bf16 %v1861, %v1860
      %v1905 = vpack.c.bf16 %v1863, %v1862
      %v1906 = vpack.c.bf16 %v1865, %v1864
      %v1907 = vpack.c.bf16 %v1867, %v1866
      %v1908 = vpack.c.bf16 %v1869, %v1868
      %v1909 = vpack.c.bf16 %v1871, %v1870
      %v1910 = vpack.c.bf16 %v1873, %v1872
      %v1911 = vpack.c.bf16 %v1875, %v1874
      %v1912 = vpack.c.bf16 %v1877, %v1876
      %v1913 = vpack.c.bf16 %v1879, %v1878
      %v1914 = vpack.c.bf16 %v1881, %v1880
      %v1915 = vld [vmem:[%s2 + $0x5] ss:$0 sm:$0xff]
      %v1932 = vunpack.c.l.b16 %v1883
      %v1933 = vunpack.c.l.b16 %v1884
      %v1934 = vunpack.c.l.b16 %v1885
      %v1935 = vunpack.c.l.b16 %v1886
      %v1936 = vunpack.c.l.b16 %v1887
      %v1937 = vunpack.c.l.b16 %v1888
      %v1938 = vunpack.c.l.b16 %v1889
      %v1939 = vunpack.c.l.b16 %v1890
      %v1940 = vunpack.c.l.b16 %v1891
      %v1941 = vunpack.c.l.b16 %v1892
      %v1942 = vunpack.c.l.b16 %v1893
      %v1943 = vunpack.c.l.b16 %v1894
      %v1944 = vunpack.c.l.b16 %v1895
      %v1945 = vunpack.c.l.b16 %v1896
      %v1946 = vunpack.c.l.b16 %v1897
      %v1947 = vunpack.c.l.b16 %v1898
      %v1948 = vpack.c.b16 %v1933, %v1932
      %v1949 = vpack.c.b16 %v1935, %v1934
      %v1950 = vpack.c.b16 %v1937, %v1936
      %v1951 = vpack.c.b16 %v1939, %v1938
      %v1952 = vpack.c.b16 %v1941, %v1940
      %v1953 = vpack.c.b16 %v1943, %v1942
      %v1954 = vpack.c.b16 %v1945, %v1944
      %v1955 = vpack.c.b16 %v1947, %v1946
      %1964 = vmatprep.subr.bf16.mxu0 0
      %1965 = vmatpush1.bf16.msra.mxu0 %v1948
      %1966 = vmatprep.subr.bf16.mxu0 0
      %1967 = vmatpush1.bf16.msra.mxu0 %v1949
      %1968 = vmatprep.subr.bf16.mxu0 0
      %1969 = vmatpush1.bf16.msra.mxu0 %v1950
      %1970 = vmatprep.subr.bf16.mxu0 0
      %1971 = vmatpush1.bf16.msra.mxu0 %v1951
      %1972 = vmatprep.subr.bf16.mxu0 0
      %1973 = vmatpush1.bf16.msra.mxu0 %v1952
      %1974 = vmatprep.subr.bf16.mxu0 0
      %1975 = vmatpush1.bf16.msra.mxu0 %v1953
      %1976 = vmatprep.subr.bf16.mxu0 0
      %1977 = vmatpush1.bf16.msra.mxu0 %v1954
      %1978 = vmatprep.subr.bf16.mxu0 0
      %1979 = vmatpush1.bf16.msra.mxu0 %v1955
      %1980 = vmatprep.subr.bf16.mxu0 0
      %1981 = vmatpush1.bf16.msra.mxu0 0
      %1982 = vmatprep.subr.bf16.mxu0 0
      %1983 = vmatpush1.bf16.msra.mxu0 0
      %1984 = vmatprep.subr.bf16.mxu0 0
      %1985 = vmatpush1.bf16.msra.mxu0 0
      %1986 = vmatprep.subr.bf16.mxu0 0
      %1987 = vmatpush1.bf16.msra.mxu0 0
      %1988 = vmatprep.subr.bf16.mxu0 0
      %1989 = vmatpush1.bf16.msra.mxu0 0
      %1990 = vmatprep.subr.bf16.mxu0 0
      %1991 = vmatpush1.bf16.msra.mxu0 0
      %1992 = vmatprep.subr.bf16.mxu0 0
      %1993 = vmatpush1.bf16.msra.mxu0 0
      %1994 = vmatprep.subr.bf16.mxu0 0
      %1995 = vmatpush1.bf16.msra.mxu0 0
      %1996 = vmatprep.mubr.bf16.mxu0 0
      %1997 = vmatmul.mubr.bf16.gmra.mrb[0].mxu0 %v1899
      %v1998 = vpop.f32.mrb[0].mxu0
      %v1999 = vadd.f32 %v1915, %v1998
      %v2000 = vpop.f32.mrb[0].mxu0
      %v2001 = vpop.f32.mrb[0].mxu0
      %v2002 = vadd.f32 %v1915, %v2001
      %v2003 = vpop.f32.mrb[0].mxu0
      %2004 = vmatprep.mubr.bf16.mxu0 0
      %2005 = vmatmul.mubr.bf16.gmra.mrb[0].mxu0 %v1900
      %v2006 = vpop.f32.mrb[0].mxu0
      %v2007 = vadd.f32 %v1915, %v2006
      %v2008 = vpop.f32.mrb[0].mxu0
      %v2009 = vpop.f32.mrb[0].mxu0
      %v2010 = vadd.f32 %v1915, %v2009
      %v2011 = vpop.f32.mrb[0].mxu0
      %2012 = vmatprep.mubr.bf16.mxu0 0
      %2013 = vmatmul.mubr.bf16.gmra.mrb[0].mxu0 %v1901
      %v2014 = vpop.f32.mrb[0].mxu0
      %v2015 = vadd.f32 %v1915, %v2014
      %v2016 = vpop.f32.mrb[0].mxu0
      %v2017 = vpop.f32.mrb[0].mxu0
      %v2018 = vadd.f32 %v1915, %v2017
      %v2019 = vpop.f32.mrb[0].mxu0
      %2020 = vmatprep.mubr.bf16.mxu0 0
      %2021 = vmatmul.mubr.bf16.gmra.mrb[0].mxu0 %v1902
      %v2022 = vpop.f32.mrb[0].mxu0
      %v2023 = vadd.f32 %v1915, %v2022
      %v2024 = vpop.f32.mrb[0].mxu0
      %v2025 = vpop.f32.mrb[0].mxu0
      %v2026 = vadd.f32 %v1915, %v2025
      %v2027 = vpop.f32.mrb[0].mxu0
      %2028 = vmatprep.mubr.bf16.mxu0 0
      %2029 = vmatmul.mubr.bf16.gmra.mrb[0].mxu0 %v1903
      %v2030 = vpop.f32.mrb[0].mxu0
      %v2031 = vadd.f32 %v1915, %v2030
      %v2032 = vpop.f32.mrb[0].mxu0
      %v2033 = vpop.f32.mrb[0].mxu0
      %v2034 = vadd.f32 %v1915, %v2033
      %v2035 = vpop.f32.mrb[0].mxu0
      %2036 = vmatprep.mubr.bf16.mxu0 0
      %2037 = vmatmul.mubr.bf16.gmra.mrb[0].mxu0 %v1904
      %v2038 = vpop.f32.mrb[0].mxu0
      %v2039 = vadd.f32 %v1915, %v2038
      %v2040 = vpop.f32.mrb[0].mxu0
      %v2041 = vpop.f32.mrb[0].mxu0
      %v2042 = vadd.f32 %v1915, %v2041
      %v2043 = vpop.f32.mrb[0].mxu0
      %2044 = vmatprep.mubr.bf16.mxu0 0
      %2045 = vmatmul.mubr.bf16.gmra.mrb[0].mxu0 %v1905
      %v2046 = vpop.f32.mrb[0].mxu0
      %v2047 = vadd.f32 %v1915, %v2046
      %v2048 = vpop.f32.mrb[0].mxu0
      %v2049 = vpop.f32.mrb[0].mxu0
      %v2050 = vadd.f32 %v1915, %v2049
      %v2051 = vpop.f32.mrb[0].mxu0
      %2052 = vmatprep.mubr.bf16.mxu0 0
      %2053 = vmatmul.mubr.bf16.gmra.mrb[0].mxu0 %v1906
      %v2054 = vpop.f32.mrb[0].mxu0
      %v2055 = vadd.f32 %v1915, %v2054
      %v2056 = vpop.f32.mrb[0].mxu0
      %v2057 = vpop.f32.mrb[0].mxu0
      %v2058 = vadd.f32 %v1915, %v2057
      %v2059 = vpop.f32.mrb[0].mxu0
      %2060 = vmatprep.mubr.bf16.mxu0 0
      %2061 = vmatmul.mubr.bf16.gmra.mrb[0].mxu0 %v1907
      %v2062 = vpop.f32.mrb[0].mxu0
      %v2063 = vadd.f32 %v1915, %v2062
      %v2064 = vpop.f32.mrb[0].mxu0
      %v2065 = vpop.f32.mrb[0].mxu0
      %v2066 = vadd.f32 %v1915, %v2065
      %v2067 = vpop.f32.mrb[0].mxu0
      %2068 = vmatprep.mubr.bf16.mxu0 0
      %2069 = vmatmul.mubr.bf16.gmra.mrb[0].mxu0 %v1908
      %v2070 = vpop.f32.mrb[0].mxu0
      %v2071 = vadd.f32 %v1915, %v2070
      %v2072 = vpop.f32.mrb[0].mxu0
      %v2073 = vpop.f32.mrb[0].mxu0
      %v2074 = vadd.f32 %v1915, %v2073
      %v2075 = vpop.f32.mrb[0].mxu0
      %2076 = vmatprep.mubr.bf16.mxu0 0
      %2077 = vmatmul.mubr.bf16.gmra.mrb[0].mxu0 %v1909
      %v2078 = vpop.f32.mrb[0].mxu0
      %v2079 = vadd.f32 %v1915, %v2078
      %v2080 = vpop.f32.mrb[0].mxu0
      %v2081 = vpop.f32.mrb[0].mxu0
      %v2082 = vadd.f32 %v1915, %v2081
      %v2083 = vpop.f32.mrb[0].mxu0
      %2084 = vmatprep.mubr.bf16.mxu0 0
      %2085 = vmatmul.mubr.bf16.gmra.mrb[0].mxu0 %v1910
      %v2086 = vpop.f32.mrb[0].mxu0
      %v2087 = vadd.f32 %v1915, %v2086
      %v2088 = vpop.f32.mrb[0].mxu0
      %v2089 = vpop.f32.mrb[0].mxu0
      %v2090 = vadd.f32 %v1915, %v2089
      %v2091 = vpop.f32.mrb[0].mxu0
      %2092 = vmatprep.mubr.bf16.mxu0 0
      %2093 = vmatmul.mubr.bf16.gmra.mrb[0].mxu0 %v1911
      %v2094 = vpop.f32.mrb[0].mxu0
      %v2095 = vadd.f32 %v1915, %v2094
      %v2096 = vpop.f32.mrb[0].mxu0
      %v2097 = vpop.f32.mrb[0].mxu0
      %v2098 = vadd.f32 %v1915, %v2097
      %v2099 = vpop.f32.mrb[0].mxu0
      %2100 = vmatprep.mubr.bf16.mxu0 0
      %2101 = vmatmul.mubr.bf16.gmra.mrb[0].mxu0 %v1912
      %v2102 = vpop.f32.mrb[0].mxu0
      %v2103 = vadd.f32 %v1915, %v2102
      %v2104 = vpop.f32.mrb[0].mxu0
      %v2105 = vpop.f32.mrb[0].mxu0
      %v2106 = vadd.f32 %v1915, %v2105
      %v2107 = vpop.f32.mrb[0].mxu0
      %2108 = vmatprep.mubr.bf16.mxu0 0
      %2109 = vmatmul.mubr.bf16.gmra.mrb[0].mxu0 %v1913
      %v2110 = vpop.f32.mrb[0].mxu0
      %v2111 = vadd.f32 %v1915, %v2110
      %v2112 = vpop.f32.mrb[0].mxu0
      %v2113 = vpop.f32.mrb[0].mxu0
      %v2114 = vadd.f32 %v1915, %v2113
      %v2115 = vpop.f32.mrb[0].mxu0
      %2116 = vmatprep.mubr.bf16.mxu0 0
      %2117 = vmatmul.mubr.bf16.gmra.mrb[0].mxu0 %v1914
      %v2118 = vpop.f32.mrb[0].mxu0
      %v2119 = vadd.f32 %v1915, %v2118
      %v2120 = vpop.f32.mrb[0].mxu0
      %v2121 = vpop.f32.mrb[0].mxu0
      %v2122 = vadd.f32 %v1915, %v2121
      %v2123 = vpop.f32.mrb[0].mxu0
      %2124 = vdwg.mxu0
      %s2125 = scalar_lea.vmem %s1, 192
      %v2126 = vld [vmem:[%s2125] sm:$0xf]
      %v2127 = vld [vmem:[%s2125 + $0x4] sm:$0xf]
      %v2128 = vld [vmem:[%s2125 + $0x8] sm:$0xf]
      %v2129 = vld [vmem:[%s2125 + $0xc] sm:$0xf]
      %v2130 = vld [vmem:[%s2125 + $0x10] sm:$0xf]
      %v2131 = vld [vmem:[%s2125 + $0x14] sm:$0xf]
      %v2132 = vld [vmem:[%s2125 + $0x18] sm:$0xf]
      %v2133 = vld [vmem:[%s2125 + $0x1c] sm:$0xf]
      %v2134 = vld [vmem:[%s2125 + $0x20] sm:$0xf]
      %v2135 = vld [vmem:[%s2125 + $0x24] sm:$0xf]
      %v2136 = vld [vmem:[%s2125 + $0x28] sm:$0xf]
      %v2137 = vld [vmem:[%s2125 + $0x2c] sm:$0xf]
      %v2138 = vld [vmem:[%s2125 + $0x30] sm:$0xf]
      %v2139 = vld [vmem:[%s2125 + $0x34] sm:$0xf]
      %v2140 = vld [vmem:[%s2125 + $0x38] sm:$0xf]
      %v2141 = vld [vmem:[%s2125 + $0x3c] sm:$0xf]
      %v2142 = vpack.c.bf16 %v2002, %v1999
      %v2143 = vpack.c.bf16 %v2010, %v2007
      %v2144 = vpack.c.bf16 %v2018, %v2015
      %v2145 = vpack.c.bf16 %v2026, %v2023
      %v2146 = vpack.c.bf16 %v2034, %v2031
      %v2147 = vpack.c.bf16 %v2042, %v2039
      %v2148 = vpack.c.bf16 %v2050, %v2047
      %v2149 = vpack.c.bf16 %v2058, %v2055
      %v2150 = vpack.c.bf16 %v2066, %v2063
      %v2151 = vpack.c.bf16 %v2074, %v2071
      %v2152 = vpack.c.bf16 %v2082, %v2079
      %v2153 = vpack.c.bf16 %v2090, %v2087
      %v2154 = vpack.c.bf16 %v2098, %v2095
      %v2155 = vpack.c.bf16 %v2106, %v2103
      %v2156 = vpack.c.bf16 %v2114, %v2111
      %v2157 = vpack.c.bf16 %v2122, %v2119
      %v2158 = vld [vmem:[%s2 + $0x6] ss:$0 sm:$0xff]
      %v2175 = vunpack.c.l.b16 %v2126
      %v2176 = vunpack.c.l.b16 %v2127
      %v2177 = vunpack.c.l.b16 %v2128
      %v2178 = vunpack.c.l.b16 %v2129
      %v2179 = vunpack.c.l.b16 %v2130
      %v2180 = vunpack.c.l.b16 %v2131
      %v2181 = vunpack.c.l.b16 %v2132
      %v2182 = vunpack.c.l.b16 %v2133
      %v2183 = vunpack.c.l.b16 %v2134
      %v2184 = vunpack.c.l.b16 %v2135
      %v2185 = vunpack.c.l.b16 %v2136
      %v2186 = vunpack.c.l.b16 %v2137
      %v2187 = vunpack.c.l.b16 %v2138
      %v2188 = vunpack.c.l.b16 %v2139
      %v2189 = vunpack.c.l.b16 %v2140
      %v2190 = vunpack.c.l.b16 %v2141
      %v2191 = vpack.c.b16 %v2176, %v2175
      %v2192 = vpack.c.b16 %v2178, %v2177
      %v2193 = vpack.c.b16 %v2180, %v2179
      %v2194 = vpack.c.b16 %v2182, %v2181
      %v2195 = vpack.c.b16 %v2184, %v2183
      %v2196 = vpack.c.b16 %v2186, %v2185
      %v2197 = vpack.c.b16 %v2188, %v2187
      %v2198 = vpack.c.b16 %v2190, %v2189
      %2207 = vmatprep.subr.bf16.mxu0 0
      %2208 = vmatpush1.bf16.msra.mxu0 %v2191
      %2209 = vmatprep.subr.bf16.mxu0 0
      %2210 = vmatpush1.bf16.msra.mxu0 %v2192
      %2211 = vmatprep.subr.bf16.mxu0 0
      %2212 = vmatpush1.bf16.msra.mxu0 %v2193
      %2213 = vmatprep.subr.bf16.mxu0 0
      %2214 = vmatpush1.bf16.msra.mxu0 %v2194
      %2215 = vmatprep.subr.bf16.mxu0 0
      %2216 = vmatpush1.bf16.msra.mxu0 %v2195
      %2217 = vmatprep.subr.bf16.mxu0 0
      %2218 = vmatpush1.bf16.msra.mxu0 %v2196
      %2219 = vmatprep.subr.bf16.mxu0 0
      %2220 = vmatpush1.bf16.msra.mxu0 %v2197
      %2221 = vmatprep.subr.bf16.mxu0 0
      %2222 = vmatpush1.bf16.msra.mxu0 %v2198
      %2223 = vmatprep.subr.bf16.mxu0 0
      %2224 = vmatpush1.bf16.msra.mxu0 0
      %2225 = vmatprep.subr.bf16.mxu0 0
      %2226 = vmatpush1.bf16.msra.mxu0 0
      %2227 = vmatprep.subr.bf16.mxu0 0
      %2228 = vmatpush1.bf16.msra.mxu0 0
      %2229 = vmatprep.subr.bf16.mxu0 0
      %2230 = vmatpush1.bf16.msra.mxu0 0
      %2231 = vmatprep.subr.bf16.mxu0 0
      %2232 = vmatpush1.bf16.msra.mxu0 0
      %2233 = vmatprep.subr.bf16.mxu0 0
      %2234 = vmatpush1.bf16.msra.mxu0 0
      %2235 = vmatprep.subr.bf16.mxu0 0
      %2236 = vmatpush1.bf16.msra.mxu0 0
      %2237 = vmatprep.subr.bf16.mxu0 0
      %2238 = vmatpush1.bf16.msra.mxu0 0
      %2239 = vmatprep.mubr.bf16.mxu0 0
      %2240 = vmatmul.mubr.bf16.gmra.mrb[0].mxu0 %v2142
      %v2241 = vpop.f32.mrb[0].mxu0
      %v2242 = vadd.f32 %v2158, %v2241
      %v2243 = vpop.f32.mrb[0].mxu0
      %v2244 = vpop.f32.mrb[0].mxu0
      %v2245 = vadd.f32 %v2158, %v2244
      %v2246 = vpop.f32.mrb[0].mxu0
      %2247 = vmatprep.mubr.bf16.mxu0 0
      %2248 = vmatmul.mubr.bf16.gmra.mrb[0].mxu0 %v2143
      %v2249 = vpop.f32.mrb[0].mxu0
      %v2250 = vadd.f32 %v2158, %v2249
      %v2251 = vpop.f32.mrb[0].mxu0
      %v2252 = vpop.f32.mrb[0].mxu0
      %v2253 = vadd.f32 %v2158, %v2252
      %v2254 = vpop.f32.mrb[0].mxu0
      %2255 = vmatprep.mubr.bf16.mxu0 0
      %2256 = vmatmul.mubr.bf16.gmra.mrb[0].mxu0 %v2144
      %v2257 = vpop.f32.mrb[0].mxu0
      %v2258 = vadd.f32 %v2158, %v2257
      %v2259 = vpop.f32.mrb[0].mxu0
      %v2260 = vpop.f32.mrb[0].mxu0
      %v2261 = vadd.f32 %v2158, %v2260
      %v2262 = vpop.f32.mrb[0].mxu0
      %2263 = vmatprep.mubr.bf16.mxu0 0
      %2264 = vmatmul.mubr.bf16.gmra.mrb[0].mxu0 %v2145
      %v2265 = vpop.f32.mrb[0].mxu0
      %v2266 = vadd.f32 %v2158, %v2265
      %v2267 = vpop.f32.mrb[0].mxu0
      %v2268 = vpop.f32.mrb[0].mxu0
      %v2269 = vadd.f32 %v2158, %v2268
      %v2270 = vpop.f32.mrb[0].mxu0
      %2271 = vmatprep.mubr.bf16.mxu0 0
      %2272 = vmatmul.mubr.bf16.gmra.mrb[0].mxu0 %v2146
      %v2273 = vpop.f32.mrb[0].mxu0
      %v2274 = vadd.f32 %v2158, %v2273
      %v2275 = vpop.f32.mrb[0].mxu0
      %v2276 = vpop.f32.mrb[0].mxu0
      %v2277 = vadd.f32 %v2158, %v2276
      %v2278 = vpop.f32.mrb[0].mxu0
      %2279 = vmatprep.mubr.bf16.mxu0 0
      %2280 = vmatmul.mubr.bf16.gmra.mrb[0].mxu0 %v2147
      %v2281 = vpop.f32.mrb[0].mxu0
      %v2282 = vadd.f32 %v2158, %v2281
      %v2283 = vpop.f32.mrb[0].mxu0
      %v2284 = vpop.f32.mrb[0].mxu0
      %v2285 = vadd.f32 %v2158, %v2284
      %v2286 = vpop.f32.mrb[0].mxu0
      %2287 = vmatprep.mubr.bf16.mxu0 0
      %2288 = vmatmul.mubr.bf16.gmra.mrb[0].mxu0 %v2148
      %v2289 = vpop.f32.mrb[0].mxu0
      %v2290 = vadd.f32 %v2158, %v2289
      %v2291 = vpop.f32.mrb[0].mxu0
      %v2292 = vpop.f32.mrb[0].mxu0
      %v2293 = vadd.f32 %v2158, %v2292
      %v2294 = vpop.f32.mrb[0].mxu0
      %2295 = vmatprep.mubr.bf16.mxu0 0
      %2296 = vmatmul.mubr.bf16.gmra.mrb[0].mxu0 %v2149
      %v2297 = vpop.f32.mrb[0].mxu0
      %v2298 = vadd.f32 %v2158, %v2297
      %v2299 = vpop.f32.mrb[0].mxu0
      %v2300 = vpop.f32.mrb[0].mxu0
      %v2301 = vadd.f32 %v2158, %v2300
      %v2302 = vpop.f32.mrb[0].mxu0
      %2303 = vmatprep.mubr.bf16.mxu0 0
      %2304 = vmatmul.mubr.bf16.gmra.mrb[0].mxu0 %v2150
      %v2305 = vpop.f32.mrb[0].mxu0
      %v2306 = vadd.f32 %v2158, %v2305
      %v2307 = vpop.f32.mrb[0].mxu0
      %v2308 = vpop.f32.mrb[0].mxu0
      %v2309 = vadd.f32 %v2158, %v2308
      %v2310 = vpop.f32.mrb[0].mxu0
      %2311 = vmatprep.mubr.bf16.mxu0 0
      %2312 = vmatmul.mubr.bf16.gmra.mrb[0].mxu0 %v2151
      %v2313 = vpop.f32.mrb[0].mxu0
      %v2314 = vadd.f32 %v2158, %v2313
      %v2315 = vpop.f32.mrb[0].mxu0
      %v2316 = vpop.f32.mrb[0].mxu0
      %v2317 = vadd.f32 %v2158, %v2316
      %v2318 = vpop.f32.mrb[0].mxu0
      %2319 = vmatprep.mubr.bf16.mxu0 0
      %2320 = vmatmul.mubr.bf16.gmra.mrb[0].mxu0 %v2152
      %v2321 = vpop.f32.mrb[0].mxu0
      %v2322 = vadd.f32 %v2158, %v2321
      %v2323 = vpop.f32.mrb[0].mxu0
      %v2324 = vpop.f32.mrb[0].mxu0
      %v2325 = vadd.f32 %v2158, %v2324
      %v2326 = vpop.f32.mrb[0].mxu0
      %2327 = vmatprep.mubr.bf16.mxu0 0
      %2328 = vmatmul.mubr.bf16.gmra.mrb[0].mxu0 %v2153
      %v2329 = vpop.f32.mrb[0].mxu0
      %v2330 = vadd.f32 %v2158, %v2329
      %v2331 = vpop.f32.mrb[0].mxu0
      %v2332 = vpop.f32.mrb[0].mxu0
      %v2333 = vadd.f32 %v2158, %v2332
      %v2334 = vpop.f32.mrb[0].mxu0
      %2335 = vmatprep.mubr.bf16.mxu0 0
      %2336 = vmatmul.mubr.bf16.gmra.mrb[0].mxu0 %v2154
      %v2337 = vpop.f32.mrb[0].mxu0
      %v2338 = vadd.f32 %v2158, %v2337
      %v2339 = vpop.f32.mrb[0].mxu0
      %v2340 = vpop.f32.mrb[0].mxu0
      %v2341 = vadd.f32 %v2158, %v2340
      %v2342 = vpop.f32.mrb[0].mxu0
      %2343 = vmatprep.mubr.bf16.mxu0 0
      %2344 = vmatmul.mubr.bf16.gmra.mrb[0].mxu0 %v2155
      %v2345 = vpop.f32.mrb[0].mxu0
      %v2346 = vadd.f32 %v2158, %v2345
      %v2347 = vpop.f32.mrb[0].mxu0
      %v2348 = vpop.f32.mrb[0].mxu0
      %v2349 = vadd.f32 %v2158, %v2348
      %v2350 = vpop.f32.mrb[0].mxu0
      %2351 = vmatprep.mubr.bf16.mxu0 0
      %2352 = vmatmul.mubr.bf16.gmra.mrb[0].mxu0 %v2156
      %v2353 = vpop.f32.mrb[0].mxu0
      %v2354 = vadd.f32 %v2158, %v2353
      %v2355 = vpop.f32.mrb[0].mxu0
      %v2356 = vpop.f32.mrb[0].mxu0
      %v2357 = vadd.f32 %v2158, %v2356
      %v2358 = vpop.f32.mrb[0].mxu0
      %2359 = vmatprep.mubr.bf16.mxu0 0
      %2360 = vmatmul.mubr.bf16.gmra.mrb[0].mxu0 %v2157
      %v2361 = vpop.f32.mrb[0].mxu0
      %v2362 = vadd.f32 %v2158, %v2361
      %v2363 = vpop.f32.mrb[0].mxu0
      %v2364 = vpop.f32.mrb[0].mxu0
      %v2365 = vadd.f32 %v2158, %v2364
      %v2366 = vpop.f32.mrb[0].mxu0
      %2367 = vdwg.mxu0
      %s2368 = scalar_lea.vmem %s1, 256
      %v2369 = vld [vmem:[%s2368] sm:$0xf]
      %v2370 = vld [vmem:[%s2368 + $0x4] sm:$0xf]
      %v2371 = vld [vmem:[%s2368 + $0x8] sm:$0xf]
      %v2372 = vld [vmem:[%s2368 + $0xc] sm:$0xf]
      %v2373 = vld [vmem:[%s2368 + $0x10] sm:$0xf]
      %v2374 = vld [vmem:[%s2368 + $0x14] sm:$0xf]
      %v2375 = vld [vmem:[%s2368 + $0x18] sm:$0xf]
      %v2376 = vld [vmem:[%s2368 + $0x1c] sm:$0xf]
      %v2377 = vld [vmem:[%s2368 + $0x20] sm:$0xf]
      %v2378 = vld [vmem:[%s2368 + $0x24] sm:$0xf]
      %v2379 = vld [vmem:[%s2368 + $0x28] sm:$0xf]
      %v2380 = vld [vmem:[%s2368 + $0x2c] sm:$0xf]
      %v2381 = vld [vmem:[%s2368 + $0x30] sm:$0xf]
      %v2382 = vld [vmem:[%s2368 + $0x34] sm:$0xf]
      %v2383 = vld [vmem:[%s2368 + $0x38] sm:$0xf]
      %v2384 = vld [vmem:[%s2368 + $0x3c] sm:$0xf]
      %v2385 = vld [vmem:[%s2 + $0x7] ss:$0 sm:$0xff]
      %v2402 = vunpack.c.l.b16 %v2369
      %v2403 = vunpack.c.l.b16 %v2370
      %v2404 = vunpack.c.l.b16 %v2371
      %v2405 = vunpack.c.l.b16 %v2372
      %v2406 = vunpack.c.l.b16 %v2373
      %v2407 = vunpack.c.l.b16 %v2374
      %v2408 = vunpack.c.l.b16 %v2375
      %v2409 = vunpack.c.l.b16 %v2376
      %v2410 = vunpack.c.l.b16 %v2377
      %v2411 = vunpack.c.l.b16 %v2378
      %v2412 = vunpack.c.l.b16 %v2379
      %v2413 = vunpack.c.l.b16 %v2380
      %v2414 = vunpack.c.l.b16 %v2381
      %v2415 = vunpack.c.l.b16 %v2382
      %v2416 = vunpack.c.l.b16 %v2383
      %v2417 = vunpack.c.l.b16 %v2384
      %v2418 = vpack.c.b16 %v2403, %v2402
      %v2419 = vpack.c.b16 %v2405, %v2404
      %v2420 = vpack.c.b16 %v2407, %v2406
      %v2421 = vpack.c.b16 %v2409, %v2408
      %v2422 = vpack.c.b16 %v2411, %v2410
      %v2423 = vpack.c.b16 %v2413, %v2412
      %v2424 = vpack.c.b16 %v2415, %v2414
      %v2425 = vpack.c.b16 %v2417, %v2416
      %2434 = vmatprep.subr.bf16.mxu0 0
      %2435 = vmatpush1.bf16.msra.mxu0 %v2418
      %2436 = vmatprep.subr.bf16.mxu0 0
      %2437 = vmatpush1.bf16.msra.mxu0 %v2419
      %2438 = vmatprep.subr.bf16.mxu0 0
      %2439 = vmatpush1.bf16.msra.mxu0 %v2420
      %2440 = vmatprep.subr.bf16.mxu0 0
      %2441 = vmatpush1.bf16.msra.mxu0 %v2421
      %2442 = vmatprep.subr.bf16.mxu0 0
      %2443 = vmatpush1.bf16.msra.mxu0 %v2422
      %2444 = vmatprep.subr.bf16.mxu0 0
      %2445 = vmatpush1.bf16.msra.mxu0 %v2423
      %2446 = vmatprep.subr.bf16.mxu0 0
      %2447 = vmatpush1.bf16.msra.mxu0 %v2424
      %2448 = vmatprep.subr.bf16.mxu0 0
      %2449 = vmatpush1.bf16.msra.mxu0 %v2425
      %2450 = vmatprep.subr.bf16.mxu0 0
      %2451 = vmatpush1.bf16.msra.mxu0 0
      %2452 = vmatprep.subr.bf16.mxu0 0
      %2453 = vmatpush1.bf16.msra.mxu0 0
      %2454 = vmatprep.subr.bf16.mxu0 0
      %2455 = vmatpush1.bf16.msra.mxu0 0
      %2456 = vmatprep.subr.bf16.mxu0 0
      %2457 = vmatpush1.bf16.msra.mxu0 0
      %2458 = vmatprep.subr.bf16.mxu0 0
      %2459 = vmatpush1.bf16.msra.mxu0 0
      %2460 = vmatprep.subr.bf16.mxu0 0
      %2461 = vmatpush1.bf16.msra.mxu0 0
      %2462 = vmatprep.subr.bf16.mxu0 0
      %2463 = vmatpush1.bf16.msra.mxu0 0
      %2464 = vmatprep.subr.bf16.mxu0 0
      %2465 = vmatpush1.bf16.msra.mxu0 0
      %2466 = vmatprep.mubr.bf16.mxu0 0
      %2467 = vmatmul.mubr.bf16.gmra.mrb[0].mxu0 %v2142
      %v2468 = vpop.f32.mrb[0].mxu0
      %v2469 = vadd.f32 %v2385, %v2468
      %v2470 = vpop.f32.mrb[0].mxu0
      %v2471 = vpop.f32.mrb[0].mxu0
      %v2472 = vadd.f32 %v2385, %v2471
      %v2473 = vpop.f32.mrb[0].mxu0
      %2474 = vmatprep.mubr.bf16.mxu0 0
      %2475 = vmatmul.mubr.bf16.gmra.mrb[0].mxu0 %v2143
      %v2476 = vpop.f32.mrb[0].mxu0
      %v2477 = vadd.f32 %v2385, %v2476
      %v2478 = vpop.f32.mrb[0].mxu0
      %v2479 = vpop.f32.mrb[0].mxu0
      %v2480 = vadd.f32 %v2385, %v2479
      %v2481 = vpop.f32.mrb[0].mxu0
      %2482 = vmatprep.mubr.bf16.mxu0 0
      %2483 = vmatmul.mubr.bf16.gmra.mrb[0].mxu0 %v2144
      %v2484 = vpop.f32.mrb[0].mxu0
      %v2485 = vadd.f32 %v2385, %v2484
      %v2486 = vpop.f32.mrb[0].mxu0
      %v2487 = vpop.f32.mrb[0].mxu0
      %v2488 = vadd.f32 %v2385, %v2487
      %v2489 = vpop.f32.mrb[0].mxu0
      %2490 = vmatprep.mubr.bf16.mxu0 0
      %2491 = vmatmul.mubr.bf16.gmra.mrb[0].mxu0 %v2145
      %v2492 = vpop.f32.mrb[0].mxu0
      %v2493 = vadd.f32 %v2385, %v2492
      %v2494 = vpop.f32.mrb[0].mxu0
      %v2495 = vpop.f32.mrb[0].mxu0
      %v2496 = vadd.f32 %v2385, %v2495
      %v2497 = vpop.f32.mrb[0].mxu0
      %2498 = vmatprep.mubr.bf16.mxu0 0
      %2499 = vmatmul.mubr.bf16.gmra.mrb[0].mxu0 %v2146
      %v2500 = vpop.f32.mrb[0].mxu0
      %v2501 = vadd.f32 %v2385, %v2500
      %v2502 = vpop.f32.mrb[0].mxu0
      %v2503 = vpop.f32.mrb[0].mxu0
      %v2504 = vadd.f32 %v2385, %v2503
      %v2505 = vpop.f32.mrb[0].mxu0
      %2506 = vmatprep.mubr.bf16.mxu0 0
      %2507 = vmatmul.mubr.bf16.gmra.mrb[0].mxu0 %v2147
      %v2508 = vpop.f32.mrb[0].mxu0
      %v2509 = vadd.f32 %v2385, %v2508
      %v2510 = vpop.f32.mrb[0].mxu0
      %v2511 = vpop.f32.mrb[0].mxu0
      %v2512 = vadd.f32 %v2385, %v2511
      %v2513 = vpop.f32.mrb[0].mxu0
      %2514 = vmatprep.mubr.bf16.mxu0 0
      %2515 = vmatmul.mubr.bf16.gmra.mrb[0].mxu0 %v2148
      %v2516 = vpop.f32.mrb[0].mxu0
      %v2517 = vadd.f32 %v2385, %v2516
      %v2518 = vpop.f32.mrb[0].mxu0
      %v2519 = vpop.f32.mrb[0].mxu0
      %v2520 = vadd.f32 %v2385, %v2519
      %v2521 = vpop.f32.mrb[0].mxu0
      %2522 = vmatprep.mubr.bf16.mxu0 0
      %2523 = vmatmul.mubr.bf16.gmra.mrb[0].mxu0 %v2149
      %v2524 = vpop.f32.mrb[0].mxu0
      %v2525 = vadd.f32 %v2385, %v2524
      %v2526 = vpop.f32.mrb[0].mxu0
      %v2527 = vpop.f32.mrb[0].mxu0
      %v2528 = vadd.f32 %v2385, %v2527
      %v2529 = vpop.f32.mrb[0].mxu0
      %2530 = vmatprep.mubr.bf16.mxu0 0
      %2531 = vmatmul.mubr.bf16.gmra.mrb[0].mxu0 %v2150
      %v2532 = vpop.f32.mrb[0].mxu0
      %v2533 = vadd.f32 %v2385, %v2532
      %v2534 = vpop.f32.mrb[0].mxu0
      %v2535 = vpop.f32.mrb[0].mxu0
      %v2536 = vadd.f32 %v2385, %v2535
      %v2537 = vpop.f32.mrb[0].mxu0
      %2538 = vmatprep.mubr.bf16.mxu0 0
      %2539 = vmatmul.mubr.bf16.gmra.mrb[0].mxu0 %v2151
      %v2540 = vpop.f32.mrb[0].mxu0
      %v2541 = vadd.f32 %v2385, %v2540
      %v2542 = vpop.f32.mrb[0].mxu0
      %v2543 = vpop.f32.mrb[0].mxu0
      %v2544 = vadd.f32 %v2385, %v2543
      %v2545 = vpop.f32.mrb[0].mxu0
      %2546 = vmatprep.mubr.bf16.mxu0 0
      %2547 = vmatmul.mubr.bf16.gmra.mrb[0].mxu0 %v2152
      %v2548 = vpop.f32.mrb[0].mxu0
      %v2549 = vadd.f32 %v2385, %v2548
      %v2550 = vpop.f32.mrb[0].mxu0
      %v2551 = vpop.f32.mrb[0].mxu0
      %v2552 = vadd.f32 %v2385, %v2551
      %v2553 = vpop.f32.mrb[0].mxu0
      %2554 = vmatprep.mubr.bf16.mxu0 0
      %2555 = vmatmul.mubr.bf16.gmra.mrb[0].mxu0 %v2153
      %v2556 = vpop.f32.mrb[0].mxu0
      %v2557 = vadd.f32 %v2385, %v2556
      %v2558 = vpop.f32.mrb[0].mxu0
      %v2559 = vpop.f32.mrb[0].mxu0
      %v2560 = vadd.f32 %v2385, %v2559
      %v2561 = vpop.f32.mrb[0].mxu0
      %2562 = vmatprep.mubr.bf16.mxu0 0
      %2563 = vmatmul.mubr.bf16.gmra.mrb[0].mxu0 %v2154
      %v2564 = vpop.f32.mrb[0].mxu0
      %v2565 = vadd.f32 %v2385, %v2564
      %v2566 = vpop.f32.mrb[0].mxu0
      %v2567 = vpop.f32.mrb[0].mxu0
      %v2568 = vadd.f32 %v2385, %v2567
      %v2569 = vpop.f32.mrb[0].mxu0
      %2570 = vmatprep.mubr.bf16.mxu0 0
      %2571 = vmatmul.mubr.bf16.gmra.mrb[0].mxu0 %v2155
      %v2572 = vpop.f32.mrb[0].mxu0
      %v2573 = vadd.f32 %v2385, %v2572
      %v2574 = vpop.f32.mrb[0].mxu0
      %v2575 = vpop.f32.mrb[0].mxu0
      %v2576 = vadd.f32 %v2385, %v2575
      %v2577 = vpop.f32.mrb[0].mxu0
      %2578 = vmatprep.mubr.bf16.mxu0 0
      %2579 = vmatmul.mubr.bf16.gmra.mrb[0].mxu0 %v2156
      %v2580 = vpop.f32.mrb[0].mxu0
      %v2581 = vadd.f32 %v2385, %v2580
      %v2582 = vpop.f32.mrb[0].mxu0
      %v2583 = vpop.f32.mrb[0].mxu0
      %v2584 = vadd.f32 %v2385, %v2583
      %v2585 = vpop.f32.mrb[0].mxu0
      %2586 = vmatprep.mubr.bf16.mxu0 0
      %2587 = vmatmul.mubr.bf16.gmra.mrb[0].mxu0 %v2157
      %v2588 = vpop.f32.mrb[0].mxu0
      %v2589 = vadd.f32 %v2385, %v2588
      %v2590 = vpop.f32.mrb[0].mxu0
      %v2591 = vpop.f32.mrb[0].mxu0
      %v2592 = vadd.f32 %v2385, %v2591
      %v2593 = vpop.f32.mrb[0].mxu0
      %2594 = vdwg.mxu0
      %vm2595 = vcmp.gt.f32.partialorder %v2469, 0.0
      %vm2596 = vcmp.gt.f32.partialorder %v2472, 0.0
      %vm2597 = vcmp.gt.f32.partialorder %v2477, 0.0
      %vm2598 = vcmp.gt.f32.partialorder %v2480, 0.0
      %vm2599 = vcmp.gt.f32.partialorder %v2485, 0.0
      %vm2600 = vcmp.gt.f32.partialorder %v2488, 0.0
      %vm2601 = vcmp.gt.f32.partialorder %v2493, 0.0
      %vm2602 = vcmp.gt.f32.partialorder %v2496, 0.0
      %vm2603 = vcmp.gt.f32.partialorder %v2501, 0.0
      %vm2604 = vcmp.gt.f32.partialorder %v2504, 0.0
      %vm2605 = vcmp.gt.f32.partialorder %v2509, 0.0
      %vm2606 = vcmp.gt.f32.partialorder %v2512, 0.0
      %vm2607 = vcmp.gt.f32.partialorder %v2517, 0.0
      %vm2608 = vcmp.gt.f32.partialorder %v2520, 0.0
      %vm2609 = vcmp.gt.f32.partialorder %v2525, 0.0
      %vm2610 = vcmp.gt.f32.partialorder %v2528, 0.0
      %vm2611 = vcmp.gt.f32.partialorder %v2533, 0.0
      %vm2612 = vcmp.gt.f32.partialorder %v2536, 0.0
      %vm2613 = vcmp.gt.f32.partialorder %v2541, 0.0
      %vm2614 = vcmp.gt.f32.partialorder %v2544, 0.0
      %vm2615 = vcmp.gt.f32.partialorder %v2549, 0.0
      %vm2616 = vcmp.gt.f32.partialorder %v2552, 0.0
      %vm2617 = vcmp.gt.f32.partialorder %v2557, 0.0
      %vm2618 = vcmp.gt.f32.partialorder %v2560, 0.0
      %vm2619 = vcmp.gt.f32.partialorder %v2565, 0.0
      %vm2620 = vcmp.gt.f32.partialorder %v2568, 0.0
      %vm2621 = vcmp.gt.f32.partialorder %v2573, 0.0
      %vm2622 = vcmp.gt.f32.partialorder %v2576, 0.0
      %vm2623 = vcmp.gt.f32.partialorder %v2581, 0.0
      %vm2624 = vcmp.gt.f32.partialorder %v2584, 0.0
      %vm2625 = vcmp.gt.f32.partialorder %v2589, 0.0
      %vm2626 = vcmp.gt.f32.partialorder %v2592, 0.0
      %v2627 = vmul.f32 %v2469, 0.01
      %v2628 = vmul.f32 %v2472, 0.01
      %v2629 = vmul.f32 %v2477, 0.01
      %v2630 = vmul.f32 %v2480, 0.01
      %v2631 = vmul.f32 %v2485, 0.01
      %v2632 = vmul.f32 %v2488, 0.01
      %v2633 = vmul.f32 %v2493, 0.01
      %v2634 = vmul.f32 %v2496, 0.01
      %v2635 = vmul.f32 %v2501, 0.01
      %v2636 = vmul.f32 %v2504, 0.01
      %v2637 = vmul.f32 %v2509, 0.01
      %v2638 = vmul.f32 %v2512, 0.01
      %v2639 = vmul.f32 %v2517, 0.01
      %v2640 = vmul.f32 %v2520, 0.01
      %v2641 = vmul.f32 %v2525, 0.01
      %v2642 = vmul.f32 %v2528, 0.01
      %v2643 = vmul.f32 %v2533, 0.01
      %v2644 = vmul.f32 %v2536, 0.01
      %v2645 = vmul.f32 %v2541, 0.01
      %v2646 = vmul.f32 %v2544, 0.01
      %v2647 = vmul.f32 %v2549, 0.01
      %v2648 = vmul.f32 %v2552, 0.01
      %v2649 = vmul.f32 %v2557, 0.01
      %v2650 = vmul.f32 %v2560, 0.01
      %v2651 = vmul.f32 %v2565, 0.01
      %v2652 = vmul.f32 %v2568, 0.01
      %v2653 = vmul.f32 %v2573, 0.01
      %v2654 = vmul.f32 %v2576, 0.01
      %v2655 = vmul.f32 %v2581, 0.01
      %v2656 = vmul.f32 %v2584, 0.01
      %v2657 = vmul.f32 %v2589, 0.01
      %v2658 = vmul.f32 %v2592, 0.01
      %v2659 = vsel %vm2595, %v2469, %v2627
      %v2660 = vsel %vm2596, %v2472, %v2628
      %v2661 = vsel %vm2597, %v2477, %v2629
      %v2662 = vsel %vm2598, %v2480, %v2630
      %v2663 = vsel %vm2599, %v2485, %v2631
      %v2664 = vsel %vm2600, %v2488, %v2632
      %v2665 = vsel %vm2601, %v2493, %v2633
      %v2666 = vsel %vm2602, %v2496, %v2634
      %v2667 = vsel %vm2603, %v2501, %v2635
      %v2668 = vsel %vm2604, %v2504, %v2636
      %v2669 = vsel %vm2605, %v2509, %v2637
      %v2670 = vsel %vm2606, %v2512, %v2638
      %v2671 = vsel %vm2607, %v2517, %v2639
      %v2672 = vsel %vm2608, %v2520, %v2640
      %v2673 = vsel %vm2609, %v2525, %v2641
      %v2674 = vsel %vm2610, %v2528, %v2642
      %v2675 = vsel %vm2611, %v2533, %v2643
      %v2676 = vsel %vm2612, %v2536, %v2644
      %v2677 = vsel %vm2613, %v2541, %v2645
      %v2678 = vsel %vm2614, %v2544, %v2646
      %v2679 = vsel %vm2615, %v2549, %v2647
      %v2680 = vsel %vm2616, %v2552, %v2648
      %v2681 = vsel %vm2617, %v2557, %v2649
      %v2682 = vsel %vm2618, %v2560, %v2650
      %v2683 = vsel %vm2619, %v2565, %v2651
      %v2684 = vsel %vm2620, %v2568, %v2652
      %v2685 = vsel %vm2621, %v2573, %v2653
      %v2686 = vsel %vm2622, %v2576, %v2654
      %v2687 = vsel %vm2623, %v2581, %v2655
      %v2688 = vsel %vm2624, %v2584, %v2656
      %v2689 = vsel %vm2625, %v2589, %v2657
      %v2690 = vsel %vm2626, %v2592, %v2658
      %s2691 = scalar_lea.vmem %s1, 320
      %v2692 = vld [vmem:[%s2691] sm:$0xf]
      %v2693 = vld [vmem:[%s2691 + $0x4] sm:$0xf]
      %v2694 = vld [vmem:[%s2691 + $0x8] sm:$0xf]
      %v2695 = vld [vmem:[%s2691 + $0xc] sm:$0xf]
      %v2696 = vld [vmem:[%s2691 + $0x10] sm:$0xf]
      %v2697 = vld [vmem:[%s2691 + $0x14] sm:$0xf]
      %v2698 = vld [vmem:[%s2691 + $0x18] sm:$0xf]
      %v2699 = vld [vmem:[%s2691 + $0x1c] sm:$0xf]
      %v2700 = vld [vmem:[%s2691 + $0x20] sm:$0xf]
      %v2701 = vld [vmem:[%s2691 + $0x24] sm:$0xf]
      %v2702 = vld [vmem:[%s2691 + $0x28] sm:$0xf]
      %v2703 = vld [vmem:[%s2691 + $0x2c] sm:$0xf]
      %v2704 = vld [vmem:[%s2691 + $0x30] sm:$0xf]
      %v2705 = vld [vmem:[%s2691 + $0x34] sm:$0xf]
      %v2706 = vld [vmem:[%s2691 + $0x38] sm:$0xf]
      %v2707 = vld [vmem:[%s2691 + $0x3c] sm:$0xf]
      %v2708 = vpack.c.bf16 %v2660, %v2659
      %v2709 = vpack.c.bf16 %v2662, %v2661
      %v2710 = vpack.c.bf16 %v2664, %v2663
      %v2711 = vpack.c.bf16 %v2666, %v2665
      %v2712 = vpack.c.bf16 %v2668, %v2667
      %v2713 = vpack.c.bf16 %v2670, %v2669
      %v2714 = vpack.c.bf16 %v2672, %v2671
      %v2715 = vpack.c.bf16 %v2674, %v2673
      %v2716 = vpack.c.bf16 %v2676, %v2675
      %v2717 = vpack.c.bf16 %v2678, %v2677
      %v2718 = vpack.c.bf16 %v2680, %v2679
      %v2719 = vpack.c.bf16 %v2682, %v2681
      %v2720 = vpack.c.bf16 %v2684, %v2683
      %v2721 = vpack.c.bf16 %v2686, %v2685
      %v2722 = vpack.c.bf16 %v2688, %v2687
      %v2723 = vpack.c.bf16 %v2690, %v2689
      %v2724 = vld [vmem:[%s2 + $0x10] ss:$0 sm:$0xff]
      %v2741 = vunpack.c.l.b16 %v2692
      %v2742 = vunpack.c.l.b16 %v2693
      %v2743 = vunpack.c.l.b16 %v2694
      %v2744 = vunpack.c.l.b16 %v2695
      %v2745 = vunpack.c.l.b16 %v2696
      %v2746 = vunpack.c.l.b16 %v2697
      %v2747 = vunpack.c.l.b16 %v2698
      %v2748 = vunpack.c.l.b16 %v2699
      %v2749 = vunpack.c.l.b16 %v2700
      %v2750 = vunpack.c.l.b16 %v2701
      %v2751 = vunpack.c.l.b16 %v2702
      %v2752 = vunpack.c.l.b16 %v2703
      %v2753 = vunpack.c.l.b16 %v2704
      %v2754 = vunpack.c.l.b16 %v2705
      %v2755 = vunpack.c.l.b16 %v2706
      %v2756 = vunpack.c.l.b16 %v2707
      %v2757 = vpack.c.b16 %v2742, %v2741
      %v2758 = vpack.c.b16 %v2744, %v2743
      %v2759 = vpack.c.b16 %v2746, %v2745
      %v2760 = vpack.c.b16 %v2748, %v2747
      %v2761 = vpack.c.b16 %v2750, %v2749
      %v2762 = vpack.c.b16 %v2752, %v2751
      %v2763 = vpack.c.b16 %v2754, %v2753
      %v2764 = vpack.c.b16 %v2756, %v2755
      %2773 = vmatprep.subr.bf16.mxu0 0
      %2774 = vmatpush1.bf16.msra.mxu0 %v2757
      %2775 = vmatprep.subr.bf16.mxu0 0
      %2776 = vmatpush1.bf16.msra.mxu0 %v2758
      %2777 = vmatprep.subr.bf16.mxu0 0
      %2778 = vmatpush1.bf16.msra.mxu0 %v2759
      %2779 = vmatprep.subr.bf16.mxu0 0
      %2780 = vmatpush1.bf16.msra.mxu0 %v2760
      %2781 = vmatprep.subr.bf16.mxu0 0
      %2782 = vmatpush1.bf16.msra.mxu0 %v2761
      %2783 = vmatprep.subr.bf16.mxu0 0
      %2784 = vmatpush1.bf16.msra.mxu0 %v2762
      %2785 = vmatprep.subr.bf16.mxu0 0
      %2786 = vmatpush1.bf16.msra.mxu0 %v2763
      %2787 = vmatprep.subr.bf16.mxu0 0
      %2788 = vmatpush1.bf16.msra.mxu0 %v2764
      %2789 = vmatprep.subr.bf16.mxu0 0
      %2790 = vmatpush1.bf16.msra.mxu0 0
      %2791 = vmatprep.subr.bf16.mxu0 0
      %2792 = vmatpush1.bf16.msra.mxu0 0
      %2793 = vmatprep.subr.bf16.mxu0 0
      %2794 = vmatpush1.bf16.msra.mxu0 0
      %2795 = vmatprep.subr.bf16.mxu0 0
      %2796 = vmatpush1.bf16.msra.mxu0 0
      %2797 = vmatprep.subr.bf16.mxu0 0
      %2798 = vmatpush1.bf16.msra.mxu0 0
      %2799 = vmatprep.subr.bf16.mxu0 0
      %2800 = vmatpush1.bf16.msra.mxu0 0
      %2801 = vmatprep.subr.bf16.mxu0 0
      %2802 = vmatpush1.bf16.msra.mxu0 0
      %2803 = vmatprep.subr.bf16.mxu0 0
      %2804 = vmatpush1.bf16.msra.mxu0 0
      %2805 = vmatprep.mubr.bf16.mxu0 0
      %2806 = vmatmul.mubr.bf16.gmra.mrb[0].mxu0 %v2708
      %v2807 = vpop.f32.mrb[0].mxu0
      %v2808 = vadd.f32 %v2724, %v2807
      %v2809 = vpop.f32.mrb[0].mxu0
      %v2810 = vpop.f32.mrb[0].mxu0
      %v2811 = vadd.f32 %v2724, %v2810
      %v2812 = vpop.f32.mrb[0].mxu0
      %2813 = vmatprep.mubr.bf16.mxu0 0
      %2814 = vmatmul.mubr.bf16.gmra.mrb[0].mxu0 %v2709
      %v2815 = vpop.f32.mrb[0].mxu0
      %v2816 = vadd.f32 %v2724, %v2815
      %v2817 = vpop.f32.mrb[0].mxu0
      %v2818 = vpop.f32.mrb[0].mxu0
      %v2819 = vadd.f32 %v2724, %v2818
      %v2820 = vpop.f32.mrb[0].mxu0
      %2821 = vmatprep.mubr.bf16.mxu0 0
      %2822 = vmatmul.mubr.bf16.gmra.mrb[0].mxu0 %v2710
      %v2823 = vpop.f32.mrb[0].mxu0
      %v2824 = vadd.f32 %v2724, %v2823
      %v2825 = vpop.f32.mrb[0].mxu0
      %v2826 = vpop.f32.mrb[0].mxu0
      %v2827 = vadd.f32 %v2724, %v2826
      %v2828 = vpop.f32.mrb[0].mxu0
      %2829 = vmatprep.mubr.bf16.mxu0 0
      %2830 = vmatmul.mubr.bf16.gmra.mrb[0].mxu0 %v2711
      %v2831 = vpop.f32.mrb[0].mxu0
      %v2832 = vadd.f32 %v2724, %v2831
      %v2833 = vpop.f32.mrb[0].mxu0
      %v2834 = vpop.f32.mrb[0].mxu0
      %v2835 = vadd.f32 %v2724, %v2834
      %v2836 = vpop.f32.mrb[0].mxu0
      %2837 = vmatprep.mubr.bf16.mxu0 0
      %2838 = vmatmul.mubr.bf16.gmra.mrb[0].mxu0 %v2712
      %v2839 = vpop.f32.mrb[0].mxu0
      %v2840 = vadd.f32 %v2724, %v2839
      %v2841 = vpop.f32.mrb[0].mxu0
      %v2842 = vpop.f32.mrb[0].mxu0
      %v2843 = vadd.f32 %v2724, %v2842
      %v2844 = vpop.f32.mrb[0].mxu0
      %2845 = vmatprep.mubr.bf16.mxu0 0
      %2846 = vmatmul.mubr.bf16.gmra.mrb[0].mxu0 %v2713
      %v2847 = vpop.f32.mrb[0].mxu0
      %v2848 = vadd.f32 %v2724, %v2847
      %v2849 = vpop.f32.mrb[0].mxu0
      %v2850 = vpop.f32.mrb[0].mxu0
      %v2851 = vadd.f32 %v2724, %v2850
      %v2852 = vpop.f32.mrb[0].mxu0
      %2853 = vmatprep.mubr.bf16.mxu0 0
      %2854 = vmatmul.mubr.bf16.gmra.mrb[0].mxu0 %v2714
      %v2855 = vpop.f32.mrb[0].mxu0
      %v2856 = vadd.f32 %v2724, %v2855
      %v2857 = vpop.f32.mrb[0].mxu0
      %v2858 = vpop.f32.mrb[0].mxu0
      %v2859 = vadd.f32 %v2724, %v2858
      %v2860 = vpop.f32.mrb[0].mxu0
      %2861 = vmatprep.mubr.bf16.mxu0 0
      %2862 = vmatmul.mubr.bf16.gmra.mrb[0].mxu0 %v2715
      %v2863 = vpop.f32.mrb[0].mxu0
      %v2864 = vadd.f32 %v2724, %v2863
      %v2865 = vpop.f32.mrb[0].mxu0
      %v2866 = vpop.f32.mrb[0].mxu0
      %v2867 = vadd.f32 %v2724, %v2866
      %v2868 = vpop.f32.mrb[0].mxu0
      %2869 = vmatprep.mubr.bf16.mxu0 0
      %2870 = vmatmul.mubr.bf16.gmra.mrb[0].mxu0 %v2716
      %v2871 = vpop.f32.mrb[0].mxu0
      %v2872 = vadd.f32 %v2724, %v2871
      %v2873 = vpop.f32.mrb[0].mxu0
      %v2874 = vpop.f32.mrb[0].mxu0
      %v2875 = vadd.f32 %v2724, %v2874
      %v2876 = vpop.f32.mrb[0].mxu0
      %2877 = vmatprep.mubr.bf16.mxu0 0
      %2878 = vmatmul.mubr.bf16.gmra.mrb[0].mxu0 %v2717
      %v2879 = vpop.f32.mrb[0].mxu0
      %v2880 = vadd.f32 %v2724, %v2879
      %v2881 = vpop.f32.mrb[0].mxu0
      %v2882 = vpop.f32.mrb[0].mxu0
      %v2883 = vadd.f32 %v2724, %v2882
      %v2884 = vpop.f32.mrb[0].mxu0
      %2885 = vmatprep.mubr.bf16.mxu0 0
      %2886 = vmatmul.mubr.bf16.gmra.mrb[0].mxu0 %v2718
      %v2887 = vpop.f32.mrb[0].mxu0
      %v2888 = vadd.f32 %v2724, %v2887
      %v2889 = vpop.f32.mrb[0].mxu0
      %v2890 = vpop.f32.mrb[0].mxu0
      %v2891 = vadd.f32 %v2724, %v2890
      %v2892 = vpop.f32.mrb[0].mxu0
      %2893 = vmatprep.mubr.bf16.mxu0 0
      %2894 = vmatmul.mubr.bf16.gmra.mrb[0].mxu0 %v2719
      %v2895 = vpop.f32.mrb[0].mxu0
      %v2896 = vadd.f32 %v2724, %v2895
      %v2897 = vpop.f32.mrb[0].mxu0
      %v2898 = vpop.f32.mrb[0].mxu0
      %v2899 = vadd.f32 %v2724, %v2898
      %v2900 = vpop.f32.mrb[0].mxu0
      %2901 = vmatprep.mubr.bf16.mxu0 0
      %2902 = vmatmul.mubr.bf16.gmra.mrb[0].mxu0 %v2720
      %v2903 = vpop.f32.mrb[0].mxu0
      %v2904 = vadd.f32 %v2724, %v2903
      %v2905 = vpop.f32.mrb[0].mxu0
      %v2906 = vpop.f32.mrb[0].mxu0
      %v2907 = vadd.f32 %v2724, %v2906
      %v2908 = vpop.f32.mrb[0].mxu0
      %2909 = vmatprep.mubr.bf16.mxu0 0
      %2910 = vmatmul.mubr.bf16.gmra.mrb[0].mxu0 %v2721
      %v2911 = vpop.f32.mrb[0].mxu0
      %v2912 = vadd.f32 %v2724, %v2911
      %v2913 = vpop.f32.mrb[0].mxu0
      %v2914 = vpop.f32.mrb[0].mxu0
      %v2915 = vadd.f32 %v2724, %v2914
      %v2916 = vpop.f32.mrb[0].mxu0
      %2917 = vmatprep.mubr.bf16.mxu0 0
      %2918 = vmatmul.mubr.bf16.gmra.mrb[0].mxu0 %v2722
      %v2919 = vpop.f32.mrb[0].mxu0
      %v2920 = vadd.f32 %v2724, %v2919
      %v2921 = vpop.f32.mrb[0].mxu0
      %v2922 = vpop.f32.mrb[0].mxu0
      %v2923 = vadd.f32 %v2724, %v2922
      %v2924 = vpop.f32.mrb[0].mxu0
      %2925 = vmatprep.mubr.bf16.mxu0 0
      %2926 = vmatmul.mubr.bf16.gmra.mrb[0].mxu0 %v2723
      %v2927 = vpop.f32.mrb[0].mxu0
      %v2928 = vadd.f32 %v2724, %v2927
      %v2929 = vpop.f32.mrb[0].mxu0
      %v2930 = vpop.f32.mrb[0].mxu0
      %v2931 = vadd.f32 %v2724, %v2930
      %v2932 = vpop.f32.mrb[0].mxu0
      %2933 = vdwg.mxu0
      %v2934 = vadd.f32 %v2808, %v2242
      %v2935 = vadd.f32 %v2811, %v2245
      %v2936 = vadd.f32 %v2816, %v2250
      %v2937 = vadd.f32 %v2819, %v2253
      %v2938 = vadd.f32 %v2824, %v2258
      %v2939 = vadd.f32 %v2827, %v2261
      %v2940 = vadd.f32 %v2832, %v2266
      %v2941 = vadd.f32 %v2835, %v2269
      %v2942 = vadd.f32 %v2840, %v2274
      %v2943 = vadd.f32 %v2843, %v2277
      %v2944 = vadd.f32 %v2848, %v2282
      %v2945 = vadd.f32 %v2851, %v2285
      %v2946 = vadd.f32 %v2856, %v2290
      %v2947 = vadd.f32 %v2859, %v2293
      %v2948 = vadd.f32 %v2864, %v2298
      %v2949 = vadd.f32 %v2867, %v2301
      %v2950 = vadd.f32 %v2872, %v2306
      %v2951 = vadd.f32 %v2875, %v2309
      %v2952 = vadd.f32 %v2880, %v2314
      %v2953 = vadd.f32 %v2883, %v2317
      %v2954 = vadd.f32 %v2888, %v2322
      %v2955 = vadd.f32 %v2891, %v2325
      %v2956 = vadd.f32 %v2896, %v2330
      %v2957 = vadd.f32 %v2899, %v2333
      %v2958 = vadd.f32 %v2904, %v2338
      %v2959 = vadd.f32 %v2907, %v2341
      %v2960 = vadd.f32 %v2912, %v2346
      %v2961 = vadd.f32 %v2915, %v2349
      %v2962 = vadd.f32 %v2920, %v2354
      %v2963 = vadd.f32 %v2923, %v2357
      %v2964 = vadd.f32 %v2928, %v2362
      %v2965 = vadd.f32 %v2931, %v2365
      %s2966 = scalar_lea.vmem %s1, 384
      %v2967 = vld [vmem:[%s2966] sm:$0xf]
      %v2968 = vld [vmem:[%s2966 + $0x4] sm:$0xf]
      %v2969 = vld [vmem:[%s2966 + $0x8] sm:$0xf]
      %v2970 = vld [vmem:[%s2966 + $0xc] sm:$0xf]
      %v2971 = vld [vmem:[%s2966 + $0x10] sm:$0xf]
      %v2972 = vld [vmem:[%s2966 + $0x14] sm:$0xf]
      %v2973 = vld [vmem:[%s2966 + $0x18] sm:$0xf]
      %v2974 = vld [vmem:[%s2966 + $0x1c] sm:$0xf]
      %v2975 = vld [vmem:[%s2966 + $0x20] sm:$0xf]
      %v2976 = vld [vmem:[%s2966 + $0x24] sm:$0xf]
      %v2977 = vld [vmem:[%s2966 + $0x28] sm:$0xf]
      %v2978 = vld [vmem:[%s2966 + $0x2c] sm:$0xf]
      %v2979 = vld [vmem:[%s2966 + $0x30] sm:$0xf]
      %v2980 = vld [vmem:[%s2966 + $0x34] sm:$0xf]
      %v2981 = vld [vmem:[%s2966 + $0x38] sm:$0xf]
      %v2982 = vld [vmem:[%s2966 + $0x3c] sm:$0xf]
      %v2983 = vpack.c.bf16 %v2935, %v2934
      %v2984 = vpack.c.bf16 %v2937, %v2936
      %v2985 = vpack.c.bf16 %v2939, %v2938
      %v2986 = vpack.c.bf16 %v2941, %v2940
      %v2987 = vpack.c.bf16 %v2943, %v2942
      %v2988 = vpack.c.bf16 %v2945, %v2944
      %v2989 = vpack.c.bf16 %v2947, %v2946
      %v2990 = vpack.c.bf16 %v2949, %v2948
      %v2991 = vpack.c.bf16 %v2951, %v2950
      %v2992 = vpack.c.bf16 %v2953, %v2952
      %v2993 = vpack.c.bf16 %v2955, %v2954
      %v2994 = vpack.c.bf16 %v2957, %v2956
      %v2995 = vpack.c.bf16 %v2959, %v2958
      %v2996 = vpack.c.bf16 %v2961, %v2960
      %v2997 = vpack.c.bf16 %v2963, %v2962
      %v2998 = vpack.c.bf16 %v2965, %v2964
      %v2999 = vld [vmem:[%s2 + $0x11] ss:$0 sm:$0xff]
      %v3016 = vunpack.c.l.b16 %v2967
      %v3017 = vunpack.c.l.b16 %v2968
      %v3018 = vunpack.c.l.b16 %v2969
      %v3019 = vunpack.c.l.b16 %v2970
      %v3020 = vunpack.c.l.b16 %v2971
      %v3021 = vunpack.c.l.b16 %v2972
      %v3022 = vunpack.c.l.b16 %v2973
      %v3023 = vunpack.c.l.b16 %v2974
      %v3024 = vunpack.c.l.b16 %v2975
      %v3025 = vunpack.c.l.b16 %v2976
      %v3026 = vunpack.c.l.b16 %v2977
      %v3027 = vunpack.c.l.b16 %v2978
      %v3028 = vunpack.c.l.b16 %v2979
      %v3029 = vunpack.c.l.b16 %v2980
      %v3030 = vunpack.c.l.b16 %v2981
      %v3031 = vunpack.c.l.b16 %v2982
      %v3032 = vpack.c.b16 %v3017, %v3016
      %v3033 = vpack.c.b16 %v3019, %v3018
      %v3034 = vpack.c.b16 %v3021, %v3020
      %v3035 = vpack.c.b16 %v3023, %v3022
      %v3036 = vpack.c.b16 %v3025, %v3024
      %v3037 = vpack.c.b16 %v3027, %v3026
      %v3038 = vpack.c.b16 %v3029, %v3028
      %v3039 = vpack.c.b16 %v3031, %v3030
      %3048 = vmatprep.subr.bf16.mxu0 0
      %3049 = vmatpush1.bf16.msra.mxu0 %v3032
      %3050 = vmatprep.subr.bf16.mxu0 0
      %3051 = vmatpush1.bf16.msra.mxu0 %v3033
      %3052 = vmatprep.subr.bf16.mxu0 0
      %3053 = vmatpush1.bf16.msra.mxu0 %v3034
      %3054 = vmatprep.subr.bf16.mxu0 0
      %3055 = vmatpush1.bf16.msra.mxu0 %v3035
      %3056 = vmatprep.subr.bf16.mxu0 0
      %3057 = vmatpush1.bf16.msra.mxu0 %v3036
      %3058 = vmatprep.subr.bf16.mxu0 0
      %3059 = vmatpush1.bf16.msra.mxu0 %v3037
      %3060 = vmatprep.subr.bf16.mxu0 0
      %3061 = vmatpush1.bf16.msra.mxu0 %v3038
      %3062 = vmatprep.subr.bf16.mxu0 0
      %3063 = vmatpush1.bf16.msra.mxu0 %v3039
      %3064 = vmatprep.subr.bf16.mxu0 0
      %3065 = vmatpush1.bf16.msra.mxu0 0
      %3066 = vmatprep.subr.bf16.mxu0 0
      %3067 = vmatpush1.bf16.msra.mxu0 0
      %3068 = vmatprep.subr.bf16.mxu0 0
      %3069 = vmatpush1.bf16.msra.mxu0 0
      %3070 = vmatprep.subr.bf16.mxu0 0
      %3071 = vmatpush1.bf16.msra.mxu0 0
      %3072 = vmatprep.subr.bf16.mxu0 0
      %3073 = vmatpush1.bf16.msra.mxu0 0
      %3074 = vmatprep.subr.bf16.mxu0 0
      %3075 = vmatpush1.bf16.msra.mxu0 0
      %3076 = vmatprep.subr.bf16.mxu0 0
      %3077 = vmatpush1.bf16.msra.mxu0 0
      %3078 = vmatprep.subr.bf16.mxu0 0
      %3079 = vmatpush1.bf16.msra.mxu0 0
      %3080 = vmatprep.mubr.bf16.mxu0 0
      %3081 = vmatmul.mubr.bf16.gmra.mrb[0].mxu0 %v2983
      %v3082 = vpop.f32.mrb[0].mxu0
      %v3083 = vadd.f32 %v2999, %v3082
      %v3084 = vpop.f32.mrb[0].mxu0
      %v3085 = vpop.f32.mrb[0].mxu0
      %v3086 = vadd.f32 %v2999, %v3085
      %v3087 = vpop.f32.mrb[0].mxu0
      %3088 = vmatprep.mubr.bf16.mxu0 0
      %3089 = vmatmul.mubr.bf16.gmra.mrb[0].mxu0 %v2984
      %v3090 = vpop.f32.mrb[0].mxu0
      %v3091 = vadd.f32 %v2999, %v3090
      %v3092 = vpop.f32.mrb[0].mxu0
      %v3093 = vpop.f32.mrb[0].mxu0
      %v3094 = vadd.f32 %v2999, %v3093
      %v3095 = vpop.f32.mrb[0].mxu0
      %3096 = vmatprep.mubr.bf16.mxu0 0
      %3097 = vmatmul.mubr.bf16.gmra.mrb[0].mxu0 %v2985
      %v3098 = vpop.f32.mrb[0].mxu0
      %v3099 = vadd.f32 %v2999, %v3098
      %v3100 = vpop.f32.mrb[0].mxu0
      %v3101 = vpop.f32.mrb[0].mxu0
      %v3102 = vadd.f32 %v2999, %v3101
      %v3103 = vpop.f32.mrb[0].mxu0
      %3104 = vmatprep.mubr.bf16.mxu0 0
      %3105 = vmatmul.mubr.bf16.gmra.mrb[0].mxu0 %v2986
      %v3106 = vpop.f32.mrb[0].mxu0
      %v3107 = vadd.f32 %v2999, %v3106
      %v3108 = vpop.f32.mrb[0].mxu0
      %v3109 = vpop.f32.mrb[0].mxu0
      %v3110 = vadd.f32 %v2999, %v3109
      %v3111 = vpop.f32.mrb[0].mxu0
      %3112 = vmatprep.mubr.bf16.mxu0 0
      %3113 = vmatmul.mubr.bf16.gmra.mrb[0].mxu0 %v2987
      %v3114 = vpop.f32.mrb[0].mxu0
      %v3115 = vadd.f32 %v2999, %v3114
      %v3116 = vpop.f32.mrb[0].mxu0
      %v3117 = vpop.f32.mrb[0].mxu0
      %v3118 = vadd.f32 %v2999, %v3117
      %v3119 = vpop.f32.mrb[0].mxu0
      %3120 = vmatprep.mubr.bf16.mxu0 0
      %3121 = vmatmul.mubr.bf16.gmra.mrb[0].mxu0 %v2988
      %v3122 = vpop.f32.mrb[0].mxu0
      %v3123 = vadd.f32 %v2999, %v3122
      %v3124 = vpop.f32.mrb[0].mxu0
      %v3125 = vpop.f32.mrb[0].mxu0
      %v3126 = vadd.f32 %v2999, %v3125
      %v3127 = vpop.f32.mrb[0].mxu0
      %3128 = vmatprep.mubr.bf16.mxu0 0
      %3129 = vmatmul.mubr.bf16.gmra.mrb[0].mxu0 %v2989
      %v3130 = vpop.f32.mrb[0].mxu0
      %v3131 = vadd.f32 %v2999, %v3130
      %v3132 = vpop.f32.mrb[0].mxu0
      %v3133 = vpop.f32.mrb[0].mxu0
      %v3134 = vadd.f32 %v2999, %v3133
      %v3135 = vpop.f32.mrb[0].mxu0
      %3136 = vmatprep.mubr.bf16.mxu0 0
      %3137 = vmatmul.mubr.bf16.gmra.mrb[0].mxu0 %v2990
      %v3138 = vpop.f32.mrb[0].mxu0
      %v3139 = vadd.f32 %v2999, %v3138
      %v3140 = vpop.f32.mrb[0].mxu0
      %v3141 = vpop.f32.mrb[0].mxu0
      %v3142 = vadd.f32 %v2999, %v3141
      %v3143 = vpop.f32.mrb[0].mxu0
      %3144 = vmatprep.mubr.bf16.mxu0 0
      %3145 = vmatmul.mubr.bf16.gmra.mrb[0].mxu0 %v2991
      %v3146 = vpop.f32.mrb[0].mxu0
      %v3147 = vadd.f32 %v2999, %v3146
      %v3148 = vpop.f32.mrb[0].mxu0
      %v3149 = vpop.f32.mrb[0].mxu0
      %v3150 = vadd.f32 %v2999, %v3149
      %v3151 = vpop.f32.mrb[0].mxu0
      %3152 = vmatprep.mubr.bf16.mxu0 0
      %3153 = vmatmul.mubr.bf16.gmra.mrb[0].mxu0 %v2992
      %v3154 = vpop.f32.mrb[0].mxu0
      %v3155 = vadd.f32 %v2999, %v3154
      %v3156 = vpop.f32.mrb[0].mxu0
      %v3157 = vpop.f32.mrb[0].mxu0
      %v3158 = vadd.f32 %v2999, %v3157
      %v3159 = vpop.f32.mrb[0].mxu0
      %3160 = vmatprep.mubr.bf16.mxu0 0
      %3161 = vmatmul.mubr.bf16.gmra.mrb[0].mxu0 %v2993
      %v3162 = vpop.f32.mrb[0].mxu0
      %v3163 = vadd.f32 %v2999, %v3162
      %v3164 = vpop.f32.mrb[0].mxu0
      %v3165 = vpop.f32.mrb[0].mxu0
      %v3166 = vadd.f32 %v2999, %v3165
      %v3167 = vpop.f32.mrb[0].mxu0
      %3168 = vmatprep.mubr.bf16.mxu0 0
      %3169 = vmatmul.mubr.bf16.gmra.mrb[0].mxu0 %v2994
      %v3170 = vpop.f32.mrb[0].mxu0
      %v3171 = vadd.f32 %v2999, %v3170
      %v3172 = vpop.f32.mrb[0].mxu0
      %v3173 = vpop.f32.mrb[0].mxu0
      %v3174 = vadd.f32 %v2999, %v3173
      %v3175 = vpop.f32.mrb[0].mxu0
      %3176 = vmatprep.mubr.bf16.mxu0 0
      %3177 = vmatmul.mubr.bf16.gmra.mrb[0].mxu0 %v2995
      %v3178 = vpop.f32.mrb[0].mxu0
      %v3179 = vadd.f32 %v2999, %v3178
      %v3180 = vpop.f32.mrb[0].mxu0
      %v3181 = vpop.f32.mrb[0].mxu0
      %v3182 = vadd.f32 %v2999, %v3181
      %v3183 = vpop.f32.mrb[0].mxu0
      %3184 = vmatprep.mubr.bf16.mxu0 0
      %3185 = vmatmul.mubr.bf16.gmra.mrb[0].mxu0 %v2996
      %v3186 = vpop.f32.mrb[0].mxu0
      %v3187 = vadd.f32 %v2999, %v3186
      %v3188 = vpop.f32.mrb[0].mxu0
      %v3189 = vpop.f32.mrb[0].mxu0
      %v3190 = vadd.f32 %v2999, %v3189
      %v3191 = vpop.f32.mrb[0].mxu0
      %3192 = vmatprep.mubr.bf16.mxu0 0
      %3193 = vmatmul.mubr.bf16.gmra.mrb[0].mxu0 %v2997
      %v3194 = vpop.f32.mrb[0].mxu0
      %v3195 = vadd.f32 %v2999, %v3194
      %v3196 = vpop.f32.mrb[0].mxu0
      %v3197 = vpop.f32.mrb[0].mxu0
      %v3198 = vadd.f32 %v2999, %v3197
      %v3199 = vpop.f32.mrb[0].mxu0
      %3200 = vmatprep.mubr.bf16.mxu0 0
      %3201 = vmatmul.mubr.bf16.gmra.mrb[0].mxu0 %v2998
      %v3202 = vpop.f32.mrb[0].mxu0
      %v3203 = vadd.f32 %v2999, %v3202
      %v3204 = vpop.f32.mrb[0].mxu0
      %v3205 = vpop.f32.mrb[0].mxu0
      %v3206 = vadd.f32 %v2999, %v3205
      %v3207 = vpop.f32.mrb[0].mxu0
      %3208 = vdwg.mxu0
      %s3209 = scalar_lea.vmem %s1, 448
      %v3210 = vld [vmem:[%s3209] sm:$0xf]
      %v3211 = vld [vmem:[%s3209 + $0x4] sm:$0xf]
      %v3212 = vld [vmem:[%s3209 + $0x8] sm:$0xf]
      %v3213 = vld [vmem:[%s3209 + $0xc] sm:$0xf]
      %v3214 = vld [vmem:[%s3209 + $0x10] sm:$0xf]
      %v3215 = vld [vmem:[%s3209 + $0x14] sm:$0xf]
      %v3216 = vld [vmem:[%s3209 + $0x18] sm:$0xf]
      %v3217 = vld [vmem:[%s3209 + $0x1c] sm:$0xf]
      %v3218 = vld [vmem:[%s3209 + $0x20] sm:$0xf]
      %v3219 = vld [vmem:[%s3209 + $0x24] sm:$0xf]
      %v3220 = vld [vmem:[%s3209 + $0x28] sm:$0xf]
      %v3221 = vld [vmem:[%s3209 + $0x2c] sm:$0xf]
      %v3222 = vld [vmem:[%s3209 + $0x30] sm:$0xf]
      %v3223 = vld [vmem:[%s3209 + $0x34] sm:$0xf]
      %v3224 = vld [vmem:[%s3209 + $0x38] sm:$0xf]
      %v3225 = vld [vmem:[%s3209 + $0x3c] sm:$0xf]
      %v3226 = vld [vmem:[%s2 + $0x12] ss:$0 sm:$0xff]
      %v3243 = vunpack.c.l.b16 %v3210
      %v3244 = vunpack.c.l.b16 %v3211
      %v3245 = vunpack.c.l.b16 %v3212
      %v3246 = vunpack.c.l.b16 %v3213
      %v3247 = vunpack.c.l.b16 %v3214
      %v3248 = vunpack.c.l.b16 %v3215
      %v3249 = vunpack.c.l.b16 %v3216
      %v3250 = vunpack.c.l.b16 %v3217
      %v3251 = vunpack.c.l.b16 %v3218
      %v3252 = vunpack.c.l.b16 %v3219
      %v3253 = vunpack.c.l.b16 %v3220
      %v3254 = vunpack.c.l.b16 %v3221
      %v3255 = vunpack.c.l.b16 %v3222
      %v3256 = vunpack.c.l.b16 %v3223
      %v3257 = vunpack.c.l.b16 %v3224
      %v3258 = vunpack.c.l.b16 %v3225
      %v3259 = vpack.c.b16 %v3244, %v3243
      %v3260 = vpack.c.b16 %v3246, %v3245
      %v3261 = vpack.c.b16 %v3248, %v3247
      %v3262 = vpack.c.b16 %v3250, %v3249
      %v3263 = vpack.c.b16 %v3252, %v3251
      %v3264 = vpack.c.b16 %v3254, %v3253
      %v3265 = vpack.c.b16 %v3256, %v3255
      %v3266 = vpack.c.b16 %v3258, %v3257
      %3275 = vmatprep.subr.bf16.mxu0 0
      %3276 = vmatpush1.bf16.msra.mxu0 %v3259
      %3277 = vmatprep.subr.bf16.mxu0 0
      %3278 = vmatpush1.bf16.msra.mxu0 %v3260
      %3279 = vmatprep.subr.bf16.mxu0 0
      %3280 = vmatpush1.bf16.msra.mxu0 %v3261
      %3281 = vmatprep.subr.bf16.mxu0 0
      %3282 = vmatpush1.bf16.msra.mxu0 %v3262
      %3283 = vmatprep.subr.bf16.mxu0 0
      %3284 = vmatpush1.bf16.msra.mxu0 %v3263
      %3285 = vmatprep.subr.bf16.mxu0 0
      %3286 = vmatpush1.bf16.msra.mxu0 %v3264
      %3287 = vmatprep.subr.bf16.mxu0 0
      %3288 = vmatpush1.bf16.msra.mxu0 %v3265
      %3289 = vmatprep.subr.bf16.mxu0 0
      %3290 = vmatpush1.bf16.msra.mxu0 %v3266
      %3291 = vmatprep.subr.bf16.mxu0 0
      %3292 = vmatpush1.bf16.msra.mxu0 0
      %3293 = vmatprep.subr.bf16.mxu0 0
      %3294 = vmatpush1.bf16.msra.mxu0 0
      %3295 = vmatprep.subr.bf16.mxu0 0
      %3296 = vmatpush1.bf16.msra.mxu0 0
      %3297 = vmatprep.subr.bf16.mxu0 0
      %3298 = vmatpush1.bf16.msra.mxu0 0
      %3299 = vmatprep.subr.bf16.mxu0 0
      %3300 = vmatpush1.bf16.msra.mxu0 0
      %3301 = vmatprep.subr.bf16.mxu0 0
      %3302 = vmatpush1.bf16.msra.mxu0 0
      %3303 = vmatprep.subr.bf16.mxu0 0
      %3304 = vmatpush1.bf16.msra.mxu0 0
      %3305 = vmatprep.subr.bf16.mxu0 0
      %3306 = vmatpush1.bf16.msra.mxu0 0
      %3307 = vmatprep.mubr.bf16.mxu0 0
      %3308 = vmatmul.mubr.bf16.gmra.mrb[0].mxu0 %v2983
      %v3309 = vpop.f32.mrb[0].mxu0
      %v3310 = vadd.f32 %v3226, %v3309
      %v3311 = vpop.f32.mrb[0].mxu0
      %v3312 = vpop.f32.mrb[0].mxu0
      %v3313 = vadd.f32 %v3226, %v3312
      %v3314 = vpop.f32.mrb[0].mxu0
      %3315 = vmatprep.mubr.bf16.mxu0 0
      %3316 = vmatmul.mubr.bf16.gmra.mrb[0].mxu0 %v2984
      %v3317 = vpop.f32.mrb[0].mxu0
      %v3318 = vadd.f32 %v3226, %v3317
      %v3319 = vpop.f32.mrb[0].mxu0
      %v3320 = vpop.f32.mrb[0].mxu0
      %v3321 = vadd.f32 %v3226, %v3320
      %v3322 = vpop.f32.mrb[0].mxu0
      %3323 = vmatprep.mubr.bf16.mxu0 0
      %3324 = vmatmul.mubr.bf16.gmra.mrb[0].mxu0 %v2985
      %v3325 = vpop.f32.mrb[0].mxu0
      %v3326 = vadd.f32 %v3226, %v3325
      %v3327 = vpop.f32.mrb[0].mxu0
      %v3328 = vpop.f32.mrb[0].mxu0
      %v3329 = vadd.f32 %v3226, %v3328
      %v3330 = vpop.f32.mrb[0].mxu0
      %3331 = vmatprep.mubr.bf16.mxu0 0
      %3332 = vmatmul.mubr.bf16.gmra.mrb[0].mxu0 %v2986
      %v3333 = vpop.f32.mrb[0].mxu0
      %v3334 = vadd.f32 %v3226, %v3333
      %v3335 = vpop.f32.mrb[0].mxu0
      %v3336 = vpop.f32.mrb[0].mxu0
      %v3337 = vadd.f32 %v3226, %v3336
      %v3338 = vpop.f32.mrb[0].mxu0
      %3339 = vmatprep.mubr.bf16.mxu0 0
      %3340 = vmatmul.mubr.bf16.gmra.mrb[0].mxu0 %v2987
      %v3341 = vpop.f32.mrb[0].mxu0
      %v3342 = vadd.f32 %v3226, %v3341
      %v3343 = vpop.f32.mrb[0].mxu0
      %v3344 = vpop.f32.mrb[0].mxu0
      %v3345 = vadd.f32 %v3226, %v3344
      %v3346 = vpop.f32.mrb[0].mxu0
      %3347 = vmatprep.mubr.bf16.mxu0 0
      %3348 = vmatmul.mubr.bf16.gmra.mrb[0].mxu0 %v2988
      %v3349 = vpop.f32.mrb[0].mxu0
      %v3350 = vadd.f32 %v3226, %v3349
      %v3351 = vpop.f32.mrb[0].mxu0
      %v3352 = vpop.f32.mrb[0].mxu0
      %v3353 = vadd.f32 %v3226, %v3352
      %v3354 = vpop.f32.mrb[0].mxu0
      %3355 = vmatprep.mubr.bf16.mxu0 0
      %3356 = vmatmul.mubr.bf16.gmra.mrb[0].mxu0 %v2989
      %v3357 = vpop.f32.mrb[0].mxu0
      %v3358 = vadd.f32 %v3226, %v3357
      %v3359 = vpop.f32.mrb[0].mxu0
      %v3360 = vpop.f32.mrb[0].mxu0
      %v3361 = vadd.f32 %v3226, %v3360
      %v3362 = vpop.f32.mrb[0].mxu0
      %3363 = vmatprep.mubr.bf16.mxu0 0
      %3364 = vmatmul.mubr.bf16.gmra.mrb[0].mxu0 %v2990
      %v3365 = vpop.f32.mrb[0].mxu0
      %v3366 = vadd.f32 %v3226, %v3365
      %v3367 = vpop.f32.mrb[0].mxu0
      %v3368 = vpop.f32.mrb[0].mxu0
      %v3369 = vadd.f32 %v3226, %v3368
      %v3370 = vpop.f32.mrb[0].mxu0
      %3371 = vmatprep.mubr.bf16.mxu0 0
      %3372 = vmatmul.mubr.bf16.gmra.mrb[0].mxu0 %v2991
      %v3373 = vpop.f32.mrb[0].mxu0
      %v3374 = vadd.f32 %v3226, %v3373
      %v3375 = vpop.f32.mrb[0].mxu0
      %v3376 = vpop.f32.mrb[0].mxu0
      %v3377 = vadd.f32 %v3226, %v3376
      %v3378 = vpop.f32.mrb[0].mxu0
      %3379 = vmatprep.mubr.bf16.mxu0 0
      %3380 = vmatmul.mubr.bf16.gmra.mrb[0].mxu0 %v2992
      %v3381 = vpop.f32.mrb[0].mxu0
      %v3382 = vadd.f32 %v3226, %v3381
      %v3383 = vpop.f32.mrb[0].mxu0
      %v3384 = vpop.f32.mrb[0].mxu0
      %v3385 = vadd.f32 %v3226, %v3384
      %v3386 = vpop.f32.mrb[0].mxu0
      %3387 = vmatprep.mubr.bf16.mxu0 0
      %3388 = vmatmul.mubr.bf16.gmra.mrb[0].mxu0 %v2993
      %v3389 = vpop.f32.mrb[0].mxu0
      %v3390 = vadd.f32 %v3226, %v3389
      %v3391 = vpop.f32.mrb[0].mxu0
      %v3392 = vpop.f32.mrb[0].mxu0
      %v3393 = vadd.f32 %v3226, %v3392
      %v3394 = vpop.f32.mrb[0].mxu0
      %3395 = vmatprep.mubr.bf16.mxu0 0
      %3396 = vmatmul.mubr.bf16.gmra.mrb[0].mxu0 %v2994
      %v3397 = vpop.f32.mrb[0].mxu0
      %v3398 = vadd.f32 %v3226, %v3397
      %v3399 = vpop.f32.mrb[0].mxu0
      %v3400 = vpop.f32.mrb[0].mxu0
      %v3401 = vadd.f32 %v3226, %v3400
      %v3402 = vpop.f32.mrb[0].mxu0
      %3403 = vmatprep.mubr.bf16.mxu0 0
      %3404 = vmatmul.mubr.bf16.gmra.mrb[0].mxu0 %v2995
      %v3405 = vpop.f32.mrb[0].mxu0
      %v3406 = vadd.f32 %v3226, %v3405
      %v3407 = vpop.f32.mrb[0].mxu0
      %v3408 = vpop.f32.mrb[0].mxu0
      %v3409 = vadd.f32 %v3226, %v3408
      %v3410 = vpop.f32.mrb[0].mxu0
      %3411 = vmatprep.mubr.bf16.mxu0 0
      %3412 = vmatmul.mubr.bf16.gmra.mrb[0].mxu0 %v2996
      %v3413 = vpop.f32.mrb[0].mxu0
      %v3414 = vadd.f32 %v3226, %v3413
      %v3415 = vpop.f32.mrb[0].mxu0
      %v3416 = vpop.f32.mrb[0].mxu0
      %v3417 = vadd.f32 %v3226, %v3416
      %v3418 = vpop.f32.mrb[0].mxu0
      %3419 = vmatprep.mubr.bf16.mxu0 0
      %3420 = vmatmul.mubr.bf16.gmra.mrb[0].mxu0 %v2997
      %v3421 = vpop.f32.mrb[0].mxu0
      %v3422 = vadd.f32 %v3226, %v3421
      %v3423 = vpop.f32.mrb[0].mxu0
      %v3424 = vpop.f32.mrb[0].mxu0
      %v3425 = vadd.f32 %v3226, %v3424
      %v3426 = vpop.f32.mrb[0].mxu0
      %3427 = vmatprep.mubr.bf16.mxu0 0
      %3428 = vmatmul.mubr.bf16.gmra.mrb[0].mxu0 %v2998
      %v3429 = vpop.f32.mrb[0].mxu0
      %v3430 = vadd.f32 %v3226, %v3429
      %v3431 = vpop.f32.mrb[0].mxu0
      %v3432 = vpop.f32.mrb[0].mxu0
      %v3433 = vadd.f32 %v3226, %v3432
      %v3434 = vpop.f32.mrb[0].mxu0
      %3435 = vdwg.mxu0
      %vm3436 = vcmp.gt.f32.partialorder %v3310, 0.0
      %vm3437 = vcmp.gt.f32.partialorder %v3313, 0.0
      %vm3438 = vcmp.gt.f32.partialorder %v3318, 0.0
      %vm3439 = vcmp.gt.f32.partialorder %v3321, 0.0
      %vm3440 = vcmp.gt.f32.partialorder %v3326, 0.0
      %vm3441 = vcmp.gt.f32.partialorder %v3329, 0.0
      %vm3442 = vcmp.gt.f32.partialorder %v3334, 0.0
      %vm3443 = vcmp.gt.f32.partialorder %v3337, 0.0
      %vm3444 = vcmp.gt.f32.partialorder %v3342, 0.0
      %vm3445 = vcmp.gt.f32.partialorder %v3345, 0.0
      %vm3446 = vcmp.gt.f32.partialorder %v3350, 0.0
      %vm3447 = vcmp.gt.f32.partialorder %v3353, 0.0
      %vm3448 = vcmp.gt.f32.partialorder %v3358, 0.0
      %vm3449 = vcmp.gt.f32.partialorder %v3361, 0.0
      %vm3450 = vcmp.gt.f32.partialorder %v3366, 0.0
      %vm3451 = vcmp.gt.f32.partialorder %v3369, 0.0
      %vm3452 = vcmp.gt.f32.partialorder %v3374, 0.0
      %vm3453 = vcmp.gt.f32.partialorder %v3377, 0.0
      %vm3454 = vcmp.gt.f32.partialorder %v3382, 0.0
      %vm3455 = vcmp.gt.f32.partialorder %v3385, 0.0
      %vm3456 = vcmp.gt.f32.partialorder %v3390, 0.0
      %vm3457 = vcmp.gt.f32.partialorder %v3393, 0.0
      %vm3458 = vcmp.gt.f32.partialorder %v3398, 0.0
      %vm3459 = vcmp.gt.f32.partialorder %v3401, 0.0
      %vm3460 = vcmp.gt.f32.partialorder %v3406, 0.0
      %vm3461 = vcmp.gt.f32.partialorder %v3409, 0.0
      %vm3462 = vcmp.gt.f32.partialorder %v3414, 0.0
      %vm3463 = vcmp.gt.f32.partialorder %v3417, 0.0
      %vm3464 = vcmp.gt.f32.partialorder %v3422, 0.0
      %vm3465 = vcmp.gt.f32.partialorder %v3425, 0.0
      %vm3466 = vcmp.gt.f32.partialorder %v3430, 0.0
      %vm3467 = vcmp.gt.f32.partialorder %v3433, 0.0
      %v3468 = vmul.f32 %v3310, 0.01
      %v3469 = vmul.f32 %v3313, 0.01
      %v3470 = vmul.f32 %v3318, 0.01
      %v3471 = vmul.f32 %v3321, 0.01
      %v3472 = vmul.f32 %v3326, 0.01
      %v3473 = vmul.f32 %v3329, 0.01
      %v3474 = vmul.f32 %v3334, 0.01
      %v3475 = vmul.f32 %v3337, 0.01
      %v3476 = vmul.f32 %v3342, 0.01
      %v3477 = vmul.f32 %v3345, 0.01
      %v3478 = vmul.f32 %v3350, 0.01
      %v3479 = vmul.f32 %v3353, 0.01
      %v3480 = vmul.f32 %v3358, 0.01
      %v3481 = vmul.f32 %v3361, 0.01
      %v3482 = vmul.f32 %v3366, 0.01
      %v3483 = vmul.f32 %v3369, 0.01
      %v3484 = vmul.f32 %v3374, 0.01
      %v3485 = vmul.f32 %v3377, 0.01
      %v3486 = vmul.f32 %v3382, 0.01
      %v3487 = vmul.f32 %v3385, 0.01
      %v3488 = vmul.f32 %v3390, 0.01
      %v3489 = vmul.f32 %v3393, 0.01
      %v3490 = vmul.f32 %v3398, 0.01
      %v3491 = vmul.f32 %v3401, 0.01
      %v3492 = vmul.f32 %v3406, 0.01
      %v3493 = vmul.f32 %v3409, 0.01
      %v3494 = vmul.f32 %v3414, 0.01
      %v3495 = vmul.f32 %v3417, 0.01
      %v3496 = vmul.f32 %v3422, 0.01
      %v3497 = vmul.f32 %v3425, 0.01
      %v3498 = vmul.f32 %v3430, 0.01
      %v3499 = vmul.f32 %v3433, 0.01
      %v3500 = vsel %vm3436, %v3310, %v3468
      %v3501 = vsel %vm3437, %v3313, %v3469
      %v3502 = vsel %vm3438, %v3318, %v3470
      %v3503 = vsel %vm3439, %v3321, %v3471
      %v3504 = vsel %vm3440, %v3326, %v3472
      %v3505 = vsel %vm3441, %v3329, %v3473
      %v3506 = vsel %vm3442, %v3334, %v3474
      %v3507 = vsel %vm3443, %v3337, %v3475
      %v3508 = vsel %vm3444, %v3342, %v3476
      %v3509 = vsel %vm3445, %v3345, %v3477
      %v3510 = vsel %vm3446, %v3350, %v3478
      %v3511 = vsel %vm3447, %v3353, %v3479
      %v3512 = vsel %vm3448, %v3358, %v3480
      %v3513 = vsel %vm3449, %v3361, %v3481
      %v3514 = vsel %vm3450, %v3366, %v3482
      %v3515 = vsel %vm3451, %v3369, %v3483
      %v3516 = vsel %vm3452, %v3374, %v3484
      %v3517 = vsel %vm3453, %v3377, %v3485
      %v3518 = vsel %vm3454, %v3382, %v3486
      %v3519 = vsel %vm3455, %v3385, %v3487
      %v3520 = vsel %vm3456, %v3390, %v3488
      %v3521 = vsel %vm3457, %v3393, %v3489
      %v3522 = vsel %vm3458, %v3398, %v3490
      %v3523 = vsel %vm3459, %v3401, %v3491
      %v3524 = vsel %vm3460, %v3406, %v3492
      %v3525 = vsel %vm3461, %v3409, %v3493
      %v3526 = vsel %vm3462, %v3414, %v3494
      %v3527 = vsel %vm3463, %v3417, %v3495
      %v3528 = vsel %vm3464, %v3422, %v3496
      %v3529 = vsel %vm3465, %v3425, %v3497
      %v3530 = vsel %vm3466, %v3430, %v3498
      %v3531 = vsel %vm3467, %v3433, %v3499
      %s3532 = scalar_lea.vmem %s1, 512
      %v3533 = vld [vmem:[%s3532] sm:$0xf]
      %v3534 = vld [vmem:[%s3532 + $0x4] sm:$0xf]
      %v3535 = vld [vmem:[%s3532 + $0x8] sm:$0xf]
      %v3536 = vld [vmem:[%s3532 + $0xc] sm:$0xf]
      %v3537 = vld [vmem:[%s3532 + $0x10] sm:$0xf]
      %v3538 = vld [vmem:[%s3532 + $0x14] sm:$0xf]
      %v3539 = vld [vmem:[%s3532 + $0x18] sm:$0xf]
      %v3540 = vld [vmem:[%s3532 + $0x1c] sm:$0xf]
      %v3541 = vld [vmem:[%s3532 + $0x20] sm:$0xf]
      %v3542 = vld [vmem:[%s3532 + $0x24] sm:$0xf]
      %v3543 = vld [vmem:[%s3532 + $0x28] sm:$0xf]
      %v3544 = vld [vmem:[%s3532 + $0x2c] sm:$0xf]
      %v3545 = vld [vmem:[%s3532 + $0x30] sm:$0xf]
      %v3546 = vld [vmem:[%s3532 + $0x34] sm:$0xf]
      %v3547 = vld [vmem:[%s3532 + $0x38] sm:$0xf]
      %v3548 = vld [vmem:[%s3532 + $0x3c] sm:$0xf]
      %v3549 = vpack.c.bf16 %v3501, %v3500
      %v3550 = vpack.c.bf16 %v3503, %v3502
      %v3551 = vpack.c.bf16 %v3505, %v3504
      %v3552 = vpack.c.bf16 %v3507, %v3506
      %v3553 = vpack.c.bf16 %v3509, %v3508
      %v3554 = vpack.c.bf16 %v3511, %v3510
      %v3555 = vpack.c.bf16 %v3513, %v3512
      %v3556 = vpack.c.bf16 %v3515, %v3514
      %v3557 = vpack.c.bf16 %v3517, %v3516
      %v3558 = vpack.c.bf16 %v3519, %v3518
      %v3559 = vpack.c.bf16 %v3521, %v3520
      %v3560 = vpack.c.bf16 %v3523, %v3522
      %v3561 = vpack.c.bf16 %v3525, %v3524
      %v3562 = vpack.c.bf16 %v3527, %v3526
      %v3563 = vpack.c.bf16 %v3529, %v3528
      %v3564 = vpack.c.bf16 %v3531, %v3530
      %v3565 = vld [vmem:[%s2 + $0x13] ss:$0 sm:$0xff]
      %v3582 = vunpack.c.l.b16 %v3533
      %v3583 = vunpack.c.l.b16 %v3534
      %v3584 = vunpack.c.l.b16 %v3535
      %v3585 = vunpack.c.l.b16 %v3536
      %v3586 = vunpack.c.l.b16 %v3537
      %v3587 = vunpack.c.l.b16 %v3538
      %v3588 = vunpack.c.l.b16 %v3539
      %v3589 = vunpack.c.l.b16 %v3540
      %v3590 = vunpack.c.l.b16 %v3541
      %v3591 = vunpack.c.l.b16 %v3542
      %v3592 = vunpack.c.l.b16 %v3543
      %v3593 = vunpack.c.l.b16 %v3544
      %v3594 = vunpack.c.l.b16 %v3545
      %v3595 = vunpack.c.l.b16 %v3546
      %v3596 = vunpack.c.l.b16 %v3547
      %v3597 = vunpack.c.l.b16 %v3548
      %v3598 = vpack.c.b16 %v3583, %v3582
      %v3599 = vpack.c.b16 %v3585, %v3584
      %v3600 = vpack.c.b16 %v3587, %v3586
      %v3601 = vpack.c.b16 %v3589, %v3588
      %v3602 = vpack.c.b16 %v3591, %v3590
      %v3603 = vpack.c.b16 %v3593, %v3592
      %v3604 = vpack.c.b16 %v3595, %v3594
      %v3605 = vpack.c.b16 %v3597, %v3596
      %3614 = vmatprep.subr.bf16.mxu0 0
      %3615 = vmatpush1.bf16.msra.mxu0 %v3598
      %3616 = vmatprep.subr.bf16.mxu0 0
      %3617 = vmatpush1.bf16.msra.mxu0 %v3599
      %3618 = vmatprep.subr.bf16.mxu0 0
      %3619 = vmatpush1.bf16.msra.mxu0 %v3600
      %3620 = vmatprep.subr.bf16.mxu0 0
      %3621 = vmatpush1.bf16.msra.mxu0 %v3601
      %3622 = vmatprep.subr.bf16.mxu0 0
      %3623 = vmatpush1.bf16.msra.mxu0 %v3602
      %3624 = vmatprep.subr.bf16.mxu0 0
      %3625 = vmatpush1.bf16.msra.mxu0 %v3603
      %3626 = vmatprep.subr.bf16.mxu0 0
      %3627 = vmatpush1.bf16.msra.mxu0 %v3604
      %3628 = vmatprep.subr.bf16.mxu0 0
      %3629 = vmatpush1.bf16.msra.mxu0 %v3605
      %3630 = vmatprep.subr.bf16.mxu0 0
      %3631 = vmatpush1.bf16.msra.mxu0 0
      %3632 = vmatprep.subr.bf16.mxu0 0
      %3633 = vmatpush1.bf16.msra.mxu0 0
      %3634 = vmatprep.subr.bf16.mxu0 0
      %3635 = vmatpush1.bf16.msra.mxu0 0
      %3636 = vmatprep.subr.bf16.mxu0 0
      %3637 = vmatpush1.bf16.msra.mxu0 0
      %3638 = vmatprep.subr.bf16.mxu0 0
      %3639 = vmatpush1.bf16.msra.mxu0 0
      %3640 = vmatprep.subr.bf16.mxu0 0
      %3641 = vmatpush1.bf16.msra.mxu0 0
      %3642 = vmatprep.subr.bf16.mxu0 0
      %3643 = vmatpush1.bf16.msra.mxu0 0
      %3644 = vmatprep.subr.bf16.mxu0 0
      %3645 = vmatpush1.bf16.msra.mxu0 0
      %3646 = vmatprep.mubr.bf16.mxu0 0
      %3647 = vmatmul.mubr.bf16.gmra.mrb[0].mxu0 %v3549
      %v3648 = vpop.f32.mrb[0].mxu0
      %v3649 = vadd.f32 %v3565, %v3648
      %v3650 = vpop.f32.mrb[0].mxu0
      %v3651 = vpop.f32.mrb[0].mxu0
      %v3652 = vadd.f32 %v3565, %v3651
      %v3653 = vpop.f32.mrb[0].mxu0
      %3654 = vmatprep.mubr.bf16.mxu0 0
      %3655 = vmatmul.mubr.bf16.gmra.mrb[0].mxu0 %v3550
      %v3656 = vpop.f32.mrb[0].mxu0
      %v3657 = vadd.f32 %v3565, %v3656
      %v3658 = vpop.f32.mrb[0].mxu0
      %v3659 = vpop.f32.mrb[0].mxu0
      %v3660 = vadd.f32 %v3565, %v3659
      %v3661 = vpop.f32.mrb[0].mxu0
      %3662 = vmatprep.mubr.bf16.mxu0 0
      %3663 = vmatmul.mubr.bf16.gmra.mrb[0].mxu0 %v3551
      %v3664 = vpop.f32.mrb[0].mxu0
      %v3665 = vadd.f32 %v3565, %v3664
      %v3666 = vpop.f32.mrb[0].mxu0
      %v3667 = vpop.f32.mrb[0].mxu0
      %v3668 = vadd.f32 %v3565, %v3667
      %v3669 = vpop.f32.mrb[0].mxu0
      %3670 = vmatprep.mubr.bf16.mxu0 0
      %3671 = vmatmul.mubr.bf16.gmra.mrb[0].mxu0 %v3552
      %v3672 = vpop.f32.mrb[0].mxu0
      %v3673 = vadd.f32 %v3565, %v3672
      %v3674 = vpop.f32.mrb[0].mxu0
      %v3675 = vpop.f32.mrb[0].mxu0
      %v3676 = vadd.f32 %v3565, %v3675
      %v3677 = vpop.f32.mrb[0].mxu0
      %3678 = vmatprep.mubr.bf16.mxu0 0
      %3679 = vmatmul.mubr.bf16.gmra.mrb[0].mxu0 %v3553
      %v3680 = vpop.f32.mrb[0].mxu0
      %v3681 = vadd.f32 %v3565, %v3680
      %v3682 = vpop.f32.mrb[0].mxu0
      %v3683 = vpop.f32.mrb[0].mxu0
      %v3684 = vadd.f32 %v3565, %v3683
      %v3685 = vpop.f32.mrb[0].mxu0
      %3686 = vmatprep.mubr.bf16.mxu0 0
      %3687 = vmatmul.mubr.bf16.gmra.mrb[0].mxu0 %v3554
      %v3688 = vpop.f32.mrb[0].mxu0
      %v3689 = vadd.f32 %v3565, %v3688
      %v3690 = vpop.f32.mrb[0].mxu0
      %v3691 = vpop.f32.mrb[0].mxu0
      %v3692 = vadd.f32 %v3565, %v3691
      %v3693 = vpop.f32.mrb[0].mxu0
      %3694 = vmatprep.mubr.bf16.mxu0 0
      %3695 = vmatmul.mubr.bf16.gmra.mrb[0].mxu0 %v3555
      %v3696 = vpop.f32.mrb[0].mxu0
      %v3697 = vadd.f32 %v3565, %v3696
      %v3698 = vpop.f32.mrb[0].mxu0
      %v3699 = vpop.f32.mrb[0].mxu0
      %v3700 = vadd.f32 %v3565, %v3699
      %v3701 = vpop.f32.mrb[0].mxu0
      %3702 = vmatprep.mubr.bf16.mxu0 0
      %3703 = vmatmul.mubr.bf16.gmra.mrb[0].mxu0 %v3556
      %v3704 = vpop.f32.mrb[0].mxu0
      %v3705 = vadd.f32 %v3565, %v3704
      %v3706 = vpop.f32.mrb[0].mxu0
      %v3707 = vpop.f32.mrb[0].mxu0
      %v3708 = vadd.f32 %v3565, %v3707
      %v3709 = vpop.f32.mrb[0].mxu0
      %3710 = vmatprep.mubr.bf16.mxu0 0
      %3711 = vmatmul.mubr.bf16.gmra.mrb[0].mxu0 %v3557
      %v3712 = vpop.f32.mrb[0].mxu0
      %v3713 = vadd.f32 %v3565, %v3712
      %v3714 = vpop.f32.mrb[0].mxu0
      %v3715 = vpop.f32.mrb[0].mxu0
      %v3716 = vadd.f32 %v3565, %v3715
      %v3717 = vpop.f32.mrb[0].mxu0
      %3718 = vmatprep.mubr.bf16.mxu0 0
      %3719 = vmatmul.mubr.bf16.gmra.mrb[0].mxu0 %v3558
      %v3720 = vpop.f32.mrb[0].mxu0
      %v3721 = vadd.f32 %v3565, %v3720
      %v3722 = vpop.f32.mrb[0].mxu0
      %v3723 = vpop.f32.mrb[0].mxu0
      %v3724 = vadd.f32 %v3565, %v3723
      %v3725 = vpop.f32.mrb[0].mxu0
      %3726 = vmatprep.mubr.bf16.mxu0 0
      %3727 = vmatmul.mubr.bf16.gmra.mrb[0].mxu0 %v3559
      %v3728 = vpop.f32.mrb[0].mxu0
      %v3729 = vadd.f32 %v3565, %v3728
      %v3730 = vpop.f32.mrb[0].mxu0
      %v3731 = vpop.f32.mrb[0].mxu0
      %v3732 = vadd.f32 %v3565, %v3731
      %v3733 = vpop.f32.mrb[0].mxu0
      %3734 = vmatprep.mubr.bf16.mxu0 0
      %3735 = vmatmul.mubr.bf16.gmra.mrb[0].mxu0 %v3560
      %v3736 = vpop.f32.mrb[0].mxu0
      %v3737 = vadd.f32 %v3565, %v3736
      %v3738 = vpop.f32.mrb[0].mxu0
      %v3739 = vpop.f32.mrb[0].mxu0
      %v3740 = vadd.f32 %v3565, %v3739
      %v3741 = vpop.f32.mrb[0].mxu0
      %3742 = vmatprep.mubr.bf16.mxu0 0
      %3743 = vmatmul.mubr.bf16.gmra.mrb[0].mxu0 %v3561
      %v3744 = vpop.f32.mrb[0].mxu0
      %v3745 = vadd.f32 %v3565, %v3744
      %v3746 = vpop.f32.mrb[0].mxu0
      %v3747 = vpop.f32.mrb[0].mxu0
      %v3748 = vadd.f32 %v3565, %v3747
      %v3749 = vpop.f32.mrb[0].mxu0
      %3750 = vmatprep.mubr.bf16.mxu0 0
      %3751 = vmatmul.mubr.bf16.gmra.mrb[0].mxu0 %v3562
      %v3752 = vpop.f32.mrb[0].mxu0
      %v3753 = vadd.f32 %v3565, %v3752
      %v3754 = vpop.f32.mrb[0].mxu0
      %v3755 = vpop.f32.mrb[0].mxu0
      %v3756 = vadd.f32 %v3565, %v3755
      %v3757 = vpop.f32.mrb[0].mxu0
      %3758 = vmatprep.mubr.bf16.mxu0 0
      %3759 = vmatmul.mubr.bf16.gmra.mrb[0].mxu0 %v3563
      %v3760 = vpop.f32.mrb[0].mxu0
      %v3761 = vadd.f32 %v3565, %v3760
      %v3762 = vpop.f32.mrb[0].mxu0
      %v3763 = vpop.f32.mrb[0].mxu0
      %v3764 = vadd.f32 %v3565, %v3763
      %v3765 = vpop.f32.mrb[0].mxu0
      %3766 = vmatprep.mubr.bf16.mxu0 0
      %3767 = vmatmul.mubr.bf16.gmra.mrb[0].mxu0 %v3564
      %v3768 = vpop.f32.mrb[0].mxu0
      %v3769 = vadd.f32 %v3565, %v3768
      %v3770 = vpop.f32.mrb[0].mxu0
      %v3771 = vpop.f32.mrb[0].mxu0
      %v3772 = vadd.f32 %v3565, %v3771
      %v3773 = vpop.f32.mrb[0].mxu0
      %3774 = vdwg.mxu0
      %v3775 = vadd.f32 %v3649, %v3083
      %v3776 = vadd.f32 %v3652, %v3086
      %v3777 = vadd.f32 %v3657, %v3091
      %v3778 = vadd.f32 %v3660, %v3094
      %v3779 = vadd.f32 %v3665, %v3099
      %v3780 = vadd.f32 %v3668, %v3102
      %v3781 = vadd.f32 %v3673, %v3107
      %v3782 = vadd.f32 %v3676, %v3110
      %v3783 = vadd.f32 %v3681, %v3115
      %v3784 = vadd.f32 %v3684, %v3118
      %v3785 = vadd.f32 %v3689, %v3123
      %v3786 = vadd.f32 %v3692, %v3126
      %v3787 = vadd.f32 %v3697, %v3131
      %v3788 = vadd.f32 %v3700, %v3134
      %v3789 = vadd.f32 %v3705, %v3139
      %v3790 = vadd.f32 %v3708, %v3142
      %v3791 = vadd.f32 %v3713, %v3147
      %v3792 = vadd.f32 %v3716, %v3150
      %v3793 = vadd.f32 %v3721, %v3155
      %v3794 = vadd.f32 %v3724, %v3158
      %v3795 = vadd.f32 %v3729, %v3163
      %v3796 = vadd.f32 %v3732, %v3166
      %v3797 = vadd.f32 %v3737, %v3171
      %v3798 = vadd.f32 %v3740, %v3174
      %v3799 = vadd.f32 %v3745, %v3179
      %v3800 = vadd.f32 %v3748, %v3182
      %v3801 = vadd.f32 %v3753, %v3187
      %v3802 = vadd.f32 %v3756, %v3190
      %v3803 = vadd.f32 %v3761, %v3195
      %v3804 = vadd.f32 %v3764, %v3198
      %v3805 = vadd.f32 %v3769, %v3203
      %v3806 = vadd.f32 %v3772, %v3206
      %v3807 = vadd.f32 %v1999, %v3775
      %v3808 = vadd.f32 %v2002, %v3776
      %v3809 = vadd.f32 %v2007, %v3777
      %v3810 = vadd.f32 %v2010, %v3778
      %v3811 = vadd.f32 %v2015, %v3779
      %v3812 = vadd.f32 %v2018, %v3780
      %v3813 = vadd.f32 %v2023, %v3781
      %v3814 = vadd.f32 %v2026, %v3782
      %v3815 = vadd.f32 %v2031, %v3783
      %v3816 = vadd.f32 %v2034, %v3784
      %v3817 = vadd.f32 %v2039, %v3785
      %v3818 = vadd.f32 %v2042, %v3786
      %v3819 = vadd.f32 %v2047, %v3787
      %v3820 = vadd.f32 %v2050, %v3788
      %v3821 = vadd.f32 %v2055, %v3789
      %v3822 = vadd.f32 %v2058, %v3790
      %v3823 = vadd.f32 %v2063, %v3791
      %v3824 = vadd.f32 %v2066, %v3792
      %v3825 = vadd.f32 %v2071, %v3793
      %v3826 = vadd.f32 %v2074, %v3794
      %v3827 = vadd.f32 %v2079, %v3795
      %v3828 = vadd.f32 %v2082, %v3796
      %v3829 = vadd.f32 %v2087, %v3797
      %v3830 = vadd.f32 %v2090, %v3798
      %v3831 = vadd.f32 %v2095, %v3799
      %v3832 = vadd.f32 %v2098, %v3800
      %v3833 = vadd.f32 %v2103, %v3801
      %v3834 = vadd.f32 %v2106, %v3802
      %v3835 = vadd.f32 %v2111, %v3803
      %v3836 = vadd.f32 %v2114, %v3804
      %v3837 = vadd.f32 %v2119, %v3805
      %v3838 = vadd.f32 %v2122, %v3806
      %v3839 = vld [vmem:[%s4] sm:$0xff]
      %v3840 = vld [vmem:[%s4 + $0x8] sm:$0xff]
      %v3841 = vld [vmem:[%s4 + $0x10] sm:$0xff]
      %v3842 = vld [vmem:[%s4 + $0x18] sm:$0xff]
      %v3843 = vld [vmem:[%s4 + $0x20] sm:$0xff]
      %v3844 = vld [vmem:[%s4 + $0x28] sm:$0xff]
      %v3845 = vld [vmem:[%s4 + $0x30] sm:$0xff]
      %v3846 = vld [vmem:[%s4 + $0x38] sm:$0xff]
      %v3847 = vld [vmem:[%s4 + $0x40] sm:$0xff]
      %v3848 = vld [vmem:[%s4 + $0x48] sm:$0xff]
      %v3849 = vld [vmem:[%s4 + $0x50] sm:$0xff]
      %v3850 = vld [vmem:[%s4 + $0x58] sm:$0xff]
      %v3851 = vld [vmem:[%s4 + $0x60] sm:$0xff]
      %v3852 = vld [vmem:[%s4 + $0x68] sm:$0xff]
      %v3853 = vld [vmem:[%s4 + $0x70] sm:$0xff]
      %v3854 = vld [vmem:[%s4 + $0x78] sm:$0xff]
      %v3855 = vpack.c.bf16 %v3808, %v3807
      %v3856 = vpack.c.bf16 %v3810, %v3809
      %v3857 = vpack.c.bf16 %v3812, %v3811
      %v3858 = vpack.c.bf16 %v3814, %v3813
      %v3859 = vpack.c.bf16 %v3816, %v3815
      %v3860 = vpack.c.bf16 %v3818, %v3817
      %v3861 = vpack.c.bf16 %v3820, %v3819
      %v3862 = vpack.c.bf16 %v3822, %v3821
      %v3863 = vpack.c.bf16 %v3824, %v3823
      %v3864 = vpack.c.bf16 %v3826, %v3825
      %v3865 = vpack.c.bf16 %v3828, %v3827
      %v3866 = vpack.c.bf16 %v3830, %v3829
      %v3867 = vpack.c.bf16 %v3832, %v3831
      %v3868 = vpack.c.bf16 %v3834, %v3833
      %v3869 = vpack.c.bf16 %v3836, %v3835
      %v3870 = vpack.c.bf16 %v3838, %v3837
      %s3871 = scalar_lea.vmem %s2, 21
      %v3872 = vld [vmem:[%s3871] ss:$8 sm:$0x3]
      %v3874 = vlaneseq
      %v3875 = vshrl.u32 %v3874, 7
      %v3876 = vsub.s32 0, %v3875
      %v3877 = vrot.slane %v3872, %v3876
      %v3878 = vlaneseq
      %v3879 = vshrl.u32 %v3878, 7
      %v3880 = vsub.s32 1, %v3879
      %v3881 = vrot.slane %v3872, %v3880
      %v3900 = vunpack.c.l.b16 %v3839
      %v3901 = vunpack.c.h.b16 %v3839
      %v3902 = vunpack.c.l.b16 %v3840
      %v3903 = vunpack.c.h.b16 %v3840
      %v3904 = vunpack.c.l.b16 %v3841
      %v3905 = vunpack.c.h.b16 %v3841
      %v3906 = vunpack.c.l.b16 %v3842
      %v3907 = vunpack.c.h.b16 %v3842
      %v3908 = vunpack.c.l.b16 %v3843
      %v3909 = vunpack.c.h.b16 %v3843
      %v3910 = vunpack.c.l.b16 %v3844
      %v3911 = vunpack.c.h.b16 %v3844
      %v3912 = vunpack.c.l.b16 %v3845
      %v3913 = vunpack.c.h.b16 %v3845
      %v3914 = vunpack.c.l.b16 %v3846
      %v3915 = vunpack.c.h.b16 %v3846
      %v3916 = vunpack.c.l.b16 %v3847
      %v3917 = vunpack.c.h.b16 %v3847
      %v3918 = vunpack.c.l.b16 %v3848
      %v3919 = vunpack.c.h.b16 %v3848
      %v3920 = vunpack.c.l.b16 %v3849
      %v3921 = vunpack.c.h.b16 %v3849
      %v3922 = vunpack.c.l.b16 %v3850
      %v3923 = vunpack.c.h.b16 %v3850
      %v3924 = vunpack.c.l.b16 %v3851
      %v3925 = vunpack.c.h.b16 %v3851
      %v3926 = vunpack.c.l.b16 %v3852
      %v3927 = vunpack.c.h.b16 %v3852
      %v3928 = vunpack.c.l.b16 %v3853
      %v3929 = vunpack.c.h.b16 %v3853
      %v3930 = vunpack.c.l.b16 %v3854
      %v3931 = vunpack.c.h.b16 %v3854
      %v3932 = vpack.c.b16 %v3902, %v3900
      %v3933 = vpack.c.b16 %v3903, %v3901
      %v3934 = vpack.c.b16 %v3906, %v3904
      %v3935 = vpack.c.b16 %v3907, %v3905
      %v3936 = vpack.c.b16 %v3910, %v3908
      %v3937 = vpack.c.b16 %v3911, %v3909
      %v3938 = vpack.c.b16 %v3914, %v3912
      %v3939 = vpack.c.b16 %v3915, %v3913
      %v3940 = vpack.c.b16 %v3918, %v3916
      %v3941 = vpack.c.b16 %v3919, %v3917
      %v3942 = vpack.c.b16 %v3922, %v3920
      %v3943 = vpack.c.b16 %v3923, %v3921
      %v3944 = vpack.c.b16 %v3926, %v3924
      %v3945 = vpack.c.b16 %v3927, %v3925
      %v3946 = vpack.c.b16 %v3930, %v3928
      %v3947 = vpack.c.b16 %v3931, %v3929
      %3964 = vmatprep.subr.bf16.mxu0 %v3933
      %3965 = vmatpush1.bf16.msra.mxu0 %v3932
      %3966 = vmatprep.subr.bf16.mxu0 %v3935
      %3967 = vmatpush1.bf16.msra.mxu0 %v3934
      %3968 = vmatprep.subr.bf16.mxu0 %v3937
      %3969 = vmatpush1.bf16.msra.mxu0 %v3936
      %3970 = vmatprep.subr.bf16.mxu0 %v3939
      %3971 = vmatpush1.bf16.msra.mxu0 %v3938
      %3972 = vmatprep.subr.bf16.mxu0 %v3941
      %3973 = vmatpush1.bf16.msra.mxu0 %v3940
      %3974 = vmatprep.subr.bf16.mxu0 %v3943
      %3975 = vmatpush1.bf16.msra.mxu0 %v3942
      %3976 = vmatprep.subr.bf16.mxu0 %v3945
      %3977 = vmatpush1.bf16.msra.mxu0 %v3944
      %3978 = vmatprep.subr.bf16.mxu0 %v3947
      %3979 = vmatpush1.bf16.msra.mxu0 %v3946
      %3980 = vmatprep.subr.bf16.mxu0 0
      %3981 = vmatpush1.bf16.msra.mxu0 0
      %3982 = vmatprep.subr.bf16.mxu0 0
      %3983 = vmatpush1.bf16.msra.mxu0 0
      %3984 = vmatprep.subr.bf16.mxu0 0
      %3985 = vmatpush1.bf16.msra.mxu0 0
      %3986 = vmatprep.subr.bf16.mxu0 0
      %3987 = vmatpush1.bf16.msra.mxu0 0
      %3988 = vmatprep.subr.bf16.mxu0 0
      %3989 = vmatpush1.bf16.msra.mxu0 0
      %3990 = vmatprep.subr.bf16.mxu0 0
      %3991 = vmatpush1.bf16.msra.mxu0 0
      %3992 = vmatprep.subr.bf16.mxu0 0
      %3993 = vmatpush1.bf16.msra.mxu0 0
      %3994 = vmatprep.subr.bf16.mxu0 0
      %3995 = vmatpush1.bf16.msra.mxu0 0
      %3996 = vmatprep.mubr.bf16.mxu0 0
      %3997 = vmatmul.mubr.bf16.gmra.mrb[0].mxu0 %v3855
      %v3998 = vpop.f32.mrb[0].mxu0
      %v3999 = vadd.f32 %v3877, %v3998
      %v4000 = vpop.f32.mrb[0].mxu0
      %v4001 = vadd.f32 %v3881, %v4000
      %v4002 = vpop.f32.mrb[0].mxu0
      %v4003 = vadd.f32 %v3877, %v4002
      %v4004 = vpop.f32.mrb[0].mxu0
      %v4005 = vadd.f32 %v3881, %v4004
      %4006 = vmatprep.mubr.bf16.mxu0 0
      %4007 = vmatmul.mubr.bf16.gmra.mrb[0].mxu0 %v3856
      %v4008 = vpop.f32.mrb[0].mxu0
      %v4009 = vadd.f32 %v3877, %v4008
      %v4010 = vpop.f32.mrb[0].mxu0
      %v4011 = vadd.f32 %v3881, %v4010
      %v4012 = vpop.f32.mrb[0].mxu0
      %v4013 = vadd.f32 %v3877, %v4012
      %v4014 = vpop.f32.mrb[0].mxu0
      %v4015 = vadd.f32 %v3881, %v4014
      %4016 = vmatprep.mubr.bf16.mxu0 0
      %4017 = vmatmul.mubr.bf16.gmra.mrb[0].mxu0 %v3857
      %v4018 = vpop.f32.mrb[0].mxu0
      %v4019 = vadd.f32 %v3877, %v4018
      %v4020 = vpop.f32.mrb[0].mxu0
      %v4021 = vadd.f32 %v3881, %v4020
      %v4022 = vpop.f32.mrb[0].mxu0
      %v4023 = vadd.f32 %v3877, %v4022
      %v4024 = vpop.f32.mrb[0].mxu0
      %v4025 = vadd.f32 %v3881, %v4024
      %4026 = vmatprep.mubr.bf16.mxu0 0
      %4027 = vmatmul.mubr.bf16.gmra.mrb[0].mxu0 %v3858
      %v4028 = vpop.f32.mrb[0].mxu0
      %v4029 = vadd.f32 %v3877, %v4028
      %v4030 = vpop.f32.mrb[0].mxu0
      %v4031 = vadd.f32 %v3881, %v4030
      %v4032 = vpop.f32.mrb[0].mxu0
      %v4033 = vadd.f32 %v3877, %v4032
      %v4034 = vpop.f32.mrb[0].mxu0
      %v4035 = vadd.f32 %v3881, %v4034
      %4036 = vmatprep.mubr.bf16.mxu0 0
      %4037 = vmatmul.mubr.bf16.gmra.mrb[0].mxu0 %v3859
      %v4038 = vpop.f32.mrb[0].mxu0
      %v4039 = vadd.f32 %v3877, %v4038
      %v4040 = vpop.f32.mrb[0].mxu0
      %v4041 = vadd.f32 %v3881, %v4040
      %v4042 = vpop.f32.mrb[0].mxu0
      %v4043 = vadd.f32 %v3877, %v4042
      %v4044 = vpop.f32.mrb[0].mxu0
      %v4045 = vadd.f32 %v3881, %v4044
      %4046 = vmatprep.mubr.bf16.mxu0 0
      %4047 = vmatmul.mubr.bf16.gmra.mrb[0].mxu0 %v3860
      %v4048 = vpop.f32.mrb[0].mxu0
      %v4049 = vadd.f32 %v3877, %v4048
      %v4050 = vpop.f32.mrb[0].mxu0
      %v4051 = vadd.f32 %v3881, %v4050
      %v4052 = vpop.f32.mrb[0].mxu0
      %v4053 = vadd.f32 %v3877, %v4052
      %v4054 = vpop.f32.mrb[0].mxu0
      %v4055 = vadd.f32 %v3881, %v4054
      %4056 = vmatprep.mubr.bf16.mxu0 0
      %4057 = vmatmul.mubr.bf16.gmra.mrb[0].mxu0 %v3861
      %v4058 = vpop.f32.mrb[0].mxu0
      %v4059 = vadd.f32 %v3877, %v4058
      %v4060 = vpop.f32.mrb[0].mxu0
      %v4061 = vadd.f32 %v3881, %v4060
      %v4062 = vpop.f32.mrb[0].mxu0
      %v4063 = vadd.f32 %v3877, %v4062
      %v4064 = vpop.f32.mrb[0].mxu0
      %v4065 = vadd.f32 %v3881, %v4064
      %4066 = vmatprep.mubr.bf16.mxu0 0
      %4067 = vmatmul.mubr.bf16.gmra.mrb[0].mxu0 %v3862
      %v4068 = vpop.f32.mrb[0].mxu0
      %v4069 = vadd.f32 %v3877, %v4068
      %v4070 = vpop.f32.mrb[0].mxu0
      %v4071 = vadd.f32 %v3881, %v4070
      %v4072 = vpop.f32.mrb[0].mxu0
      %v4073 = vadd.f32 %v3877, %v4072
      %v4074 = vpop.f32.mrb[0].mxu0
      %v4075 = vadd.f32 %v3881, %v4074
      %4076 = vmatprep.mubr.bf16.mxu0 0
      %4077 = vmatmul.mubr.bf16.gmra.mrb[0].mxu0 %v3863
      %v4078 = vpop.f32.mrb[0].mxu0
      %v4079 = vadd.f32 %v3877, %v4078
      %v4080 = vpop.f32.mrb[0].mxu0
      %v4081 = vadd.f32 %v3881, %v4080
      %v4082 = vpop.f32.mrb[0].mxu0
      %v4083 = vadd.f32 %v3877, %v4082
      %v4084 = vpop.f32.mrb[0].mxu0
      %v4085 = vadd.f32 %v3881, %v4084
      %4086 = vmatprep.mubr.bf16.mxu0 0
      %4087 = vmatmul.mubr.bf16.gmra.mrb[0].mxu0 %v3864
      %v4088 = vpop.f32.mrb[0].mxu0
      %v4089 = vadd.f32 %v3877, %v4088
      %v4090 = vpop.f32.mrb[0].mxu0
      %v4091 = vadd.f32 %v3881, %v4090
      %v4092 = vpop.f32.mrb[0].mxu0
      %v4093 = vadd.f32 %v3877, %v4092
      %v4094 = vpop.f32.mrb[0].mxu0
      %v4095 = vadd.f32 %v3881, %v4094
      %4096 = vmatprep.mubr.bf16.mxu0 0
      %4097 = vmatmul.mubr.bf16.gmra.mrb[0].mxu0 %v3865
      %v4098 = vpop.f32.mrb[0].mxu0
      %v4099 = vadd.f32 %v3877, %v4098
      %v4100 = vpop.f32.mrb[0].mxu0
      %v4101 = vadd.f32 %v3881, %v4100
      %v4102 = vpop.f32.mrb[0].mxu0
      %v4103 = vadd.f32 %v3877, %v4102
      %v4104 = vpop.f32.mrb[0].mxu0
      %v4105 = vadd.f32 %v3881, %v4104
      %4106 = vmatprep.mubr.bf16.mxu0 0
      %4107 = vmatmul.mubr.bf16.gmra.mrb[0].mxu0 %v3866
      %v4108 = vpop.f32.mrb[0].mxu0
      %v4109 = vadd.f32 %v3877, %v4108
      %v4110 = vpop.f32.mrb[0].mxu0
      %v4111 = vadd.f32 %v3881, %v4110
      %v4112 = vpop.f32.mrb[0].mxu0
      %v4113 = vadd.f32 %v3877, %v4112
      %v4114 = vpop.f32.mrb[0].mxu0
      %v4115 = vadd.f32 %v3881, %v4114
      %4116 = vmatprep.mubr.bf16.mxu0 0
      %4117 = vmatmul.mubr.bf16.gmra.mrb[0].mxu0 %v3867
      %v4118 = vpop.f32.mrb[0].mxu0
      %v4119 = vadd.f32 %v3877, %v4118
      %v4120 = vpop.f32.mrb[0].mxu0
      %v4121 = vadd.f32 %v3881, %v4120
      %v4122 = vpop.f32.mrb[0].mxu0
      %v4123 = vadd.f32 %v3877, %v4122
      %v4124 = vpop.f32.mrb[0].mxu0
      %v4125 = vadd.f32 %v3881, %v4124
      %4126 = vmatprep.mubr.bf16.mxu0 0
      %4127 = vmatmul.mubr.bf16.gmra.mrb[0].mxu0 %v3868
      %v4128 = vpop.f32.mrb[0].mxu0
      %v4129 = vadd.f32 %v3877, %v4128
      %v4130 = vpop.f32.mrb[0].mxu0
      %v4131 = vadd.f32 %v3881, %v4130
      %v4132 = vpop.f32.mrb[0].mxu0
      %v4133 = vadd.f32 %v3877, %v4132
      %v4134 = vpop.f32.mrb[0].mxu0
      %v4135 = vadd.f32 %v3881, %v4134
      %4136 = vmatprep.mubr.bf16.mxu0 0
      %4137 = vmatmul.mubr.bf16.gmra.mrb[0].mxu0 %v3869
      %v4138 = vpop.f32.mrb[0].mxu0
      %v4139 = vadd.f32 %v3877, %v4138
      %v4140 = vpop.f32.mrb[0].mxu0
      %v4141 = vadd.f32 %v3881, %v4140
      %v4142 = vpop.f32.mrb[0].mxu0
      %v4143 = vadd.f32 %v3877, %v4142
      %v4144 = vpop.f32.mrb[0].mxu0
      %v4145 = vadd.f32 %v3881, %v4144
      %4146 = vmatprep.mubr.bf16.mxu0 0
      %4147 = vmatmul.mubr.bf16.gmra.mrb[0].mxu0 %v3870
      %v4148 = vpop.f32.mrb[0].mxu0
      %v4149 = vadd.f32 %v3877, %v4148
      %v4150 = vpop.f32.mrb[0].mxu0
      %v4151 = vadd.f32 %v3881, %v4150
      %v4152 = vpop.f32.mrb[0].mxu0
      %v4153 = vadd.f32 %v3877, %v4152
      %v4154 = vpop.f32.mrb[0].mxu0
      %v4155 = vadd.f32 %v3881, %v4154
      %4156 = vdwg.mxu0
      %vm4157 = vcmp.gt.f32.partialorder %v3999, 0.0
      %vm4158 = vcmp.gt.f32.partialorder %v4001, 0.0
      %vm4159 = vcmp.gt.f32.partialorder %v4003, 0.0
      %vm4160 = vcmp.gt.f32.partialorder %v4005, 0.0
      %vm4161 = vcmp.gt.f32.partialorder %v4009, 0.0
      %vm4162 = vcmp.gt.f32.partialorder %v4011, 0.0
      %vm4163 = vcmp.gt.f32.partialorder %v4013, 0.0
      %vm4164 = vcmp.gt.f32.partialorder %v4015, 0.0
      %vm4165 = vcmp.gt.f32.partialorder %v4019, 0.0
      %vm4166 = vcmp.gt.f32.partialorder %v4021, 0.0
      %vm4167 = vcmp.gt.f32.partialorder %v4023, 0.0
      %vm4168 = vcmp.gt.f32.partialorder %v4025, 0.0
      %vm4169 = vcmp.gt.f32.partialorder %v4029, 0.0
      %vm4170 = vcmp.gt.f32.partialorder %v4031, 0.0
      %vm4171 = vcmp.gt.f32.partialorder %v4033, 0.0
      %vm4172 = vcmp.gt.f32.partialorder %v4035, 0.0
      %vm4173 = vcmp.gt.f32.partialorder %v4039, 0.0
      %vm4174 = vcmp.gt.f32.partialorder %v4041, 0.0
      %vm4175 = vcmp.gt.f32.partialorder %v4043, 0.0
      %vm4176 = vcmp.gt.f32.partialorder %v4045, 0.0
      %vm4177 = vcmp.gt.f32.partialorder %v4049, 0.0
      %vm4178 = vcmp.gt.f32.partialorder %v4051, 0.0
      %vm4179 = vcmp.gt.f32.partialorder %v4053, 0.0
      %vm4180 = vcmp.gt.f32.partialorder %v4055, 0.0
      %vm4181 = vcmp.gt.f32.partialorder %v4059, 0.0
      %vm4182 = vcmp.gt.f32.partialorder %v4061, 0.0
      %vm4183 = vcmp.gt.f32.partialorder %v4063, 0.0
      %vm4184 = vcmp.gt.f32.partialorder %v4065, 0.0
      %vm4185 = vcmp.gt.f32.partialorder %v4069, 0.0
      %vm4186 = vcmp.gt.f32.partialorder %v4071, 0.0
      %vm4187 = vcmp.gt.f32.partialorder %v4073, 0.0
      %vm4188 = vcmp.gt.f32.partialorder %v4075, 0.0
      %vm4189 = vcmp.gt.f32.partialorder %v4079, 0.0
      %vm4190 = vcmp.gt.f32.partialorder %v4081, 0.0
      %vm4191 = vcmp.gt.f32.partialorder %v4083, 0.0
      %vm4192 = vcmp.gt.f32.partialorder %v4085, 0.0
      %vm4193 = vcmp.gt.f32.partialorder %v4089, 0.0
      %vm4194 = vcmp.gt.f32.partialorder %v4091, 0.0
      %vm4195 = vcmp.gt.f32.partialorder %v4093, 0.0
      %vm4196 = vcmp.gt.f32.partialorder %v4095, 0.0
      %vm4197 = vcmp.gt.f32.partialorder %v4099, 0.0
      %vm4198 = vcmp.gt.f32.partialorder %v4101, 0.0
      %vm4199 = vcmp.gt.f32.partialorder %v4103, 0.0
      %vm4200 = vcmp.gt.f32.partialorder %v4105, 0.0
      %vm4201 = vcmp.gt.f32.partialorder %v4109, 0.0
      %vm4202 = vcmp.gt.f32.partialorder %v4111, 0.0
      %vm4203 = vcmp.gt.f32.partialorder %v4113, 0.0
      %vm4204 = vcmp.gt.f32.partialorder %v4115, 0.0
      %vm4205 = vcmp.gt.f32.partialorder %v4119, 0.0
      %vm4206 = vcmp.gt.f32.partialorder %v4121, 0.0
      %vm4207 = vcmp.gt.f32.partialorder %v4123, 0.0
      %vm4208 = vcmp.gt.f32.partialorder %v4125, 0.0
      %vm4209 = vcmp.gt.f32.partialorder %v4129, 0.0
      %vm4210 = vcmp.gt.f32.partialorder %v4131, 0.0
      %vm4211 = vcmp.gt.f32.partialorder %v4133, 0.0
      %vm4212 = vcmp.gt.f32.partialorder %v4135, 0.0
      %vm4213 = vcmp.gt.f32.partialorder %v4139, 0.0
      %vm4214 = vcmp.gt.f32.partialorder %v4141, 0.0
      %vm4215 = vcmp.gt.f32.partialorder %v4143, 0.0
      %vm4216 = vcmp.gt.f32.partialorder %v4145, 0.0
      %vm4217 = vcmp.gt.f32.partialorder %v4149, 0.0
      %vm4218 = vcmp.gt.f32.partialorder %v4151, 0.0
      %vm4219 = vcmp.gt.f32.partialorder %v4153, 0.0
      %vm4220 = vcmp.gt.f32.partialorder %v4155, 0.0
      %v4221 = vmul.f32 %v3999, 0.01
      %v4222 = vmul.f32 %v4001, 0.01
      %v4223 = vmul.f32 %v4003, 0.01
      %v4224 = vmul.f32 %v4005, 0.01
      %v4225 = vmul.f32 %v4009, 0.01
      %v4226 = vmul.f32 %v4011, 0.01
      %v4227 = vmul.f32 %v4013, 0.01
      %v4228 = vmul.f32 %v4015, 0.01
      %v4229 = vmul.f32 %v4019, 0.01
      %v4230 = vmul.f32 %v4021, 0.01
      %v4231 = vmul.f32 %v4023, 0.01
      %v4232 = vmul.f32 %v4025, 0.01
      %v4233 = vmul.f32 %v4029, 0.01
      %v4234 = vmul.f32 %v4031, 0.01
      %v4235 = vmul.f32 %v4033, 0.01
      %v4236 = vmul.f32 %v4035, 0.01
      %v4237 = vmul.f32 %v4039, 0.01
      %v4238 = vmul.f32 %v4041, 0.01
      %v4239 = vmul.f32 %v4043, 0.01
      %v4240 = vmul.f32 %v4045, 0.01
      %v4241 = vmul.f32 %v4049, 0.01
      %v4242 = vmul.f32 %v4051, 0.01
      %v4243 = vmul.f32 %v4053, 0.01
      %v4244 = vmul.f32 %v4055, 0.01
      %v4245 = vmul.f32 %v4059, 0.01
      %v4246 = vmul.f32 %v4061, 0.01
      %v4247 = vmul.f32 %v4063, 0.01
      %v4248 = vmul.f32 %v4065, 0.01
      %v4249 = vmul.f32 %v4069, 0.01
      %v4250 = vmul.f32 %v4071, 0.01
      %v4251 = vmul.f32 %v4073, 0.01
      %v4252 = vmul.f32 %v4075, 0.01
      %v4253 = vmul.f32 %v4079, 0.01
      %v4254 = vmul.f32 %v4081, 0.01
      %v4255 = vmul.f32 %v4083, 0.01
      %v4256 = vmul.f32 %v4085, 0.01
      %v4257 = vmul.f32 %v4089, 0.01
      %v4258 = vmul.f32 %v4091, 0.01
      %v4259 = vmul.f32 %v4093, 0.01
      %v4260 = vmul.f32 %v4095, 0.01
      %v4261 = vmul.f32 %v4099, 0.01
      %v4262 = vmul.f32 %v4101, 0.01
      %v4263 = vmul.f32 %v4103, 0.01
      %v4264 = vmul.f32 %v4105, 0.01
      %v4265 = vmul.f32 %v4109, 0.01
      %v4266 = vmul.f32 %v4111, 0.01
      %v4267 = vmul.f32 %v4113, 0.01
      %v4268 = vmul.f32 %v4115, 0.01
      %v4269 = vmul.f32 %v4119, 0.01
      %v4270 = vmul.f32 %v4121, 0.01
      %v4271 = vmul.f32 %v4123, 0.01
      %v4272 = vmul.f32 %v4125, 0.01
      %v4273 = vmul.f32 %v4129, 0.01
      %v4274 = vmul.f32 %v4131, 0.01
      %v4275 = vmul.f32 %v4133, 0.01
      %v4276 = vmul.f32 %v4135, 0.01
      %v4277 = vmul.f32 %v4139, 0.01
      %v4278 = vmul.f32 %v4141, 0.01
      %v4279 = vmul.f32 %v4143, 0.01
      %v4280 = vmul.f32 %v4145, 0.01
      %v4281 = vmul.f32 %v4149, 0.01
      %v4282 = vmul.f32 %v4151, 0.01
      %v4283 = vmul.f32 %v4153, 0.01
      %v4284 = vmul.f32 %v4155, 0.01
      %v4285 = vsel %vm4157, %v3999, %v4221
      %v4286 = vsel %vm4158, %v4001, %v4222
      %v4287 = vsel %vm4159, %v4003, %v4223
      %v4288 = vsel %vm4160, %v4005, %v4224
      %v4289 = vsel %vm4161, %v4009, %v4225
      %v4290 = vsel %vm4162, %v4011, %v4226
      %v4291 = vsel %vm4163, %v4013, %v4227
      %v4292 = vsel %vm4164, %v4015, %v4228
      %v4293 = vsel %vm4165, %v4019, %v4229
      %v4294 = vsel %vm4166, %v4021, %v4230
      %v4295 = vsel %vm4167, %v4023, %v4231
      %v4296 = vsel %vm4168, %v4025, %v4232
      %v4297 = vsel %vm4169, %v4029, %v4233
      %v4298 = vsel %vm4170, %v4031, %v4234
      %v4299 = vsel %vm4171, %v4033, %v4235
      %v4300 = vsel %vm4172, %v4035, %v4236
      %v4301 = vsel %vm4173, %v4039, %v4237
      %v4302 = vsel %vm4174, %v4041, %v4238
      %v4303 = vsel %vm4175, %v4043, %v4239
      %v4304 = vsel %vm4176, %v4045, %v4240
      %v4305 = vsel %vm4177, %v4049, %v4241
      %v4306 = vsel %vm4178, %v4051, %v4242
      %v4307 = vsel %vm4179, %v4053, %v4243
      %v4308 = vsel %vm4180, %v4055, %v4244
      %v4309 = vsel %vm4181, %v4059, %v4245
      %v4310 = vsel %vm4182, %v4061, %v4246
      %v4311 = vsel %vm4183, %v4063, %v4247
      %v4312 = vsel %vm4184, %v4065, %v4248
      %v4313 = vsel %vm4185, %v4069, %v4249
      %v4314 = vsel %vm4186, %v4071, %v4250
      %v4315 = vsel %vm4187, %v4073, %v4251
      %v4316 = vsel %vm4188, %v4075, %v4252
      %v4317 = vsel %vm4189, %v4079, %v4253
      %v4318 = vsel %vm4190, %v4081, %v4254
      %v4319 = vsel %vm4191, %v4083, %v4255
      %v4320 = vsel %vm4192, %v4085, %v4256
      %v4321 = vsel %vm4193, %v4089, %v4257
      %v4322 = vsel %vm4194, %v4091, %v4258
      %v4323 = vsel %vm4195, %v4093, %v4259
      %v4324 = vsel %vm4196, %v4095, %v4260
      %v4325 = vsel %vm4197, %v4099, %v4261
      %v4326 = vsel %vm4198, %v4101, %v4262
      %v4327 = vsel %vm4199, %v4103, %v4263
      %v4328 = vsel %vm4200, %v4105, %v4264
      %v4329 = vsel %vm4201, %v4109, %v4265
      %v4330 = vsel %vm4202, %v4111, %v4266
      %v4331 = vsel %vm4203, %v4113, %v4267
      %v4332 = vsel %vm4204, %v4115, %v4268
      %v4333 = vsel %vm4205, %v4119, %v4269
      %v4334 = vsel %vm4206, %v4121, %v4270
      %v4335 = vsel %vm4207, %v4123, %v4271
      %v4336 = vsel %vm4208, %v4125, %v4272
      %v4337 = vsel %vm4209, %v4129, %v4273
      %v4338 = vsel %vm4210, %v4131, %v4274
      %v4339 = vsel %vm4211, %v4133, %v4275
      %v4340 = vsel %vm4212, %v4135, %v4276
      %v4341 = vsel %vm4213, %v4139, %v4277
      %v4342 = vsel %vm4214, %v4141, %v4278
      %v4343 = vsel %vm4215, %v4143, %v4279
      %v4344 = vsel %vm4216, %v4145, %v4280
      %v4345 = vsel %vm4217, %v4149, %v4281
      %v4346 = vsel %vm4218, %v4151, %v4282
      %v4347 = vsel %vm4219, %v4153, %v4283
      %v4348 = vsel %vm4220, %v4155, %v4284
      %v4349 = vld [vmem:[%s5] sm:$0xf]
      %v4350 = vld [vmem:[%s5 + $0x4] sm:$0xf]
      %v4351 = vld [vmem:[%s5 + $0x8] sm:$0xf]
      %v4352 = vld [vmem:[%s5 + $0xc] sm:$0xf]
      %v4353 = vld [vmem:[%s5 + $0x10] sm:$0xf]
      %v4354 = vld [vmem:[%s5 + $0x14] sm:$0xf]
      %v4355 = vld [vmem:[%s5 + $0x18] sm:$0xf]
      %v4356 = vld [vmem:[%s5 + $0x1c] sm:$0xf]
      %v4357 = vld [vmem:[%s5 + $0x20] sm:$0xf]
      %v4358 = vld [vmem:[%s5 + $0x24] sm:$0xf]
      %v4359 = vld [vmem:[%s5 + $0x28] sm:$0xf]
      %v4360 = vld [vmem:[%s5 + $0x2c] sm:$0xf]
      %v4361 = vld [vmem:[%s5 + $0x30] sm:$0xf]
      %v4362 = vld [vmem:[%s5 + $0x34] sm:$0xf]
      %v4363 = vld [vmem:[%s5 + $0x38] sm:$0xf]
      %v4364 = vld [vmem:[%s5 + $0x3c] sm:$0xf]
      %v4365 = vld [vmem:[%s5 + $0x40] sm:$0xf]
      %v4366 = vld [vmem:[%s5 + $0x44] sm:$0xf]
      %v4367 = vld [vmem:[%s5 + $0x48] sm:$0xf]
      %v4368 = vld [vmem:[%s5 + $0x4c] sm:$0xf]
      %v4369 = vld [vmem:[%s5 + $0x50] sm:$0xf]
      %v4370 = vld [vmem:[%s5 + $0x54] sm:$0xf]
      %v4371 = vld [vmem:[%s5 + $0x58] sm:$0xf]
      %v4372 = vld [vmem:[%s5 + $0x5c] sm:$0xf]
      %v4373 = vld [vmem:[%s5 + $0x60] sm:$0xf]
      %v4374 = vld [vmem:[%s5 + $0x64] sm:$0xf]
      %v4375 = vld [vmem:[%s5 + $0x68] sm:$0xf]
      %v4376 = vld [vmem:[%s5 + $0x6c] sm:$0xf]
      %v4377 = vld [vmem:[%s5 + $0x70] sm:$0xf]
      %v4378 = vld [vmem:[%s5 + $0x74] sm:$0xf]
      %v4379 = vld [vmem:[%s5 + $0x78] sm:$0xf]
      %v4380 = vld [vmem:[%s5 + $0x7c] sm:$0xf]
      %v4381 = vpack.c.bf16 %v4287, %v4285
      %v4382 = vpack.c.bf16 %v4288, %v4286
      %v4383 = vpack.c.bf16 %v4291, %v4289
      %v4384 = vpack.c.bf16 %v4292, %v4290
      %v4385 = vpack.c.bf16 %v4295, %v4293
      %v4386 = vpack.c.bf16 %v4296, %v4294
      %v4387 = vpack.c.bf16 %v4299, %v4297
      %v4388 = vpack.c.bf16 %v4300, %v4298
      %v4389 = vpack.c.bf16 %v4303, %v4301
      %v4390 = vpack.c.bf16 %v4304, %v4302
      %v4391 = vpack.c.bf16 %v4307, %v4305
      %v4392 = vpack.c.bf16 %v4308, %v4306
      %v4393 = vpack.c.bf16 %v4311, %v4309
      %v4394 = vpack.c.bf16 %v4312, %v4310
      %v4395 = vpack.c.bf16 %v4315, %v4313
      %v4396 = vpack.c.bf16 %v4316, %v4314
      %v4397 = vpack.c.bf16 %v4319, %v4317
      %v4398 = vpack.c.bf16 %v4320, %v4318
      %v4399 = vpack.c.bf16 %v4323, %v4321
      %v4400 = vpack.c.bf16 %v4324, %v4322
      %v4401 = vpack.c.bf16 %v4327, %v4325
      %v4402 = vpack.c.bf16 %v4328, %v4326
      %v4403 = vpack.c.bf16 %v4331, %v4329
      %v4404 = vpack.c.bf16 %v4332, %v4330
      %v4405 = vpack.c.bf16 %v4335, %v4333
      %v4406 = vpack.c.bf16 %v4336, %v4334
      %v4407 = vpack.c.bf16 %v4339, %v4337
      %v4408 = vpack.c.bf16 %v4340, %v4338
      %v4409 = vpack.c.bf16 %v4343, %v4341
      %v4410 = vpack.c.bf16 %v4344, %v4342
      %v4411 = vpack.c.bf16 %v4347, %v4345
      %v4412 = vpack.c.bf16 %v4348, %v4346
      %v4413 = vld [vmem:[%s2 + $0x14] ss:$0 sm:$0xff]
      %v4446 = vunpack.c.l.b16 %v4349
      %v4447 = vunpack.c.l.b16 %v4350
      %v4448 = vunpack.c.l.b16 %v4351
      %v4449 = vunpack.c.l.b16 %v4352
      %v4450 = vunpack.c.l.b16 %v4353
      %v4451 = vunpack.c.l.b16 %v4354
      %v4452 = vunpack.c.l.b16 %v4355
      %v4453 = vunpack.c.l.b16 %v4356
      %v4454 = vunpack.c.l.b16 %v4357
      %v4455 = vunpack.c.l.b16 %v4358
      %v4456 = vunpack.c.l.b16 %v4359
      %v4457 = vunpack.c.l.b16 %v4360
      %v4458 = vunpack.c.l.b16 %v4361
      %v4459 = vunpack.c.l.b16 %v4362
      %v4460 = vunpack.c.l.b16 %v4363
      %v4461 = vunpack.c.l.b16 %v4364
      %v4462 = vunpack.c.l.b16 %v4365
      %v4463 = vunpack.c.l.b16 %v4366
      %v4464 = vunpack.c.l.b16 %v4367
      %v4465 = vunpack.c.l.b16 %v4368
      %v4466 = vunpack.c.l.b16 %v4369
      %v4467 = vunpack.c.l.b16 %v4370
      %v4468 = vunpack.c.l.b16 %v4371
      %v4469 = vunpack.c.l.b16 %v4372
      %v4470 = vunpack.c.l.b16 %v4373
      %v4471 = vunpack.c.l.b16 %v4374
      %v4472 = vunpack.c.l.b16 %v4375
      %v4473 = vunpack.c.l.b16 %v4376
      %v4474 = vunpack.c.l.b16 %v4377
      %v4475 = vunpack.c.l.b16 %v4378
      %v4476 = vunpack.c.l.b16 %v4379
      %v4477 = vunpack.c.l.b16 %v4380
      %v4478 = vpack.c.b16 %v4447, %v4446
      %v4479 = vpack.c.b16 %v4449, %v4448
      %v4480 = vpack.c.b16 %v4451, %v4450
      %v4481 = vpack.c.b16 %v4453, %v4452
      %v4482 = vpack.c.b16 %v4455, %v4454
      %v4483 = vpack.c.b16 %v4457, %v4456
      %v4484 = vpack.c.b16 %v4459, %v4458
      %v4485 = vpack.c.b16 %v4461, %v4460
      %v4486 = vpack.c.b16 %v4463, %v4462
      %v4487 = vpack.c.b16 %v4465, %v4464
      %v4488 = vpack.c.b16 %v4467, %v4466
      %v4489 = vpack.c.b16 %v4469, %v4468
      %v4490 = vpack.c.b16 %v4471, %v4470
      %v4491 = vpack.c.b16 %v4473, %v4472
      %v4492 = vpack.c.b16 %v4475, %v4474
      %v4493 = vpack.c.b16 %v4477, %v4476
      %4510 = vmatprep.subr.bf16.mxu0 0
      %4511 = vmatpush1.bf16.msra.mxu0 %v4478
      %4512 = vmatprep.subr.bf16.mxu0 0
      %4513 = vmatpush1.bf16.msra.mxu0 %v4479
      %4514 = vmatprep.subr.bf16.mxu0 0
      %4515 = vmatpush1.bf16.msra.mxu0 %v4480
      %4516 = vmatprep.subr.bf16.mxu0 0
      %4517 = vmatpush1.bf16.msra.mxu0 %v4481
      %4518 = vmatprep.subr.bf16.mxu0 0
      %4519 = vmatpush1.bf16.msra.mxu0 %v4482
      %4520 = vmatprep.subr.bf16.mxu0 0
      %4521 = vmatpush1.bf16.msra.mxu0 %v4483
      %4522 = vmatprep.subr.bf16.mxu0 0
      %4523 = vmatpush1.bf16.msra.mxu0 %v4484
      %4524 = vmatprep.subr.bf16.mxu0 0
      %4525 = vmatpush1.bf16.msra.mxu0 %v4485
      %4526 = vmatprep.subr.bf16.mxu0 0
      %4527 = vmatpush1.bf16.msra.mxu0 %v4486
      %4528 = vmatprep.subr.bf16.mxu0 0
      %4529 = vmatpush1.bf16.msra.mxu0 %v4487
      %4530 = vmatprep.subr.bf16.mxu0 0
      %4531 = vmatpush1.bf16.msra.mxu0 %v4488
      %4532 = vmatprep.subr.bf16.mxu0 0
      %4533 = vmatpush1.bf16.msra.mxu0 %v4489
      %4534 = vmatprep.subr.bf16.mxu0 0
      %4535 = vmatpush1.bf16.msra.mxu0 %v4490
      %4536 = vmatprep.subr.bf16.mxu0 0
      %4537 = vmatpush1.bf16.msra.mxu0 %v4491
      %4538 = vmatprep.subr.bf16.mxu0 0
      %4539 = vmatpush1.bf16.msra.mxu0 %v4492
      %4540 = vmatprep.subr.bf16.mxu0 0
      %4541 = vmatpush1.bf16.msra.mxu0 %v4493
      %4542 = vmatprep.mubr.bf16.mxu0 %v4382
      %4543 = vmatmul.mubr.bf16.gmra.mrb[0].mxu0 %v4381
      %v4544 = vpop.f32.mrb[0].mxu0
      %v4545 = vadd.f32 %v4413, %v4544
      %v4546 = vpop.f32.mrb[0].mxu0
      %v4547 = vpop.f32.mrb[0].mxu0
      %v4548 = vadd.f32 %v4413, %v4547
      %v4549 = vpop.f32.mrb[0].mxu0
      %4550 = vmatprep.mubr.bf16.mxu0 %v4384
      %4551 = vmatmul.mubr.bf16.gmra.mrb[0].mxu0 %v4383
      %v4552 = vpop.f32.mrb[0].mxu0
      %v4553 = vadd.f32 %v4413, %v4552
      %v4554 = vpop.f32.mrb[0].mxu0
      %v4555 = vpop.f32.mrb[0].mxu0
      %v4556 = vadd.f32 %v4413, %v4555
      %v4557 = vpop.f32.mrb[0].mxu0
      %4558 = vmatprep.mubr.bf16.mxu0 %v4386
      %4559 = vmatmul.mubr.bf16.gmra.mrb[0].mxu0 %v4385
      %v4560 = vpop.f32.mrb[0].mxu0
      %v4561 = vadd.f32 %v4413, %v4560
      %v4562 = vpop.f32.mrb[0].mxu0
      %v4563 = vpop.f32.mrb[0].mxu0
      %v4564 = vadd.f32 %v4413, %v4563
      %v4565 = vpop.f32.mrb[0].mxu0
      %4566 = vmatprep.mubr.bf16.mxu0 %v4388
      %4567 = vmatmul.mubr.bf16.gmra.mrb[0].mxu0 %v4387
      %v4568 = vpop.f32.mrb[0].mxu0
      %v4569 = vadd.f32 %v4413, %v4568
      %v4570 = vpop.f32.mrb[0].mxu0
      %v4571 = vpop.f32.mrb[0].mxu0
      %v4572 = vadd.f32 %v4413, %v4571
      %v4573 = vpop.f32.mrb[0].mxu0
      %4574 = vmatprep.mubr.bf16.mxu0 %v4390
      %4575 = vmatmul.mubr.bf16.gmra.mrb[0].mxu0 %v4389
      %v4576 = vpop.f32.mrb[0].mxu0
      %v4577 = vadd.f32 %v4413, %v4576
      %v4578 = vpop.f32.mrb[0].mxu0
      %v4579 = vpop.f32.mrb[0].mxu0
      %v4580 = vadd.f32 %v4413, %v4579
      %v4581 = vpop.f32.mrb[0].mxu0
      %4582 = vmatprep.mubr.bf16.mxu0 %v4392
      %4583 = vmatmul.mubr.bf16.gmra.mrb[0].mxu0 %v4391
      %v4584 = vpop.f32.mrb[0].mxu0
      %v4585 = vadd.f32 %v4413, %v4584
      %v4586 = vpop.f32.mrb[0].mxu0
      %v4587 = vpop.f32.mrb[0].mxu0
      %v4588 = vadd.f32 %v4413, %v4587
      %v4589 = vpop.f32.mrb[0].mxu0
      %4590 = vmatprep.mubr.bf16.mxu0 %v4394
      %4591 = vmatmul.mubr.bf16.gmra.mrb[0].mxu0 %v4393
      %v4592 = vpop.f32.mrb[0].mxu0
      %v4593 = vadd.f32 %v4413, %v4592
      %v4594 = vpop.f32.mrb[0].mxu0
      %v4595 = vpop.f32.mrb[0].mxu0
      %v4596 = vadd.f32 %v4413, %v4595
      %v4597 = vpop.f32.mrb[0].mxu0
      %4598 = vmatprep.mubr.bf16.mxu0 %v4396
      %4599 = vmatmul.mubr.bf16.gmra.mrb[0].mxu0 %v4395
      %v4600 = vpop.f32.mrb[0].mxu0
      %v4601 = vadd.f32 %v4413, %v4600
      %v4602 = vpop.f32.mrb[0].mxu0
      %v4603 = vpop.f32.mrb[0].mxu0
      %v4604 = vadd.f32 %v4413, %v4603
      %v4605 = vpop.f32.mrb[0].mxu0
      %4606 = vmatprep.mubr.bf16.mxu0 %v4398
      %4607 = vmatmul.mubr.bf16.gmra.mrb[0].mxu0 %v4397
      %v4608 = vpop.f32.mrb[0].mxu0
      %v4609 = vadd.f32 %v4413, %v4608
      %v4610 = vpop.f32.mrb[0].mxu0
      %v4611 = vpop.f32.mrb[0].mxu0
      %v4612 = vadd.f32 %v4413, %v4611
      %v4613 = vpop.f32.mrb[0].mxu0
      %4614 = vmatprep.mubr.bf16.mxu0 %v4400
      %4615 = vmatmul.mubr.bf16.gmra.mrb[0].mxu0 %v4399
      %v4616 = vpop.f32.mrb[0].mxu0
      %v4617 = vadd.f32 %v4413, %v4616
      %v4618 = vpop.f32.mrb[0].mxu0
      %v4619 = vpop.f32.mrb[0].mxu0
      %v4620 = vadd.f32 %v4413, %v4619
      %v4621 = vpop.f32.mrb[0].mxu0
      %4622 = vmatprep.mubr.bf16.mxu0 %v4402
      %4623 = vmatmul.mubr.bf16.gmra.mrb[0].mxu0 %v4401
      %v4624 = vpop.f32.mrb[0].mxu0
      %v4625 = vadd.f32 %v4413, %v4624
      %v4626 = vpop.f32.mrb[0].mxu0
      %v4627 = vpop.f32.mrb[0].mxu0
      %v4628 = vadd.f32 %v4413, %v4627
      %v4629 = vpop.f32.mrb[0].mxu0
      %4630 = vmatprep.mubr.bf16.mxu0 %v4404
      %4631 = vmatmul.mubr.bf16.gmra.mrb[0].mxu0 %v4403
      %v4632 = vpop.f32.mrb[0].mxu0
      %v4633 = vadd.f32 %v4413, %v4632
      %v4634 = vpop.f32.mrb[0].mxu0
      %v4635 = vpop.f32.mrb[0].mxu0
      %v4636 = vadd.f32 %v4413, %v4635
      %v4637 = vpop.f32.mrb[0].mxu0
      %4638 = vmatprep.mubr.bf16.mxu0 %v4406
      %4639 = vmatmul.mubr.bf16.gmra.mrb[0].mxu0 %v4405
      %v4640 = vpop.f32.mrb[0].mxu0
      %v4641 = vadd.f32 %v4413, %v4640
      %v4642 = vpop.f32.mrb[0].mxu0
      %v4643 = vpop.f32.mrb[0].mxu0
      %v4644 = vadd.f32 %v4413, %v4643
      %v4645 = vpop.f32.mrb[0].mxu0
      %4646 = vmatprep.mubr.bf16.mxu0 %v4408
      %4647 = vmatmul.mubr.bf16.gmra.mrb[0].mxu0 %v4407
      %v4648 = vpop.f32.mrb[0].mxu0
      %v4649 = vadd.f32 %v4413, %v4648
      %v4650 = vpop.f32.mrb[0].mxu0
      %v4651 = vpop.f32.mrb[0].mxu0
      %v4652 = vadd.f32 %v4413, %v4651
      %v4653 = vpop.f32.mrb[0].mxu0
      %4654 = vmatprep.mubr.bf16.mxu0 %v4410
      %4655 = vmatmul.mubr.bf16.gmra.mrb[0].mxu0 %v4409
      %v4656 = vpop.f32.mrb[0].mxu0
      %v4657 = vadd.f32 %v4413, %v4656
      %v4658 = vpop.f32.mrb[0].mxu0
      %v4659 = vpop.f32.mrb[0].mxu0
      %v4660 = vadd.f32 %v4413, %v4659
      %v4661 = vpop.f32.mrb[0].mxu0
      %4662 = vmatprep.mubr.bf16.mxu0 %v4412
      %4663 = vmatmul.mubr.bf16.gmra.mrb[0].mxu0 %v4411
      %v4664 = vpop.f32.mrb[0].mxu0
      %v4665 = vadd.f32 %v4413, %v4664
      %v4666 = vpop.f32.mrb[0].mxu0
      %v4667 = vpop.f32.mrb[0].mxu0
      %v4668 = vadd.f32 %v4413, %v4667
      %v4669 = vpop.f32.mrb[0].mxu0
      %4670 = vdwg.mxu0
      %4671 = vst [vmem:[%s253] sm:$0xff] %v4545
      %4672 = vst [vmem:[%s253 + $0x8] sm:$0xff] %v4548
      %4673 = vst [vmem:[%s253 + $0x10] sm:$0xff] %v4553
      %4674 = vst [vmem:[%s253 + $0x18] sm:$0xff] %v4556
      %4675 = vst [vmem:[%s253 + $0x20] sm:$0xff] %v4561
      %4676 = vst [vmem:[%s253 + $0x28] sm:$0xff] %v4564
      %4677 = vst [vmem:[%s253 + $0x30] sm:$0xff] %v4569
      %4678 = vst [vmem:[%s253 + $0x38] sm:$0xff] %v4572
      %4679 = vst [vmem:[%s253 + $0x40] sm:$0xff] %v4577
      %4680 = vst [vmem:[%s253 + $0x48] sm:$0xff] %v4580
      %4681 = vst [vmem:[%s253 + $0x50] sm:$0xff] %v4585
      %4682 = vst [vmem:[%s253 + $0x58] sm:$0xff] %v4588
      %4683 = vst [vmem:[%s253 + $0x60] sm:$0xff] %v4593
      %4684 = vst [vmem:[%s253 + $0x68] sm:$0xff] %v4596
      %4685 = vst [vmem:[%s253 + $0x70] sm:$0xff] %v4601
      %4686 = vst [vmem:[%s253 + $0x78] sm:$0xff] %v4604
      %4687 = vst [vmem:[%s253 + $0x80] sm:$0xff] %v4609
      %4688 = vst [vmem:[%s253 + $0x88] sm:$0xff] %v4612
      %4689 = vst [vmem:[%s253 + $0x90] sm:$0xff] %v4617
      %4690 = vst [vmem:[%s253 + $0x98] sm:$0xff] %v4620
      %4691 = vst [vmem:[%s253 + $0xa0] sm:$0xff] %v4625
      %4692 = vst [vmem:[%s253 + $0xa8] sm:$0xff] %v4628
      %4693 = vst [vmem:[%s253 + $0xb0] sm:$0xff] %v4633
      %4694 = vst [vmem:[%s253 + $0xb8] sm:$0xff] %v4636
      %4695 = vst [vmem:[%s253 + $0xc0] sm:$0xff] %v4641
      %4696 = vst [vmem:[%s253 + $0xc8] sm:$0xff] %v4644
      %4697 = vst [vmem:[%s253 + $0xd0] sm:$0xff] %v4649
      %4698 = vst [vmem:[%s253 + $0xd8] sm:$0xff] %v4652
      %4699 = vst [vmem:[%s253 + $0xe0] sm:$0xff] %v4657
      %4700 = vst [vmem:[%s253 + $0xe8] sm:$0xff] %v4660
      %4701 = vst [vmem:[%s253 + $0xf0] sm:$0xff] %v4665
      %4702 = vst [vmem:[%s253 + $0xf8] sm:$0xff] %v4668
      %s4703 = smul.u32 32, %s17
      %p4704 = scmp.lt.s32.totalorder %s4703, 63
      %s4705 = scalar_select %p4704, %s4703, 63
      %s4706 = smul.addr %s4705, 8
      %s4707 = scalar_lea.vmem %s6, %s4706
      // Predicated region
      $region45: #{resnet_forward.1} parent=43 // pred_check
        %p4708 = pneg %p166
      $region46: #{resnet_forward.1} parent=43 // pred_check_branch
        %4710 = sbr.rel (%p4708) target = $region48
      $region47: #{resnet_forward.1} parent=43 // pred_region
        %s4711 = smul.u32 32, %s17
      $region48: #{resnet_forward.1} parent=43 // pred_fallthru
        _
    $region44: #{resnet_forward.1} parent=5 // pred_fallthru
      _
    %p4712 = scmp.le.s32.totalorder 2, %s12
    // Predicated region
    $region49: #{resnet_forward.1} parent=5 // pred_check
      %p4713 = pneg %p4712
    $region50: #{resnet_forward.1} parent=5 // pred_check_branch
      %4715 = sbr.rel (%p4713) target = $region52
    $region51: #{resnet_forward.1} parent=5 // pred_region
      %s4716 = ssub.s32 %s12, 2
      // Predicated region
      $region53: #{resnet_forward.1} parent=51 // pred_check
        %p4717 = pneg %p172
      $region54: #{resnet_forward.1} parent=51 // pred_check_branch
        %4719 = sbr.rel (%p4717) target = $region56
      $region55: #{resnet_forward.1} parent=51 // pred_region
        %s4720 = smul.u32 32, %s18
        %p4721 = scmp.lt.s32.totalorder %s4720, 63
        %s4722 = scalar_select %p4721, %s4720, 63
        %s4723 = smul.addr %s4722, 8
        %s4724 = scalar_lea.vmem %s6, %s4723
      $region56: #{resnet_forward.1} parent=51 // pred_fallthru
        _
    $region52: #{resnet_forward.1} parent=5 // pred_fallthru
      _
  $region6: #{resnet_forward.1} parent=0 // loop_footer
    %s16 = sadd.s32 1, %s12
  $region7: #{resnet_forward.1} parent=0 // loop_footer_branch
    %11 = sbr.rel target = $region3
  $region8: #{resnet_forward.1} parent=0 // loop_exit
    _

</llo_original>
